<compile_context>
chip_gen: v7x
topology: tpu7x:2x2x1
jax: 0.10.0
libtpu: 0.0.40
codegen_flags: <defaults>
</compile_context>

<pallas_src>
import functools

import jax
import jax.numpy as jnp
from jax.experimental import pallas as pl
from jax.experimental.pallas import tpu as pltpu


# --------------------- Kernel A: LayerNorm1 + fused QKV projection ---------------------
def qkv_proj_kernel(x_ref, g1_ref, b1_ref, wqkv_t_ref, bqkv_ref, qkv_ref):
    eps = 1e-5
    x = x_ref[...]                                            # (TS, E) f32
    mu = jnp.mean(x, axis=-1, keepdims=True)
    var = jnp.mean((x - mu) ** 2, axis=-1, keepdims=True)
    xn = (x - mu) * jax.lax.rsqrt(var + eps)
    xn = xn * g1_ref[...] + b1_ref[...]
    # Pre-transposed (E, 3E) bf16 weights (Q rows pre-scaled) -> MXU, f32 accumulate.
    qkv = jnp.dot(xn.astype(jnp.bfloat16), wqkv_t_ref[...],
                  preferred_element_type=jnp.float32) + bqkv_ref[...]
    qkv_ref[...] = qkv.astype(qkv_ref.dtype)                  # lane-dense (TS, 3E) bf16


# ---------- Kernel B: attention + out-proj + residual + LayerNorm2 + FFN + residual ----------
def attn_ffn_kernel(x_ref, q_ref, k_ref, v_ref, wo_t_ref, bo_ref,
                    g2_ref, b2_ref, w1_t_ref, fb1_ref, w2_t_ref, fb2_ref,
                    out_ref):
    eps = 1e-5
    H, TQ, D = q_ref.shape

    q = q_ref[...]                                            # (H, TQ, D) bf16, scale folded
    k = k_ref[...]                                            # (H, S,  D) bf16
    v = v_ref[...]                                            # (H, S,  D) bf16

    # Batched-head scores on the MXU (f32 accumulation).
    # TODO(synk): for large S, add a KV grid axis with online-softmax (flash-style
    # running m/l/acc scratch) instead of materializing (H, TQ, S) scores.
    s = jnp.einsum('hqd,hkd->hqk', q, k, preferred_element_type=jnp.float32)
    m = jnp.max(s, axis=-1, keepdims=True)
    p = jnp.exp(s - m)
    l = jnp.sum(p, axis=-1, keepdims=True)
    attn = p * pl.reciprocal(l, approx=True)                  # EUP reciprocal (nearly free)

    o_h = jnp.einsum('hqk,hkd->hqd', attn.astype(jnp.bfloat16), v,
                     preferred_element_type=jnp.float32)      # (H, TQ, D) f32

    # Output projection fused per head: o = bo + sum_h o_h[h] @ Wo_t[hD:(h+1)D, :].
    # Avoids the head concat / relayout entirely; slices Wo_t along sublanes only.
    o = bo_ref[...]                                           # (1, E) f32, broadcasts
    for h in range(H):                                        # tiny static unroll
        o = o + jnp.dot(o_h[h].astype(jnp.bfloat16),
                        wo_t_ref[h * D:(h + 1) * D, :],
                        preferred_element_type=jnp.float32)

    x1 = x_ref[...] + o                                       # residual 1 (f32)

    # LayerNorm 2 (f32)
    mu2 = jnp.mean(x1, axis=-1, keepdims=True)
    var2 = jnp.mean((x1 - mu2) ** 2, axis=-1, keepdims=True)
    xn2 = (x1 - mu2) * jax.lax.rsqrt(var2 + eps)
    xn2 = xn2 * g2_ref[...] + b2_ref[...]

    # FeedForward: Linear -> ReLU -> Linear (bf16 operands, f32 accumulate)
    hdn = jnp.dot(xn2.astype(jnp.bfloat16), w1_t_ref[...],
                  preferred_element_type=jnp.float32) + fb1_ref[...]
    hdn = jnp.maximum(hdn, 0.0)
    f = jnp.dot(hdn.astype(jnp.bfloat16), w2_t_ref[...],
                preferred_element_type=jnp.float32) + fb2_ref[...]

    out_ref[...] = (x1 + f).astype(out_ref.dtype)             # residual 2


# ------------------------------------ wrappers ------------------------------------
def prepare_params(params, num_head):
    """One-time host-side transform: pre-transpose weights (so kernels do x @ W with
    no in-kernel .T), fold 1/sqrt(D) into the Q rows, and cast weights to bf16."""
    E = params["wo"].shape[0]
    ffn_hidden = params["w1"].shape[0]
    D = E // num_head
    scale = 1.0 / (float(D) ** 0.5)
    row_scale = jnp.concatenate(
        [jnp.full((E,), scale, jnp.float32), jnp.ones((2 * E,), jnp.float32)])
    wqkv_scaled = params["wqkv"] * row_scale[:, None]
    bqkv_scaled = params["bqkv"] * row_scale
    return {
        "g1": params["g1"].reshape(1, E).astype(jnp.float32),
        "b1": params["b1"].reshape(1, E).astype(jnp.float32),
        "wqkv_t": wqkv_scaled.T.astype(jnp.bfloat16),           # (E, 3E)
        "bqkv": bqkv_scaled.reshape(1, 3 * E).astype(jnp.float32),
        "wo_t": params["wo"].T.astype(jnp.bfloat16),            # (E, E)
        "bo": params["bo"].reshape(1, E).astype(jnp.float32),
        "g2": params["g2"].reshape(1, E).astype(jnp.float32),
        "b2": params["b2"].reshape(1, E).astype(jnp.float32),
        "w1_t": params["w1"].T.astype(jnp.bfloat16),            # (E, F)
        "fb1": params["fb1"].reshape(1, ffn_hidden).astype(jnp.float32),
        "w2_t": params["w2"].T.astype(jnp.bfloat16),            # (F, E)
        "fb2": params["fb2"].reshape(1, E).astype(jnp.float32),
    }


@functools.partial(jax.jit, static_argnames=("num_head", "token_tile"))
def transformer_block(x, prep, *, num_head, token_tile=128):
    S, E = x.shape
    H = num_head
    D = E // H
    Fh = prep["w1_t"].shape[1]
    TS = min(token_tile, S)
    assert S % TS == 0 and E % H == 0
    grid = (S // TS,)
    parallel = pltpu.CompilerParams(dimension_semantics=("parallel",))

    # --- Kernel A: LN1 + QKV projection, token-parallel, lane-dense (S, 3E) bf16 output ---
    qkv = pl.pallas_call(
        qkv_proj_kernel,
        out_shape=jax.ShapeDtypeStruct((S, 3 * E), jnp.bfloat16),
        grid=grid,
        in_specs=[
            pl.BlockSpec((TS, E), lambda i: (i, 0)),            # x tile (pipelined)
            pl.BlockSpec((1, E), lambda i: (0, 0)),             # g1 (resident)
            pl.BlockSpec((1, E), lambda i: (0, 0)),             # b1
            pl.BlockSpec((E, 3 * E), lambda i: (0, 0)),         # wqkv_t (resident)
            pl.BlockSpec((1, 3 * E), lambda i: (0, 0)),         # bqkv
        ],
        out_specs=pl.BlockSpec((TS, 3 * E), lambda i: (i, 0)),
        compiler_params=parallel,
    )(x, prep["g1"], prep["b1"], prep["wqkv_t"], prep["bqkv"])

    # Layout plumbing only: present q/k/v head-major (H, S, D) so the attention kernel
    # uses lane-dense batched-head einsums (head_dim = D = 128 is the lane axis).
    q = qkv[:, :E].reshape(S, H, D).transpose(1, 0, 2)
    k = qkv[:, E:2 * E].reshape(S, H, D).transpose(1, 0, 2)
    v = qkv[:, 2 * E:].reshape(S, H, D).transpose(1, 0, 2)

    # --- Kernel B: attention + out-proj + residual + LN2 + FFN, tiled over query tokens ---
    out = pl.pallas_call(
        attn_ffn_kernel,
        out_shape=jax.ShapeDtypeStruct((S, E), x.dtype),
        grid=grid,
        in_specs=[
            pl.BlockSpec((TS, E), lambda i: (i, 0)),            # x tile (residual)
            pl.BlockSpec((H, TS, D), lambda i: (0, i, 0)),      # q tile (pipelined)
            pl.BlockSpec((H, S, D), lambda i: (0, 0, 0)),       # k full seq (resident)
            pl.BlockSpec((H, S, D), lambda i: (0, 0, 0)),       # v full seq (resident)
            pl.BlockSpec((E, E), lambda i: (0, 0)),             # wo_t
            pl.BlockSpec((1, E), lambda i: (0, 0)),             # bo
            pl.BlockSpec((1, E), lambda i: (0, 0)),             # g2
            pl.BlockSpec((1, E), lambda i: (0, 0)),             # b2
            pl.BlockSpec((E, Fh), lambda i: (0, 0)),            # w1_t
            pl.BlockSpec((1, Fh), lambda i: (0, 0)),            # fb1
            pl.BlockSpec((Fh, E), lambda i: (0, 0)),            # w2_t
            pl.BlockSpec((1, E), lambda i: (0, 0)),             # fb2
        ],
        out_specs=pl.BlockSpec((TS, E), lambda i: (i, 0)),
        compiler_params=parallel,
    )(x, q, k, v, prep["wo_t"], prep["bo"], prep["g2"], prep["b2"],
      prep["w1_t"], prep["fb1"], prep["w2_t"], prep["fb2"])
    return out


# ------------------------------------ references ------------------------------------
def ref_forward_f32(x, p, num_head):
    """Pure-f32 JAX mirror of the PyTorch TransformerBlock forward."""
    S, E = x.shape
    D = E // num_head

    def ln(v, g, b):
        mu = v.mean(-1, keepdims=True)
        var = ((v - mu) ** 2).mean(-1, keepdims=True)
        return (v - mu) / jnp.sqrt(var + 1e-5) * g + b

    xn = ln(x, p["g1"], p["b1"])
    qkv = xn @ p["wqkv"].T + p["bqkv"]
    q, k, v = qkv[:, :E], qkv[:, E:2 * E], qkv[:, 2 * E:]
    q = q.reshape(S, num_head, D).transpose(1, 0, 2) * (1.0 / D ** 0.5)
    k = k.reshape(S, num_head, D).transpose(1, 2, 0)
    v = v.reshape(S, num_head, D).transpose(1, 0, 2)
    attn = jax.nn.softmax(q @ k, -1)
    o = (attn @ v).transpose(1, 0, 2).reshape(S, E)
    o = o @ p["wo"].T + p["bo"]
    x = x + o
    xn2 = ln(x, p["g2"], p["b2"])
    h = jax.nn.relu(xn2 @ p["w1"].T + p["fb1"])
    return x + h @ p["w2"].T + p["fb2"]


def ref_forward_mixed(x, prep, num_head):
    """Mirrors the kernels' mixed precision (bf16 MXU operands / f32 accumulate) in plain JAX."""
    S, E = x.shape
    H = num_head
    D = E // H
    bf16 = jnp.bfloat16

    def ln(v, g, b):
        mu = v.mean(-1, keepdims=True)
        var = ((v - mu) ** 2).mean(-1, keepdims=True)
        return (v - mu) * jax.lax.rsqrt(var + 1e-5) * g + b

    xn = ln(x, prep["g1"], prep["b1"])
    qkv = (jnp.dot(xn.astype(bf16), prep["wqkv_t"], preferred_element_type=jnp.float32)
           + prep["bqkv"]).astype(bf16)
    q = qkv[:, :E].reshape(S, H, D).transpose(1, 0, 2)
    k = qkv[:, E:2 * E].reshape(S, H, D).transpose(1, 0, 2)
    v = qkv[:, 2 * E:].reshape(S, H, D).transpose(1, 0, 2)
    s = jnp.einsum('hqd,hkd->hqk', q, k, preferred_element_type=jnp.float32)
    p_ = jnp.exp(s - s.max(-1, keepdims=True))
    attn = p_ / p_.sum(-1, keepdims=True)
    o_h = jnp.einsum('hqk,hkd->hqd', attn.astype(bf16), v,
                     preferred_element_type=jnp.float32)
    o = prep["bo"]
    for h in range(H):
        o = o + jnp.dot(o_h[h].astype(bf16), prep["wo_t"][h * D:(h + 1) * D, :],
                        preferred_element_type=jnp.float32)
    x1 = x + o
    xn2 = ln(x1, prep["g2"], prep["b2"])
    hdn = jnp.maximum(jnp.dot(xn2.astype(bf16), prep["w1_t"],
                              preferred_element_type=jnp.float32) + prep["fb1"], 0.0)
    f = jnp.dot(hdn.astype(bf16), prep["w2_t"],
                preferred_element_type=jnp.float32) + prep["fb2"]
    return x1 + f


if __name__ == "__main__":
    # head_dim = 128 and embed/FFN dims multiples of 128 keep everything lane-dense.
    SEQ, EMBED, NUM_HEAD = 256, 256, 2
    OUT_DIM = EMBED  # FFN hidden = out_dim; must equal EMBED for the module's norm2 to apply

    key = jax.random.PRNGKey(0)
    ks = jax.random.split(key, 10)
    params = {
        "g1":   jnp.ones((EMBED,), jnp.float32),
        "b1":   jnp.zeros((EMBED,), jnp.float32),
        "wqkv": 0.1 * jax.random.normal(ks[0], (3 * EMBED, EMBED), jnp.float32),
        "bqkv": 0.01 * jax.random.normal(ks[1], (3 * EMBED,), jnp.float32),
        "wo":   0.1 * jax.random.normal(ks[2], (EMBED, EMBED), jnp.float32),
        "bo":   0.01 * jax.random.normal(ks[3], (EMBED,), jnp.float32),
        "g2":   jnp.ones((EMBED,), jnp.float32),
        "b2":   jnp.zeros((EMBED,), jnp.float32),
        "w1":   0.1 * jax.random.normal(ks[4], (OUT_DIM, EMBED), jnp.float32),
        "fb1":  0.01 * jax.random.normal(ks[5], (OUT_DIM,), jnp.float32),
        "w2":   0.1 * jax.random.normal(ks[6], (EMBED, OUT_DIM), jnp.float32),
        "fb2":  0.01 * jax.random.normal(ks[7], (EMBED,), jnp.float32),
    }
    x = jax.random.normal(ks[8], (SEQ, EMBED), jnp.float32)

    prep = prepare_params(params, NUM_HEAD)   # one-time weight transform (transpose/scale/bf16)
    out = transformer_block(x, prep, num_head=NUM_HEAD, token_tile=128)
    out = jax.block_until_ready(out)
    assert out.shape == (SEQ, EMBED) and out.dtype == x.dtype

    # Tight check against a pure-JAX mirror of the kernel's mixed-precision math.
    mixed = ref_forward_mixed(x, prep, NUM_HEAD)
    err_mixed = float(jnp.max(jnp.abs(out - mixed)))
    assert err_mixed < 5e-2, f"mixed-precision mirror mismatch: max abs err {err_mixed}"

    # Loose sanity check against the exact f32 PyTorch-equivalent forward
    # (remaining gap is the expected bf16 matmul precision loss).
    full = ref_forward_f32(x, params, NUM_HEAD)
    err_f32 = float(jnp.max(jnp.abs(out - full)))
    assert err_f32 < 5e-1, f"f32 reference mismatch: max abs err {err_f32}"

    print("KERNEL_OK")
</pallas_src>

<mosaic_0001>
module attributes {stable_mosaic.version = 11 : i64} {
  func.func @qkv_proj_kernel(%arg0: i32, %arg1: memref<128x256xf32, #tpu.memory_space<vmem>>, %arg2: memref<1x256xf32, #tpu.memory_space<vmem>>, %arg3: memref<1x256xf32, #tpu.memory_space<vmem>>, %arg4: memref<256x768xbf16, #tpu.memory_space<vmem>>, %arg5: memref<1x768xf32, #tpu.memory_space<vmem>>, %arg6: memref<128x768xbf16, #tpu.memory_space<vmem>>) attributes {dimension_semantics = [#tpu.dimension_semantics<parallel>], iteration_bounds = array<i64: 2>, scalar_prefetch = 0 : i64, scratch_operands = 0 : i64, tpu.core_type = #tpu.core_type<tc>, window_params = [{transform_indices = @transform_0, window_bounds = array<i64: 128, 256>}, {pipeline_mode = #tpu.pipeline_mode<synchronous>, transform_indices = @transform_1, window_bounds = array<i64: 1, 256>}, {pipeline_mode = #tpu.pipeline_mode<synchronous>, transform_indices = @transform_2, window_bounds = array<i64: 1, 256>}, {pipeline_mode = #tpu.pipeline_mode<synchronous>, transform_indices = @transform_3, window_bounds = array<i64: 256, 768>}, {pipeline_mode = #tpu.pipeline_mode<synchronous>, transform_indices = @transform_4, window_bounds = array<i64: 1, 768>}, {transform_indices = @transform_5, window_bounds = array<i64: 128, 768>}]} {
    %c0 = arith.constant 0 : index
    %c0_0 = arith.constant 0 : index
    %0 = vector.load %arg1[%c0, %c0_0] : memref<128x256xf32, #tpu.memory_space<vmem>>, vector<128x256xf32>
    %cst = arith.constant dense<0.000000e+00> : vector<128xf32>
    %1 = vector.multi_reduction <add>, %0, %cst [1] : vector<128x256xf32> to vector<128xf32>
    %2 = vector.shape_cast %1 : vector<128xf32> to vector<128x1xf32>
    %cst_1 = arith.constant 2.560000e+02 : f32
    %3 = vector.broadcast %cst_1 : f32 to vector<128x1xf32>
    %4 = arith.divf %2, %3 : vector<128x1xf32>
    %5 = vector.broadcast %4 : vector<128x1xf32> to vector<128x256xf32>
    %6 = arith.subf %0, %5 : vector<128x256xf32>
    %7 = arith.mulf %6, %6 : vector<128x256xf32>
    %cst_2 = arith.constant dense<0.000000e+00> : vector<128xf32>
    %8 = vector.multi_reduction <add>, %7, %cst_2 [1] : vector<128x256xf32> to vector<128xf32>
    %9 = vector.shape_cast %8 : vector<128xf32> to vector<128x1xf32>
    %cst_3 = arith.constant 2.560000e+02 : f32
    %10 = vector.broadcast %cst_3 : f32 to vector<128x1xf32>
    %11 = arith.divf %9, %10 : vector<128x1xf32>
    %12 = vector.broadcast %4 : vector<128x1xf32> to vector<128x256xf32>
    %13 = arith.subf %0, %12 : vector<128x256xf32>
    %cst_4 = arith.constant 9.99999974E-6 : f32
    %14 = vector.broadcast %cst_4 : f32 to vector<128x1xf32>
    %15 = arith.addf %11, %14 : vector<128x1xf32>
    %16 = math.rsqrt %15 : vector<128x1xf32>
    %17 = vector.broadcast %16 : vector<128x1xf32> to vector<128x256xf32>
    %18 = arith.mulf %13, %17 : vector<128x256xf32>
    %c0_5 = arith.constant 0 : index
    %c0_6 = arith.constant 0 : index
    %19 = vector.load %arg2[%c0_5, %c0_6] : memref<1x256xf32, #tpu.memory_space<vmem>>, vector<1x256xf32>
    %20 = vector.broadcast %19 : vector<1x256xf32> to vector<128x256xf32>
    %21 = arith.mulf %18, %20 : vector<128x256xf32>
    %c0_7 = arith.constant 0 : index
    %c0_8 = arith.constant 0 : index
    %22 = vector.load %arg3[%c0_7, %c0_8] : memref<1x256xf32, #tpu.memory_space<vmem>>, vector<1x256xf32>
    %23 = vector.broadcast %22 : vector<1x256xf32> to vector<128x256xf32>
    %24 = arith.addf %21, %23 : vector<128x256xf32>
    %25 = arith.truncf %24 : vector<128x256xf32> to vector<128x256xbf16>
    %c0_9 = arith.constant 0 : index
    %c0_10 = arith.constant 0 : index
    %26 = vector.load %arg4[%c0_9, %c0_10] : memref<256x768xbf16, #tpu.memory_space<vmem>>, vector<256x768xbf16>
    %cst_11 = arith.constant dense<0.000000e+00> : vector<128x768xf32>
    %27 = tpu.matmul %25, %26, %cst_11 {dimension_numbers = #tpu.dot_dimension_numbers<[1], [0], [0], [1], [0, 0, 1, 1], [], []>} : vector<128x256xbf16>, vector<256x768xbf16>, vector<128x768xf32> -> vector<128x768xf32>
    %c0_12 = arith.constant 0 : index
    %c0_13 = arith.constant 0 : index
    %28 = vector.load %arg5[%c0_12, %c0_13] : memref<1x768xf32, #tpu.memory_space<vmem>>, vector<1x768xf32>
    %29 = vector.broadcast %28 : vector<1x768xf32> to vector<128x768xf32>
    %30 = arith.addf %27, %29 : vector<128x768xf32>
    %31 = arith.truncf %30 : vector<128x768xf32> to vector<128x768xbf16>
    %c0_14 = arith.constant 0 : index
    %c0_15 = arith.constant 0 : index
    %32 = vector.load %arg6[%c0_14, %c0_15] : memref<128x768xbf16, #tpu.memory_space<vmem>>, vector<128x768xbf16>
    tpu.vector_store %arg6[%c0_14, %c0_15], %31 {strides = array<i32>} : memref<128x768xbf16, #tpu.memory_space<vmem>>, vector<128x768xbf16>,
    return
  }
  func.func @transform_0(%arg0: i32) -> (i32, i32) {
    %c0_i32 = arith.constant 0 : i32
    %c0_i32_0 = arith.constant 0 : i32
    return %arg0, %c0_i32 : i32, i32
  }
  func.func @transform_1(%arg0: i32) -> (i32, i32) {
    %c0_i32 = arith.constant 0 : i32
    %c0_i32_0 = arith.constant 0 : i32
    %c0_i32_1 = arith.constant 0 : i32
    return %c0_i32, %c0_i32_0 : i32, i32
  }
  func.func @transform_2(%arg0: i32) -> (i32, i32) {
    %c0_i32 = arith.constant 0 : i32
    %c0_i32_0 = arith.constant 0 : i32
    %c0_i32_1 = arith.constant 0 : i32
    return %c0_i32, %c0_i32_0 : i32, i32
  }
  func.func @transform_3(%arg0: i32) -> (i32, i32) {
    %c0_i32 = arith.constant 0 : i32
    %c0_i32_0 = arith.constant 0 : i32
    %c0_i32_1 = arith.constant 0 : i32
    return %c0_i32, %c0_i32_0 : i32, i32
  }
  func.func @transform_4(%arg0: i32) -> (i32, i32) {
    %c0_i32 = arith.constant 0 : i32
    %c0_i32_0 = arith.constant 0 : i32
    %c0_i32_1 = arith.constant 0 : i32
    return %c0_i32, %c0_i32_0 : i32, i32
  }
  func.func @transform_5(%arg0: i32) -> (i32, i32) {
    %c0_i32 = arith.constant 0 : i32
    %c0_i32_0 = arith.constant 0 : i32
    return %arg0, %c0_i32 : i32, i32
  }
}

module attributes {stable_mosaic.version = 11 : i64} {
  func.func @attn_ffn_kernel(%arg0: i32, %arg1: memref<128x256xf32, #tpu.memory_space<vmem>>, %arg2: memref<2x128x128xbf16, #tpu.memory_space<vmem>>, %arg3: memref<2x256x128xbf16, #tpu.memory_space<vmem>>, %arg4: memref<2x256x128xbf16, #tpu.memory_space<vmem>>, %arg5: memref<256x256xbf16, #tpu.memory_space<vmem>>, %arg6: memref<1x256xf32, #tpu.memory_space<vmem>>, %arg7: memref<1x256xf32, #tpu.memory_space<vmem>>, %arg8: memref<1x256xf32, #tpu.memory_space<vmem>>, %arg9: memref<256x256xbf16, #tpu.memory_space<vmem>>, %arg10: memref<1x256xf32, #tpu.memory_space<vmem>>, %arg11: memref<256x256xbf16, #tpu.memory_space<vmem>>, %arg12: memref<1x256xf32, #tpu.memory_space<vmem>>, %arg13: memref<128x256xf32, #tpu.memory_space<vmem>>) attributes {dimension_semantics = [#tpu.dimension_semantics<parallel>], iteration_bounds = array<i64: 2>, scalar_prefetch = 0 : i64, scratch_operands = 0 : i64, tpu.core_type = #tpu.core_type<tc>, window_params = [{transform_indices = @transform_0, window_bounds = array<i64: 128, 256>}, {transform_indices = @transform_1, window_bounds = array<i64: 2, 128, 128>}, {pipeline_mode = #tpu.pipeline_mode<synchronous>, transform_indices = @transform_2, window_bounds = array<i64: 2, 256, 128>}, {pipeline_mode = #tpu.pipeline_mode<synchronous>, transform_indices = @transform_3, window_bounds = array<i64: 2, 256, 128>}, {pipeline_mode = #tpu.pipeline_mode<synchronous>, transform_indices = @transform_4, window_bounds = array<i64: 256, 256>}, {pipeline_mode = #tpu.pipeline_mode<synchronous>, transform_indices = @transform_5, window_bounds = array<i64: 1, 256>}, {pipeline_mode = #tpu.pipeline_mode<synchronous>, transform_indices = @transform_6, window_bounds = array<i64: 1, 256>}, {pipeline_mode = #tpu.pipeline_mode<synchronous>, transform_indices = @transform_7, window_bounds = array<i64: 1, 256>}, {pipeline_mode = #tpu.pipeline_mode<synchronous>, transform_indices = @transform_8, window_bounds = array<i64: 256, 256>}, {pipeline_mode = #tpu.pipeline_mode<synchronous>, transform_indices = @transform_9, window_bounds = array<i64: 1, 256>}, {pipeline_mode = #tpu.pipeline_mode<synchronous>, transform_indices = @transform_10, window_bounds = array<i64: 256, 256>}, {pipeline_mode = #tpu.pipeline_mode<synchronous>, transform_indices = @transform_11, window_bounds = array<i64: 1, 256>}, {transform_indices = @transform_12, window_bounds = array<i64: 128, 256>}]} {
    %c0 = arith.constant 0 : index
    %c0_0 = arith.constant 0 : index
    %c0_1 = arith.constant 0 : index
    %0 = vector.load %arg2[%c0, %c0_0, %c0_1] : memref<2x128x128xbf16, #tpu.memory_space<vmem>>, vector<2x128x128xbf16>
    %c0_2 = arith.constant 0 : index
    %c0_3 = arith.constant 0 : index
    %c0_4 = arith.constant 0 : index
    %1 = vector.load %arg3[%c0_2, %c0_3, %c0_4] : memref<2x256x128xbf16, #tpu.memory_space<vmem>>, vector<2x256x128xbf16>
    %c0_5 = arith.constant 0 : index
    %c0_6 = arith.constant 0 : index
    %c0_7 = arith.constant 0 : index
    %2 = vector.load %arg4[%c0_5, %c0_6, %c0_7] : memref<2x256x128xbf16, #tpu.memory_space<vmem>>, vector<2x256x128xbf16>
    "tpu.trace_start"() <{level = 10 : i32, message = "hqd,hkd->hqk"}> : () -> ()
    %cst = arith.constant dense<0.000000e+00> : vector<2x128x256xf32>
    %3 = tpu.matmul %0, %1, %cst {dimension_numbers = #tpu.dot_dimension_numbers<[2], [2], [1], [1], [0, 0, 0, 1, 1, 1], [0], [0]>} : vector<2x128x128xbf16>, vector<2x256x128xbf16>, vector<2x128x256xf32> -> vector<2x128x256xf32>
    "tpu.trace_stop"() : () -> ()
    %cst_8 = arith.constant dense<0xFF800000> : vector<2x128xf32>
    %4 = vector.multi_reduction <maximumf>, %3, %cst_8 [2] : vector<2x128x256xf32> to vector<2x128xf32>
    %5 = vector.shape_cast %4 : vector<2x128xf32> to vector<2x128x1xf32>
    %6 = vector.broadcast %5 : vector<2x128x1xf32> to vector<2x128x256xf32>
    %7 = arith.subf %3, %6 : vector<2x128x256xf32>
    %8 = math.exp %7 : vector<2x128x256xf32>
    %cst_9 = arith.constant dense<0.000000e+00> : vector<2x128xf32>
    %9 = vector.multi_reduction <add>, %8, %cst_9 [2] : vector<2x128x256xf32> to vector<2x128xf32>
    %10 = vector.shape_cast %9 : vector<2x128xf32> to vector<2x128x1xf32>
    %11 = tpu.reciprocal %10 {approx = true} : vector<2x128x1xf32> -> vector<2x128x1xf32>
    %12 = vector.broadcast %11 : vector<2x128x1xf32> to vector<2x128x256xf32>
    %13 = arith.mulf %8, %12 : vector<2x128x256xf32>
    %14 = arith.truncf %13 : vector<2x128x256xf32> to vector<2x128x256xbf16>
    "tpu.trace_start"() <{level = 10 : i32, message = "hqk,hkd->hqd"}> : () -> ()
    %cst_10 = arith.constant dense<0.000000e+00> : vector<2x128x128xf32>
    %15 = tpu.matmul %14, %2, %cst_10 {dimension_numbers = #tpu.dot_dimension_numbers<[2], [1], [1], [2], [0, 0, 0, 1, 1, 2], [0], [0]>} : vector<2x128x256xbf16>, vector<2x256x128xbf16>, vector<2x128x128xf32> -> vector<2x128x128xf32>
    "tpu.trace_stop"() : () -> ()
    %c0_11 = arith.constant 0 : index
    %c0_12 = arith.constant 0 : index
    %16 = vector.load %arg6[%c0_11, %c0_12] : memref<1x256xf32, #tpu.memory_space<vmem>>, vector<1x256xf32>
    %17 = vector.extract_strided_slice %15 {offsets = [0, 0, 0], sizes = [1, 128, 128], strides = [1, 1, 1]} : vector<2x128x128xf32> to vector<1x128x128xf32>
    %18 = vector.shape_cast %17 : vector<1x128x128xf32> to vector<128x128xf32>
    %19 = arith.truncf %18 : vector<128x128xf32> to vector<128x128xbf16>
    %c0_13 = arith.constant 0 : index
    %c0_14 = arith.constant 0 : index
    %20 = vector.load %arg5[%c0_13, %c0_14] : memref<256x256xbf16, #tpu.memory_space<vmem>>, vector<128x256xbf16>
    %cst_15 = arith.constant dense<0.000000e+00> : vector<128x256xf32>
    %21 = tpu.matmul %19, %20, %cst_15 {dimension_numbers = #tpu.dot_dimension_numbers<[1], [0], [0], [1], [0, 0, 1, 1], [], []>} : vector<128x128xbf16>, vector<128x256xbf16>, vector<128x256xf32> -> vector<128x256xf32>
    %22 = vector.broadcast %16 : vector<1x256xf32> to vector<128x256xf32>
    %23 = arith.addf %22, %21 : vector<128x256xf32>
    %24 = vector.extract_strided_slice %15 {offsets = [1, 0, 0], sizes = [1, 128, 128], strides = [1, 1, 1]} : vector<2x128x128xf32> to vector<1x128x128xf32>
    %25 = vector.shape_cast %24 : vector<1x128x128xf32> to vector<128x128xf32>
    %26 = arith.truncf %25 : vector<128x128xf32> to vector<128x128xbf16>
    %c128 = arith.constant 128 : index
    %c0_16 = arith.constant 0 : index
    %27 = vector.load %arg5[%c128, %c0_16] : memref<256x256xbf16, #tpu.memory_space<vmem>>, vector<128x256xbf16>
    %cst_17 = arith.constant dense<0.000000e+00> : vector<128x256xf32>
    %28 = tpu.matmul %26, %27, %cst_17 {dimension_numbers = #tpu.dot_dimension_numbers<[1], [0], [0], [1], [0, 0, 1, 1], [], []>} : vector<128x128xbf16>, vector<128x256xbf16>, vector<128x256xf32> -> vector<128x256xf32>
    %29 = arith.addf %23, %28 : vector<128x256xf32>
    %c0_18 = arith.constant 0 : index
    %c0_19 = arith.constant 0 : index
    %30 = vector.load %arg1[%c0_18, %c0_19] : memref<128x256xf32, #tpu.memory_space<vmem>>, vector<128x256xf32>
    %31 = arith.addf %30, %29 : vector<128x256xf32>
    %cst_20 = arith.constant dense<0.000000e+00> : vector<128xf32>
    %32 = vector.multi_reduction <add>, %31, %cst_20 [1] : vector<128x256xf32> to vector<128xf32>
    %33 = vector.shape_cast %32 : vector<128xf32> to vector<128x1xf32>
    %cst_21 = arith.constant 2.560000e+02 : f32
    %34 = vector.broadcast %cst_21 : f32 to vector<128x1xf32>
    %35 = arith.divf %33, %34 : vector<128x1xf32>
    %36 = vector.broadcast %35 : vector<128x1xf32> to vector<128x256xf32>
    %37 = arith.subf %31, %36 : vector<128x256xf32>
    %38 = arith.mulf %37, %37 : vector<128x256xf32>
    %cst_22 = arith.constant dense<0.000000e+00> : vector<128xf32>
    %39 = vector.multi_reduction <add>, %38, %cst_22 [1] : vector<128x256xf32> to vector<128xf32>
    %40 = vector.shape_cast %39 : vector<128xf32> to vector<128x1xf32>
    %cst_23 = arith.constant 2.560000e+02 : f32
    %41 = vector.broadcast %cst_23 : f32 to vector<128x1xf32>
    %42 = arith.divf %40, %41 : vector<128x1xf32>
    %43 = vector.broadcast %35 : vector<128x1xf32> to vector<128x256xf32>
    %44 = arith.subf %31, %43 : vector<128x256xf32>
    %cst_24 = arith.constant 9.99999974E-6 : f32
    %45 = vector.broadcast %cst_24 : f32 to vector<128x1xf32>
    %46 = arith.addf %42, %45 : vector<128x1xf32>
    %47 = math.rsqrt %46 : vector<128x1xf32>
    %48 = vector.broadcast %47 : vector<128x1xf32> to vector<128x256xf32>
    %49 = arith.mulf %44, %48 : vector<128x256xf32>
    %c0_25 = arith.constant 0 : index
    %c0_26 = arith.constant 0 : index
    %50 = vector.load %arg7[%c0_25, %c0_26] : memref<1x256xf32, #tpu.memory_space<vmem>>, vector<1x256xf32>
    %51 = vector.broadcast %50 : vector<1x256xf32> to vector<128x256xf32>
    %52 = arith.mulf %49, %51 : vector<128x256xf32>
    %c0_27 = arith.constant 0 : index
    %c0_28 = arith.constant 0 : index
    %53 = vector.load %arg8[%c0_27, %c0_28] : memref<1x256xf32, #tpu.memory_space<vmem>>, vector<1x256xf32>
    %54 = vector.broadcast %53 : vector<1x256xf32> to vector<128x256xf32>
    %55 = arith.addf %52, %54 : vector<128x256xf32>
    %56 = arith.truncf %55 : vector<128x256xf32> to vector<128x256xbf16>
    %c0_29 = arith.constant 0 : index
    %c0_30 = arith.constant 0 : index
    %57 = vector.load %arg9[%c0_29, %c0_30] : memref<256x256xbf16, #tpu.memory_space<vmem>>, vector<256x256xbf16>
    %cst_31 = arith.constant dense<0.000000e+00> : vector<128x256xf32>
    %58 = tpu.matmul %56, %57, %cst_31 {dimension_numbers = #tpu.dot_dimension_numbers<[1], [0], [0], [1], [0, 0, 1, 1], [], []>} : vector<128x256xbf16>, vector<256x256xbf16>, vector<128x256xf32> -> vector<128x256xf32>
    %c0_32 = arith.constant 0 : index
    %c0_33 = arith.constant 0 : index
    %59 = vector.load %arg10[%c0_32, %c0_33] : memref<1x256xf32, #tpu.memory_space<vmem>>, vector<1x256xf32>
    %60 = vector.broadcast %59 : vector<1x256xf32> to vector<128x256xf32>
    %61 = arith.addf %58, %60 : vector<128x256xf32>
    %cst_34 = arith.constant 0.000000e+00 : f32
    %62 = vector.broadcast %cst_34 : f32 to vector<128x256xf32>
    %63 = arith.maximumf %61, %62 : vector<128x256xf32>
    %64 = arith.truncf %63 : vector<128x256xf32> to vector<128x256xbf16>
    %c0_35 = arith.constant 0 : index
    %c0_36 = arith.constant 0 : index
    %65 = vector.load %arg11[%c0_35, %c0_36] : memref<256x256xbf16, #tpu.memory_space<vmem>>, vector<256x256xbf16>
    %cst_37 = arith.constant dense<0.000000e+00> : vector<128x256xf32>
    %66 = tpu.matmul %64, %65, %cst_37 {dimension_numbers = #tpu.dot_dimension_numbers<[1], [0], [0], [1], [0, 0, 1, 1], [], []>} : vector<128x256xbf16>, vector<256x256xbf16>, vector<128x256xf32> -> vector<128x256xf32>
    %c0_38 = arith.constant 0 : index
    %c0_39 = arith.constant 0 : index
    %67 = vector.load %arg12[%c0_38, %c0_39] : memref<1x256xf32, #tpu.memory_space<vmem>>, vector<1x256xf32>
    %68 = vector.broadcast %67 : vector<1x256xf32> to vector<128x256xf32>
    %69 = arith.addf %66, %68 : vector<128x256xf32>
    %70 = arith.addf %31, %69 : vector<128x256xf32>
    %c0_40 = arith.constant 0 : index
    %c0_41 = arith.constant 0 : index
    %71 = vector.load %arg13[%c0_40, %c0_41] : memref<128x256xf32, #tpu.memory_space<vmem>>, vector<128x256xf32>
    tpu.vector_store %arg13[%c0_40, %c0_41], %70 {strides = array<i32>} : memref<128x256xf32, #tpu.memory_space<vmem>>, vector<128x256xf32>,
    return
  }
  func.func @transform_0(%arg0: i32) -> (i32, i32) {
    %c0_i32 = arith.constant 0 : i32
    %c0_i32_0 = arith.constant 0 : i32
    return %arg0, %c0_i32 : i32, i32
  }
  func.func @transform_1(%arg0: i32) -> (i32, i32, i32) {
    %c0_i32 = arith.constant 0 : i32
    %c0_i32_0 = arith.constant 0 : i32
    %c0_i32_1 = arith.constant 0 : i32
    return %c0_i32, %arg0, %c0_i32_0 : i32, i32, i32
  }
  func.func @transform_2(%arg0: i32) -> (i32, i32, i32) {
    %c0_i32 = arith.constant 0 : i32
    %c0_i32_0 = arith.constant 0 : i32
    %c0_i32_1 = arith.constant 0 : i32
    %c0_i32_2 = arith.constant 0 : i32
    return %c0_i32, %c0_i32_0, %c0_i32_1 : i32, i32, i32
  }
  func.func @transform_3(%arg0: i32) -> (i32, i32, i32) {
    %c0_i32 = arith.constant 0 : i32
    %c0_i32_0 = arith.constant 0 : i32
    %c0_i32_1 = arith.constant 0 : i32
    %c0_i32_2 = arith.constant 0 : i32
    return %c0_i32, %c0_i32_0, %c0_i32_1 : i32, i32, i32
  }
  func.func @transform_4(%arg0: i32) -> (i32, i32) {
    %c0_i32 = arith.constant 0 : i32
    %c0_i32_0 = arith.constant 0 : i32
    %c0_i32_1 = arith.constant 0 : i32
    return %c0_i32, %c0_i32_0 : i32, i32
  }
  func.func @transform_5(%arg0: i32) -> (i32, i32) {
    %c0_i32 = arith.constant 0 : i32
    %c0_i32_0 = arith.constant 0 : i32
    %c0_i32_1 = arith.constant 0 : i32
    return %c0_i32, %c0_i32_0 : i32, i32
  }
  func.func @transform_6(%arg0: i32) -> (i32, i32) {
    %c0_i32 = arith.constant 0 : i32
    %c0_i32_0 = arith.constant 0 : i32
    %c0_i32_1 = arith.constant 0 : i32
    return %c0_i32, %c0_i32_0 : i32, i32
  }
  func.func @transform_7(%arg0: i32) -> (i32, i32) {
    %c0_i32 = arith.constant 0 : i32
    %c0_i32_0 = arith.constant 0 : i32
    %c0_i32_1 = arith.constant 0 : i32
    return %c0_i32, %c0_i32_0 : i32, i32
  }
  func.func @transform_8(%arg0: i32) -> (i32, i32) {
    %c0_i32 = arith.constant 0 : i32
    %c0_i32_0 = arith.constant 0 : i32
    %c0_i32_1 = arith.constant 0 : i32
    return %c0_i32, %c0_i32_0 : i32, i32
  }
  func.func @transform_9(%arg0: i32) -> (i32, i32) {
    %c0_i32 = arith.constant 0 : i32
    %c0_i32_0 = arith.constant 0 : i32
    %c0_i32_1 = arith.constant 0 : i32
    return %c0_i32, %c0_i32_0 : i32, i32
  }
  func.func @transform_10(%arg0: i32) -> (i32, i32) {
    %c0_i32 = arith.constant 0 : i32
    %c0_i32_0 = arith.constant 0 : i32
    %c0_i32_1 = arith.constant 0 : i32
    return %c0_i32, %c0_i32_0 : i32, i32
  }
  func.func @transform_11(%arg0: i32) -> (i32, i32) {
    %c0_i32 = arith.constant 0 : i32
    %c0_i32_0 = arith.constant 0 : i32
    %c0_i32_1 = arith.constant 0 : i32
    return %c0_i32, %c0_i32_0 : i32, i32
  }
  func.func @transform_12(%arg0: i32) -> (i32, i32) {
    %c0_i32 = arith.constant 0 : i32
    %c0_i32_0 = arith.constant 0 : i32
    return %arg0, %c0_i32 : i32, i32
  }
}

</mosaic_0001>

<llo_original>
// kernel: transformer_block.2
$region0: #{transformer_block.2}
  #allocation0 [shape = 'u32[]', space=smem, size = 0x4, offset = 0x4, fixed_abs, tag = 'smem constant byte address 0x4 - core index']
  #allocation1 [shape = 'u32[144,128]{1,0:T(1,128)}', space=vmem, size = 0x12000, scoped, tag = 'internal scratch']
  %s0 = inlined_call_operand.hbm [shape: f32[256,256], index: 0, kind: input, shape index: {}]
  %s1 = inlined_call_operand.vmem [shape: f32[1,256], index: 1, kind: input, shape index: {}]
  %s2 = inlined_call_operand.hbm [shape: f32[1,256], index: 2, kind: input, shape index: {}]
  %s3 = inlined_call_operand.hbm [shape: bf16[256,768], index: 3, kind: input, shape index: {}]
  %s4 = inlined_call_operand.vmem [shape: f32[1,768], index: 4, kind: input, shape index: {}]
  %s5 = inlined_call_operand.vmem [shape: bf16[256,768], index: 5, kind: output, shape index: {}]
  %s6 = sld [smem:[#allocation0]]
  $region65: #{transformer_block.2} parent=0
    _
  %s8 = ssub.s32 1, %s6
  %s9 = scalar_select 0, %s8, %s6
  $region1: #{transformer_block.2} parent=0
    #allocation2 [shape = 'u8[262144]{0}', space=vmem, size = 0x40000, scoped, tag = 'input window, operand 0']
    #allocation3 [shape = 's32[2]{0}', space=sflag, size = 0x8, scoped, tag = 'scoped memory for transformer_block.2']
    #allocation4 [shape = 'u8[1024]{0}', space=vmem, size = 0x400, scoped, tag = 'input window, operand 2, single buffered']
    #allocation5 [shape = 's32[1]{0}', space=sflag, size = 0x4, scoped, tag = 'scoped memory for transformer_block.2']
    #allocation6 [shape = 'u8[393216]{0}', space=vmem, size = 0x60000, scoped, tag = 'input window, operand 3, single buffered']
    %10 = vsyncpa [#allocation3], 0
    %s11 = scalar_lea.sflag [#allocation3], 1
    %12 = vsyncpa %s11, 0
    %13 = vsyncpa [#allocation5], 0
    loop: start=0, step=1, limit=4
    $region2: #{transformer_block.2} parent=1 // loop_pre_header
      _
    $region3: #{transformer_block.2} parent=1 // loop_header
      %s15 = sphi 0, %s19
      %p16 = scmp.ge.s32.totalorder %s15, 4
      %s25 = sphi 0, %s27
      %s28 = sphi 0, %s25
      %s29 = sphi 0, %s28
      %s45 = sphi 0, %s29
      %s49 = sphi 0, %s49
      %s51 = sphi 0, %s49
      %s52 = sphi 0, %s51
      %s66 = sphi 0, %s52
      %s70 = sphi 0, %s70
      %s72 = sphi 0, %s70
      %s73 = sphi 0, %s72
      %s87 = sphi 0, %s73
      %s91 = sphi 0, %s91
      %s93 = sphi 0, %s91
      %s94 = sphi 0, %s93
      %s108 = sphi 0, %s94
      %s112 = sphi 0, %s112
      %s114 = sphi 0, %s112
      %s115 = sphi 0, %s114
      %s129 = sphi 0, %s115
      %s135 = sphi 0, %s137
      %s138 = sphi 0, %s135
      %s139 = sphi 0, %s138
      %s155 = sphi 0, %s139
    $region4: #{transformer_block.2} parent=1 // loop_header_branch
      %18 = sbr.rel (%p16) target = $region8
    $region5: #{transformer_block.2} parent=1 // loop_body
      %s20 = ssub.s32 %s15, 1
      %s21 = ssub.s32 %s15, 2
      %s22 = sadd.s32 %s15, 1
      %s23 = ssub.s32 %s15, %s22
      %p24 = scmp.eq.s32.totalorder %s23, 0
      %s26 = sadd.s32 %s25, 1
      %s27 = scalar_select %p24, %s25, %s26
      %p30 = pneg %p24
      %p31 = scmp.eq.s32.totalorder %s15, 1
      %p32 = por %p30, %p31
      %p33 = scmp.ne.s32.totalorder %s25, %s28
      %p34 = scmp.eq.s32.totalorder %s15, 0
      %p35 = por %p33, %p34
      %p36 = scmp.ne.s32.totalorder %s25, %s28
      %p37 = scmp.eq.s32.totalorder %s20, 1
      %p38 = por %p36, %p37
      %p39 = scmp.ne.s32.totalorder %s28, %s29
      %p40 = scmp.eq.s32.totalorder %s20, 0
      %p41 = por %p39, %p40
      %p42 = scmp.ne.s32.totalorder %s28, %s29
      %p43 = scmp.eq.s32.totalorder %s21, 1
      %p44 = por %p42, %p43
      %p46 = scmp.ne.s32.totalorder %s29, %s45
      %p47 = scmp.eq.s32.totalorder %s21, 0
      %p48 = por %p46, %p47
      %s50 = sadd.s32 %s49, 1
      %p53 = scmp.eq.s32.totalorder %s15, 1
      %p54 = scmp.ne.s32.totalorder %s49, %s51
      %p55 = scmp.eq.s32.totalorder %s15, 0
      %p56 = por %p54, %p55
      %p57 = scmp.ne.s32.totalorder %s49, %s51
      %p58 = scmp.eq.s32.totalorder %s20, 1
      %p59 = por %p57, %p58
      %p60 = scmp.ne.s32.totalorder %s51, %s52
      %p61 = scmp.eq.s32.totalorder %s20, 0
      %p62 = por %p60, %p61
      %p63 = scmp.ne.s32.totalorder %s51, %s52
      %p64 = scmp.eq.s32.totalorder %s21, 1
      %p65 = por %p63, %p64
      %p67 = scmp.ne.s32.totalorder %s52, %s66
      %p68 = scmp.eq.s32.totalorder %s21, 0
      %p69 = por %p67, %p68
      %s71 = sadd.s32 %s70, 1
      %p74 = scmp.eq.s32.totalorder %s15, 1
      %p75 = scmp.ne.s32.totalorder %s70, %s72
      %p76 = scmp.eq.s32.totalorder %s15, 0
      %p77 = por %p75, %p76
      %p78 = scmp.ne.s32.totalorder %s70, %s72
      %p79 = scmp.eq.s32.totalorder %s20, 1
      %p80 = por %p78, %p79
      %p81 = scmp.ne.s32.totalorder %s72, %s73
      %p82 = scmp.eq.s32.totalorder %s20, 0
      %p83 = por %p81, %p82
      %p84 = scmp.ne.s32.totalorder %s72, %s73
      %p85 = scmp.eq.s32.totalorder %s21, 1
      %p86 = por %p84, %p85
      %p88 = scmp.ne.s32.totalorder %s73, %s87
      %p89 = scmp.eq.s32.totalorder %s21, 0
      %p90 = por %p88, %p89
      %s92 = sadd.s32 %s91, 1
      %p95 = scmp.eq.s32.totalorder %s15, 1
      %p96 = scmp.ne.s32.totalorder %s91, %s93
      %p97 = scmp.eq.s32.totalorder %s15, 0
      %p98 = por %p96, %p97
      %p99 = scmp.ne.s32.totalorder %s91, %s93
      %p100 = scmp.eq.s32.totalorder %s20, 1
      %p101 = por %p99, %p100
      %p102 = scmp.ne.s32.totalorder %s93, %s94
      %p103 = scmp.eq.s32.totalorder %s20, 0
      %p104 = por %p102, %p103
      %p105 = scmp.ne.s32.totalorder %s93, %s94
      %p106 = scmp.eq.s32.totalorder %s21, 1
      %p107 = por %p105, %p106
      %p109 = scmp.ne.s32.totalorder %s94, %s108
      %p110 = scmp.eq.s32.totalorder %s21, 0
      %p111 = por %p109, %p110
      %s113 = sadd.s32 %s112, 1
      %p116 = scmp.eq.s32.totalorder %s15, 1
      %p117 = scmp.ne.s32.totalorder %s112, %s114
      %p118 = scmp.eq.s32.totalorder %s15, 0
      %p119 = por %p117, %p118
      %p120 = scmp.ne.s32.totalorder %s112, %s114
      %p121 = scmp.eq.s32.totalorder %s20, 1
      %p122 = por %p120, %p121
      %p123 = scmp.ne.s32.totalorder %s114, %s115
      %p124 = scmp.eq.s32.totalorder %s20, 0
      %p125 = por %p123, %p124
      %p126 = scmp.ne.s32.totalorder %s114, %s115
      %p127 = scmp.eq.s32.totalorder %s21, 1
      %p128 = por %p126, %p127
      %p130 = scmp.ne.s32.totalorder %s115, %s129
      %p131 = scmp.eq.s32.totalorder %s21, 0
      %p132 = por %p130, %p131
      %s133 = ssub.s32 %s15, %s22
      %p134 = scmp.eq.s32.totalorder %s133, 0
      %s136 = sadd.s32 %s135, 1
      %s137 = scalar_select %p134, %s135, %s136
      %p140 = pneg %p134
      %p141 = scmp.eq.s32.totalorder %s15, 1
      %p142 = por %p140, %p141
      %p143 = scmp.ne.s32.totalorder %s135, %s138
      %p144 = scmp.eq.s32.totalorder %s15, 0
      %p145 = por %p143, %p144
      %p146 = scmp.ne.s32.totalorder %s135, %s138
      %p147 = scmp.eq.s32.totalorder %s20, 1
      %p148 = por %p146, %p147
      %p149 = scmp.ne.s32.totalorder %s138, %s139
      %p150 = scmp.eq.s32.totalorder %s20, 0
      %p151 = por %p149, %p150
      %p152 = scmp.ne.s32.totalorder %s138, %s139
      %p153 = scmp.eq.s32.totalorder %s21, 1
      %p154 = por %p152, %p153
      %p156 = scmp.ne.s32.totalorder %s139, %s155
      %p157 = scmp.eq.s32.totalorder %s21, 0
      %p158 = por %p156, %p157
      %p159 = scmp.le.s32.totalorder 1, %s15
      %p160 = scmp.lt.s32.totalorder %s15, 3
      %p161 = pnand %p159, %p160
      %p162 = pneg %p161
      // Predicated region
      $region9: #{transformer_block.2} parent=5 // pred_check
        _
      $region10: #{transformer_block.2} parent=5 // pred_check_branch
        %164 = sbr.rel (%p161) target = $region12
      $region11: #{transformer_block.2} parent=5 // pred_region
        %s165 = ssub.s32 %s15, 1
        // Predicated region
        $region13: #{transformer_block.2} parent=11 // pred_check
          %p166 = pneg %p62
        $region14: #{transformer_block.2} parent=11 // pred_check_branch
          %168 = sbr.rel (%p166) target = $region16
        $region15: #{transformer_block.2} parent=11 // pred_region
          _
        $region16: #{transformer_block.2} parent=11 // pred_fallthru
          _
        // Predicated region
        $region17: #{transformer_block.2} parent=11 // pred_check
          %p169 = pneg %p83
        $region18: #{transformer_block.2} parent=11 // pred_check_branch
          %171 = sbr.rel (%p169) target = $region20
        $region19: #{transformer_block.2} parent=11 // pred_region
          %s173 = ssub.s32 32, 32
          %174 = vsyncadd [#allocation5], %s173
          %s176 = sshll.u32 [#allocation4], 4
          %s177 = int_to_ptr.vmem [resolvable:$true] %s176
          %179 = dma.hbm_to_vmem [thread:$0]  %s2, 32, %s177, [#allocation5]
        $region20: #{transformer_block.2} parent=11 // pred_fallthru
          _
        // Predicated region
        $region21: #{transformer_block.2} parent=11 // pred_check
          %p180 = pneg %p104
        $region22: #{transformer_block.2} parent=11 // pred_check_branch
          %182 = sbr.rel (%p180) target = $region24
        $region23: #{transformer_block.2} parent=11 // pred_region
          %s184 = ssub.s32 12288, 12288
          %185 = vsyncadd [#allocation5], %s184
          %s186 = sshll.u32 [#allocation6], 4
          %s187 = int_to_ptr.vmem [resolvable:$true] %s186
          %192 = dma.hbm_to_vmem [thread:$0]  %s3, 12288, %s187, [#allocation5], 384, 384, 24
        $region24: #{transformer_block.2} parent=11 // pred_fallthru
          _
        // Predicated region
        $region25: #{transformer_block.2} parent=11 // pred_check
          %p193 = pneg %p125
        $region26: #{transformer_block.2} parent=11 // pred_check_branch
          %195 = sbr.rel (%p193) target = $region28
        $region27: #{transformer_block.2} parent=11 // pred_region
          _
        $region28: #{transformer_block.2} parent=11 // pred_fallthru
          _
      $region12: #{transformer_block.2} parent=5 // pred_fallthru
        _
      %p196 = scmp.lt.s32.totalorder %s15, 2
      // Predicated region
      $region29: #{transformer_block.2} parent=5 // pred_check
        %p197 = pneg %p196
      $region30: #{transformer_block.2} parent=5 // pred_check_branch
        %199 = sbr.rel (%p197) target = $region32
      $region31: #{transformer_block.2} parent=5 // pred_region
        // Predicated region
        $region33: #{transformer_block.2} parent=31 // pred_check
          %p200 = pneg %p35
        $region34: #{transformer_block.2} parent=31 // pred_check_branch
          %202 = sbr.rel (%p200) target = $region36
        $region35: #{transformer_block.2} parent=31 // pred_region
          %s203 = sand.u32 %s25, 1
          %s204 = scalar_lea.sflag [#allocation3], %s203
          %s205 = sand.u32 %s25, 1
          %s206 = smul.addr %s205, 256
          %s207 = scalar_lea.vmem [#allocation2], %s206
          %s208 = smul.u32 16, %s15
          %s210 = ssub.s32 4096, 4096
          %211 = vsyncadd %s204, %s210
          %s212 = smul.addr %s208, 2
          %s213 = smul.addr %s212, 128
          %s214 = scalar_lea.hbm %s0, %s213
          %s215 = sshll.u32 %s207, 4
          %s216 = int_to_ptr.vmem [resolvable:$true] %s215
          %221 = dma.hbm_to_vmem [thread:$0]  %s214, 4096, %s216, %s204, 256, 256, 16
        $region36: #{transformer_block.2} parent=31 // pred_fallthru
          _
      $region32: #{transformer_block.2} parent=5 // pred_fallthru
        _
      %p222 = scmp.le.s32.totalorder 1, %s15
      %p223 = scmp.lt.s32.totalorder %s15, 3
      %p224 = pnand %p222, %p223
      %p225 = pneg %p224
      // Predicated region
      $region37: #{transformer_block.2} parent=5 // pred_check
        _
      $region38: #{transformer_block.2} parent=5 // pred_check_branch
        %227 = sbr.rel (%p224) target = $region40
      $region39: #{transformer_block.2} parent=5 // pred_region
        %s228 = ssub.s32 %s15, 1
        %s229 = sand.u32 %s28, 1
        %s230 = scalar_lea.sflag [#allocation3], %s229
        %s231 = sand.u32 %s28, 1
        %s232 = smul.addr %s231, 256
        %s233 = scalar_lea.vmem [#allocation2], %s232
        // Predicated region
        $region41: #{transformer_block.2} parent=39 // pred_check
          %p234 = pneg %p41
        $region42: #{transformer_block.2} parent=39 // pred_check_branch
          %236 = sbr.rel (%p234) target = $region44
        $region43: #{transformer_block.2} parent=39 // pred_region
          %237 = dma.done %s230, 4096
        $region44: #{transformer_block.2} parent=39 // pred_fallthru
          _
        // Predicated region
        $region45: #{transformer_block.2} parent=39 // pred_check
          %p238 = pneg %p83
        $region46: #{transformer_block.2} parent=39 // pred_check_branch
          %240 = sbr.rel (%p238) target = $region48
        $region47: #{transformer_block.2} parent=39 // pred_region
          %241 = dma.done [#allocation5], 32
        $region48: #{transformer_block.2} parent=39 // pred_fallthru
          _
        // Predicated region
        $region49: #{transformer_block.2} parent=39 // pred_check
          %p242 = pneg %p104
        $region50: #{transformer_block.2} parent=39 // pred_check_branch
          %244 = sbr.rel (%p242) target = $region52
        $region51: #{transformer_block.2} parent=39 // pred_region
          %245 = dma.done [#allocation5], 12288
        $region52: #{transformer_block.2} parent=39 // pred_fallthru
          _
        %s246 = sand.u32 %s28, 1
        %s247 = scalar_lea.sflag [#allocation3], %s246
        %s248 = sand.u32 %s28, 1
        %s249 = smul.addr %s248, 256
        %s250 = scalar_lea.vmem [#allocation2], %s249
        %p251 = pneg %p41
        %p252 = pneg %p38
        %p253 = pneg %p62
        %p254 = pneg %p59
        %p255 = pneg %p83
        %p256 = pneg %p80
        %p257 = pneg %p104
        %p258 = pneg %p101
        %p259 = pneg %p125
        %p260 = pneg %p122
        %p261 = pneg %p151
        %p262 = pneg %p148
        %s263 = smul.u32 16, %s20
        %p264 = scmp.lt.s32.totalorder %s263, 31
        %s265 = scalar_select %p264, %s263, 31
        %s266 = smul.addr %s265, 6
        %s267 = smul.addr %s266, 4
        %s268 = scalar_lea.vmem %s5, %s267
        %s269 = smul.u32 16, %s20
        %s270 = smul.u32 16, %s20
        %p271 = scmp.lt.s32.totalorder %s270, 31
        %s272 = scalar_select %p271, %s270, 31
        %s273 = smul.addr %s272, 6
        %s274 = smul.addr %s273, 4
        %s275 = scalar_lea.vmem %s5, %s274
        %s276 = smul.u32 16, %s20
        %v277 = vld [vmem:[%s233] sm:$0xff]
        %v278 = vld [vmem:[%s233 + $0x8] sm:$0xff]
        %v279 = vld [vmem:[%s233 + $0x10] sm:$0xff]
        %v280 = vld [vmem:[%s233 + $0x18] sm:$0xff]
        %v281 = vld [vmem:[%s233 + $0x20] sm:$0xff]
        %v282 = vld [vmem:[%s233 + $0x28] sm:$0xff]
        %v283 = vld [vmem:[%s233 + $0x30] sm:$0xff]
        %v284 = vld [vmem:[%s233 + $0x38] sm:$0xff]
        %v285 = vld [vmem:[%s233 + $0x40] sm:$0xff]
        %v286 = vld [vmem:[%s233 + $0x48] sm:$0xff]
        %v287 = vld [vmem:[%s233 + $0x50] sm:$0xff]
        %v288 = vld [vmem:[%s233 + $0x58] sm:$0xff]
        %v289 = vld [vmem:[%s233 + $0x60] sm:$0xff]
        %v290 = vld [vmem:[%s233 + $0x68] sm:$0xff]
        %v291 = vld [vmem:[%s233 + $0x70] sm:$0xff]
        %v292 = vld [vmem:[%s233 + $0x78] sm:$0xff]
        %v293 = vld [vmem:[%s233 + $0x80] sm:$0xff]
        %v294 = vld [vmem:[%s233 + $0x88] sm:$0xff]
        %v295 = vld [vmem:[%s233 + $0x90] sm:$0xff]
        %v296 = vld [vmem:[%s233 + $0x98] sm:$0xff]
        %v297 = vld [vmem:[%s233 + $0xa0] sm:$0xff]
        %v298 = vld [vmem:[%s233 + $0xa8] sm:$0xff]
        %v299 = vld [vmem:[%s233 + $0xb0] sm:$0xff]
        %v300 = vld [vmem:[%s233 + $0xb8] sm:$0xff]
        %v301 = vld [vmem:[%s233 + $0xc0] sm:$0xff]
        %v302 = vld [vmem:[%s233 + $0xc8] sm:$0xff]
        %v303 = vld [vmem:[%s233 + $0xd0] sm:$0xff]
        %v304 = vld [vmem:[%s233 + $0xd8] sm:$0xff]
        %v305 = vld [vmem:[%s233 + $0xe0] sm:$0xff]
        %v306 = vld [vmem:[%s233 + $0xe8] sm:$0xff]
        %v307 = vld [vmem:[%s233 + $0xf0] sm:$0xff]
        %v308 = vld [vmem:[%s233 + $0xf8] sm:$0xff]
        %v309 = vadd.f32 %v277, %v278
        %310 = vadd.xlane.f32.xlu0 %v309
        %v311 = vpop.xlane.xlu0 %310
        %v312 = vadd.f32 %v279, %v280
        %313 = vadd.xlane.f32.xlu0 %v312
        %v314 = vpop.xlane.xlu0 %313
        %v315 = vadd.f32 %v281, %v282
        %316 = vadd.xlane.f32.xlu0 %v315
        %v317 = vpop.xlane.xlu0 %316
        %v318 = vadd.f32 %v283, %v284
        %319 = vadd.xlane.f32.xlu0 %v318
        %v320 = vpop.xlane.xlu0 %319
        %v321 = vadd.f32 %v285, %v286
        %322 = vadd.xlane.f32.xlu0 %v321
        %v323 = vpop.xlane.xlu0 %322
        %v324 = vadd.f32 %v287, %v288
        %325 = vadd.xlane.f32.xlu0 %v324
        %v326 = vpop.xlane.xlu0 %325
        %v327 = vadd.f32 %v289, %v290
        %328 = vadd.xlane.f32.xlu0 %v327
        %v329 = vpop.xlane.xlu0 %328
        %v330 = vadd.f32 %v291, %v292
        %331 = vadd.xlane.f32.xlu0 %v330
        %v332 = vpop.xlane.xlu0 %331
        %v333 = vadd.f32 %v293, %v294
        %334 = vadd.xlane.f32.xlu0 %v333
        %v335 = vpop.xlane.xlu0 %334
        %v336 = vadd.f32 %v295, %v296
        %337 = vadd.xlane.f32.xlu0 %v336
        %v338 = vpop.xlane.xlu0 %337
        %v339 = vadd.f32 %v297, %v298
        %340 = vadd.xlane.f32.xlu0 %v339
        %v341 = vpop.xlane.xlu0 %340
        %v342 = vadd.f32 %v299, %v300
        %343 = vadd.xlane.f32.xlu0 %v342
        %v344 = vpop.xlane.xlu0 %343
        %v345 = vadd.f32 %v301, %v302
        %346 = vadd.xlane.f32.xlu0 %v345
        %v347 = vpop.xlane.xlu0 %346
        %v348 = vadd.f32 %v303, %v304
        %349 = vadd.xlane.f32.xlu0 %v348
        %v350 = vpop.xlane.xlu0 %349
        %v351 = vadd.f32 %v305, %v306
        %352 = vadd.xlane.f32.xlu0 %v351
        %v353 = vpop.xlane.xlu0 %352
        %v354 = vadd.f32 %v307, %v308
        %355 = vadd.xlane.f32.xlu0 %v354
        %v356 = vpop.xlane.xlu0 %355
        %v357 = vrcp.pop 256.0
        %v358 = vmul.f32 %v311, %v357
        %v359 = vmul.f32 %v314, %v357
        %v360 = vmul.f32 %v317, %v357
        %v361 = vmul.f32 %v320, %v357
        %v362 = vmul.f32 %v323, %v357
        %v363 = vmul.f32 %v326, %v357
        %v364 = vmul.f32 %v329, %v357
        %v365 = vmul.f32 %v332, %v357
        %v366 = vmul.f32 %v335, %v357
        %v367 = vmul.f32 %v338, %v357
        %v368 = vmul.f32 %v341, %v357
        %v369 = vmul.f32 %v344, %v357
        %v370 = vmul.f32 %v347, %v357
        %v371 = vmul.f32 %v350, %v357
        %v372 = vmul.f32 %v353, %v357
        %v373 = vmul.f32 %v356, %v357
        %v374 = vsub.f32 %v277, %v358
        %v375 = vsub.f32 %v278, %v358
        %v376 = vsub.f32 %v279, %v359
        %v377 = vsub.f32 %v280, %v359
        %v378 = vsub.f32 %v281, %v360
        %v379 = vsub.f32 %v282, %v360
        %v380 = vsub.f32 %v283, %v361
        %v381 = vsub.f32 %v284, %v361
        %v382 = vsub.f32 %v285, %v362
        %v383 = vsub.f32 %v286, %v362
        %v384 = vsub.f32 %v287, %v363
        %v385 = vsub.f32 %v288, %v363
        %v386 = vsub.f32 %v289, %v364
        %v387 = vsub.f32 %v290, %v364
        %v388 = vsub.f32 %v291, %v365
        %v389 = vsub.f32 %v292, %v365
        %v390 = vsub.f32 %v293, %v366
        %v391 = vsub.f32 %v294, %v366
        %v392 = vsub.f32 %v295, %v367
        %v393 = vsub.f32 %v296, %v367
        %v394 = vsub.f32 %v297, %v368
        %v395 = vsub.f32 %v298, %v368
        %v396 = vsub.f32 %v299, %v369
        %v397 = vsub.f32 %v300, %v369
        %v398 = vsub.f32 %v301, %v370
        %v399 = vsub.f32 %v302, %v370
        %v400 = vsub.f32 %v303, %v371
        %v401 = vsub.f32 %v304, %v371
        %v402 = vsub.f32 %v305, %v372
        %v403 = vsub.f32 %v306, %v372
        %v404 = vsub.f32 %v307, %v373
        %v405 = vsub.f32 %v308, %v373
        %v406 = vmul.f32 %v374, %v374
        %v407 = vmul.f32 %v375, %v375
        %v408 = vmul.f32 %v376, %v376
        %v409 = vmul.f32 %v377, %v377
        %v410 = vmul.f32 %v378, %v378
        %v411 = vmul.f32 %v379, %v379
        %v412 = vmul.f32 %v380, %v380
        %v413 = vmul.f32 %v381, %v381
        %v414 = vmul.f32 %v382, %v382
        %v415 = vmul.f32 %v383, %v383
        %v416 = vmul.f32 %v384, %v384
        %v417 = vmul.f32 %v385, %v385
        %v418 = vmul.f32 %v386, %v386
        %v419 = vmul.f32 %v387, %v387
        %v420 = vmul.f32 %v388, %v388
        %v421 = vmul.f32 %v389, %v389
        %v422 = vmul.f32 %v390, %v390
        %v423 = vmul.f32 %v391, %v391
        %v424 = vmul.f32 %v392, %v392
        %v425 = vmul.f32 %v393, %v393
        %v426 = vmul.f32 %v394, %v394
        %v427 = vmul.f32 %v395, %v395
        %v428 = vmul.f32 %v396, %v396
        %v429 = vmul.f32 %v397, %v397
        %v430 = vmul.f32 %v398, %v398
        %v431 = vmul.f32 %v399, %v399
        %v432 = vmul.f32 %v400, %v400
        %v433 = vmul.f32 %v401, %v401
        %v434 = vmul.f32 %v402, %v402
        %v435 = vmul.f32 %v403, %v403
        %v436 = vmul.f32 %v404, %v404
        %v437 = vmul.f32 %v405, %v405
        %v438 = vadd.f32 %v406, %v407
        %439 = vadd.xlane.f32.xlu0 %v438
        %v440 = vpop.xlane.xlu0 %439
        %v441 = vadd.f32 %v408, %v409
        %442 = vadd.xlane.f32.xlu0 %v441
        %v443 = vpop.xlane.xlu0 %442
        %v444 = vadd.f32 %v410, %v411
        %445 = vadd.xlane.f32.xlu0 %v444
        %v446 = vpop.xlane.xlu0 %445
        %v447 = vadd.f32 %v412, %v413
        %448 = vadd.xlane.f32.xlu0 %v447
        %v449 = vpop.xlane.xlu0 %448
        %v450 = vadd.f32 %v414, %v415
        %451 = vadd.xlane.f32.xlu0 %v450
        %v452 = vpop.xlane.xlu0 %451
        %v453 = vadd.f32 %v416, %v417
        %454 = vadd.xlane.f32.xlu0 %v453
        %v455 = vpop.xlane.xlu0 %454
        %v456 = vadd.f32 %v418, %v419
        %457 = vadd.xlane.f32.xlu0 %v456
        %v458 = vpop.xlane.xlu0 %457
        %v459 = vadd.f32 %v420, %v421
        %460 = vadd.xlane.f32.xlu0 %v459
        %v461 = vpop.xlane.xlu0 %460
        %v462 = vadd.f32 %v422, %v423
        %463 = vadd.xlane.f32.xlu0 %v462
        %v464 = vpop.xlane.xlu0 %463
        %v465 = vadd.f32 %v424, %v425
        %466 = vadd.xlane.f32.xlu0 %v465
        %v467 = vpop.xlane.xlu0 %466
        %v468 = vadd.f32 %v426, %v427
        %469 = vadd.xlane.f32.xlu0 %v468
        %v470 = vpop.xlane.xlu0 %469
        %v471 = vadd.f32 %v428, %v429
        %472 = vadd.xlane.f32.xlu0 %v471
        %v473 = vpop.xlane.xlu0 %472
        %v474 = vadd.f32 %v430, %v431
        %475 = vadd.xlane.f32.xlu0 %v474
        %v476 = vpop.xlane.xlu0 %475
        %v477 = vadd.f32 %v432, %v433
        %478 = vadd.xlane.f32.xlu0 %v477
        %v479 = vpop.xlane.xlu0 %478
        %v480 = vadd.f32 %v434, %v435
        %481 = vadd.xlane.f32.xlu0 %v480
        %v482 = vpop.xlane.xlu0 %481
        %v483 = vadd.f32 %v436, %v437
        %484 = vadd.xlane.f32.xlu0 %v483
        %v485 = vpop.xlane.xlu0 %484
        %v486 = vmul.f32 %v440, %v357
        %v487 = vmul.f32 %v443, %v357
        %v488 = vmul.f32 %v446, %v357
        %v489 = vmul.f32 %v449, %v357
        %v490 = vmul.f32 %v452, %v357
        %v491 = vmul.f32 %v455, %v357
        %v492 = vmul.f32 %v458, %v357
        %v493 = vmul.f32 %v461, %v357
        %v494 = vmul.f32 %v464, %v357
        %v495 = vmul.f32 %v467, %v357
        %v496 = vmul.f32 %v470, %v357
        %v497 = vmul.f32 %v473, %v357
        %v498 = vmul.f32 %v476, %v357
        %v499 = vmul.f32 %v479, %v357
        %v500 = vmul.f32 %v482, %v357
        %v501 = vmul.f32 %v485, %v357
        %v502 = vadd.f32 %v486, 1e-05
        %v503 = vadd.f32 %v487, 1e-05
        %v504 = vadd.f32 %v488, 1e-05
        %v505 = vadd.f32 %v489, 1e-05
        %v506 = vadd.f32 %v490, 1e-05
        %v507 = vadd.f32 %v491, 1e-05
        %v508 = vadd.f32 %v492, 1e-05
        %v509 = vadd.f32 %v493, 1e-05
        %v510 = vadd.f32 %v494, 1e-05
        %v511 = vadd.f32 %v495, 1e-05
        %v512 = vadd.f32 %v496, 1e-05
        %v513 = vadd.f32 %v497, 1e-05
        %v514 = vadd.f32 %v498, 1e-05
        %v515 = vadd.f32 %v499, 1e-05
        %v516 = vadd.f32 %v500, 1e-05
        %v517 = vadd.f32 %v501, 1e-05
        %v518 = vrsqrt.pop %v502
        %v519 = vrsqrt.pop %v503
        %v520 = vrsqrt.pop %v504
        %v521 = vrsqrt.pop %v505
        %v522 = vrsqrt.pop %v506
        %v523 = vrsqrt.pop %v507
        %v524 = vrsqrt.pop %v508
        %v525 = vrsqrt.pop %v509
        %v526 = vrsqrt.pop %v510
        %v527 = vrsqrt.pop %v511
        %v528 = vrsqrt.pop %v512
        %v529 = vrsqrt.pop %v513
        %v530 = vrsqrt.pop %v514
        %v531 = vrsqrt.pop %v515
        %v532 = vrsqrt.pop %v516
        %v533 = vrsqrt.pop %v517
        %v534 = vmul.f32 %v374, %v518
        %v535 = vmul.f32 %v375, %v518
        %v536 = vmul.f32 %v376, %v519
        %v537 = vmul.f32 %v377, %v519
        %v538 = vmul.f32 %v378, %v520
        %v539 = vmul.f32 %v379, %v520
        %v540 = vmul.f32 %v380, %v521
        %v541 = vmul.f32 %v381, %v521
        %v542 = vmul.f32 %v382, %v522
        %v543 = vmul.f32 %v383, %v522
        %v544 = vmul.f32 %v384, %v523
        %v545 = vmul.f32 %v385, %v523
        %v546 = vmul.f32 %v386, %v524
        %v547 = vmul.f32 %v387, %v524
        %v548 = vmul.f32 %v388, %v525
        %v549 = vmul.f32 %v389, %v525
        %v550 = vmul.f32 %v390, %v526
        %v551 = vmul.f32 %v391, %v526
        %v552 = vmul.f32 %v392, %v527
        %v553 = vmul.f32 %v393, %v527
        %v554 = vmul.f32 %v394, %v528
        %v555 = vmul.f32 %v395, %v528
        %v556 = vmul.f32 %v396, %v529
        %v557 = vmul.f32 %v397, %v529
        %v558 = vmul.f32 %v398, %v530
        %v559 = vmul.f32 %v399, %v530
        %v560 = vmul.f32 %v400, %v531
        %v561 = vmul.f32 %v401, %v531
        %v562 = vmul.f32 %v402, %v532
        %v563 = vmul.f32 %v403, %v532
        %v564 = vmul.f32 %v404, %v533
        %v565 = vmul.f32 %v405, %v533
        %v566 = vld [vmem:[%s1] sm:$0x3]
        %v568 = vlaneseq
        %v569 = vshrl.u32 %v568, 7
        %v570 = vsub.s32 0, %v569
        %v571 = vrot.slane %v566, %v570
        %v572 = vlaneseq
        %v573 = vshrl.u32 %v572, 7
        %v574 = vsub.s32 1, %v573
        %v575 = vrot.slane %v566, %v574
        %v578 = vmul.f32 %v534, %v571
        %v579 = vmul.f32 %v535, %v575
        %v580 = vmul.f32 %v536, %v571
        %v581 = vmul.f32 %v537, %v575
        %v582 = vmul.f32 %v538, %v571
        %v583 = vmul.f32 %v539, %v575
        %v584 = vmul.f32 %v540, %v571
        %v585 = vmul.f32 %v541, %v575
        %v586 = vmul.f32 %v542, %v571
        %v587 = vmul.f32 %v543, %v575
        %v588 = vmul.f32 %v544, %v571
        %v589 = vmul.f32 %v545, %v575
        %v590 = vmul.f32 %v546, %v571
        %v591 = vmul.f32 %v547, %v575
        %v592 = vmul.f32 %v548, %v571
        %v593 = vmul.f32 %v549, %v575
        %v594 = vmul.f32 %v550, %v571
        %v595 = vmul.f32 %v551, %v575
        %v596 = vmul.f32 %v552, %v571
        %v597 = vmul.f32 %v553, %v575
        %v598 = vmul.f32 %v554, %v571
        %v599 = vmul.f32 %v555, %v575
        %v600 = vmul.f32 %v556, %v571
        %v601 = vmul.f32 %v557, %v575
        %v602 = vmul.f32 %v558, %v571
        %v603 = vmul.f32 %v559, %v575
        %v604 = vmul.f32 %v560, %v571
        %v605 = vmul.f32 %v561, %v575
        %v606 = vmul.f32 %v562, %v571
        %v607 = vmul.f32 %v563, %v575
        %v608 = vmul.f32 %v564, %v571
        %v609 = vmul.f32 %v565, %v575
        %v610 = vld [vmem:[#allocation4] sm:$0x3]
        %v612 = vlaneseq
        %v613 = vshrl.u32 %v612, 7
        %v614 = vsub.s32 0, %v613
        %v615 = vrot.slane %v610, %v614
        %v616 = vlaneseq
        %v617 = vshrl.u32 %v616, 7
        %v618 = vsub.s32 1, %v617
        %v619 = vrot.slane %v610, %v618
        %v622 = vadd.f32 %v578, %v615
        %v623 = vadd.f32 %v579, %v619
        %v624 = vadd.f32 %v580, %v615
        %v625 = vadd.f32 %v581, %v619
        %v626 = vadd.f32 %v582, %v615
        %v627 = vadd.f32 %v583, %v619
        %v628 = vadd.f32 %v584, %v615
        %v629 = vadd.f32 %v585, %v619
        %v630 = vadd.f32 %v586, %v615
        %v631 = vadd.f32 %v587, %v619
        %v632 = vadd.f32 %v588, %v615
        %v633 = vadd.f32 %v589, %v619
        %v634 = vadd.f32 %v590, %v615
        %v635 = vadd.f32 %v591, %v619
        %v636 = vadd.f32 %v592, %v615
        %v637 = vadd.f32 %v593, %v619
        %v638 = vadd.f32 %v594, %v615
        %v639 = vadd.f32 %v595, %v619
        %v640 = vadd.f32 %v596, %v615
        %v641 = vadd.f32 %v597, %v619
        %v642 = vadd.f32 %v598, %v615
        %v643 = vadd.f32 %v599, %v619
        %v644 = vadd.f32 %v600, %v615
        %v645 = vadd.f32 %v601, %v619
        %v646 = vadd.f32 %v602, %v615
        %v647 = vadd.f32 %v603, %v619
        %v648 = vadd.f32 %v604, %v615
        %v649 = vadd.f32 %v605, %v619
        %v650 = vadd.f32 %v606, %v615
        %v651 = vadd.f32 %v607, %v619
        %v652 = vadd.f32 %v608, %v615
        %v653 = vadd.f32 %v609, %v619
        %v654 = vpack.c.bf16 %v624, %v622
        %v655 = vpack.c.bf16 %v625, %v623
        %v656 = vpack.c.bf16 %v628, %v626
        %v657 = vpack.c.bf16 %v629, %v627
        %v658 = vpack.c.bf16 %v632, %v630
        %v659 = vpack.c.bf16 %v633, %v631
        %v660 = vpack.c.bf16 %v636, %v634
        %v661 = vpack.c.bf16 %v637, %v635
        %v662 = vpack.c.bf16 %v640, %v638
        %v663 = vpack.c.bf16 %v641, %v639
        %v664 = vpack.c.bf16 %v644, %v642
        %v665 = vpack.c.bf16 %v645, %v643
        %v666 = vpack.c.bf16 %v648, %v646
        %v667 = vpack.c.bf16 %v649, %v647
        %v668 = vpack.c.bf16 %v652, %v650
        %v669 = vpack.c.bf16 %v653, %v651
        %v670 = vld [vmem:[#allocation6] sm:$0xff]
        %v671 = vld [vmem:[#allocation6 + $0x8] sm:$0xff]
        %v672 = vld [vmem:[#allocation6 + $0x10] sm:$0xff]
        %v673 = vld [vmem:[#allocation6 + $0x18] sm:$0xff]
        %v674 = vld [vmem:[#allocation6 + $0x20] sm:$0xff]
        %v675 = vld [vmem:[#allocation6 + $0x28] sm:$0xff]
        %v676 = vld [vmem:[#allocation6 + $0x30] sm:$0xff]
        %v677 = vld [vmem:[#allocation6 + $0x38] sm:$0xff]
        %v678 = vld [vmem:[#allocation6 + $0x40] sm:$0xff]
        %v679 = vld [vmem:[#allocation6 + $0x48] sm:$0xff]
        %v680 = vld [vmem:[#allocation6 + $0x50] sm:$0xff]
        %v681 = vld [vmem:[#allocation6 + $0x58] sm:$0xff]
        %v682 = vld [vmem:[#allocation6 + $0x60] sm:$0xff]
        %v683 = vld [vmem:[#allocation6 + $0x68] sm:$0xff]
        %v684 = vld [vmem:[#allocation6 + $0x70] sm:$0xff]
        %v685 = vld [vmem:[#allocation6 + $0x78] sm:$0xff]
        %v686 = vld [vmem:[#allocation6 + $0x80] sm:$0xff]
        %v687 = vld [vmem:[#allocation6 + $0x88] sm:$0xff]
        %v688 = vld [vmem:[#allocation6 + $0x90] sm:$0xff]
        %v689 = vld [vmem:[#allocation6 + $0x98] sm:$0xff]
        %v690 = vld [vmem:[#allocation6 + $0xa0] sm:$0xff]
        %v691 = vld [vmem:[#allocation6 + $0xa8] sm:$0xff]
        %v692 = vld [vmem:[#allocation6 + $0xb0] sm:$0xff]
        %v693 = vld [vmem:[#allocation6 + $0xb8] sm:$0xff]
        %v694 = vld [vmem:[#allocation6 + $0xc0] sm:$0xff]
        %v695 = vld [vmem:[#allocation6 + $0xc8] sm:$0xff]
        %v696 = vld [vmem:[#allocation6 + $0xd0] sm:$0xff]
        %v697 = vld [vmem:[#allocation6 + $0xd8] sm:$0xff]
        %v698 = vld [vmem:[#allocation6 + $0xe0] sm:$0xff]
        %v699 = vld [vmem:[#allocation6 + $0xe8] sm:$0xff]
        %v700 = vld [vmem:[#allocation6 + $0xf0] sm:$0xff]
        %v701 = vld [vmem:[#allocation6 + $0xf8] sm:$0xff]
        %v702 = vld [vmem:[#allocation6 + $0x100] sm:$0xff]
        %v703 = vld [vmem:[#allocation6 + $0x108] sm:$0xff]
        %v704 = vld [vmem:[#allocation6 + $0x110] sm:$0xff]
        %v705 = vld [vmem:[#allocation6 + $0x118] sm:$0xff]
        %v706 = vld [vmem:[#allocation6 + $0x120] sm:$0xff]
        %v707 = vld [vmem:[#allocation6 + $0x128] sm:$0xff]
        %v708 = vld [vmem:[#allocation6 + $0x130] sm:$0xff]
        %v709 = vld [vmem:[#allocation6 + $0x138] sm:$0xff]
        %v710 = vld [vmem:[#allocation6 + $0x140] sm:$0xff]
        %v711 = vld [vmem:[#allocation6 + $0x148] sm:$0xff]
        %v712 = vld [vmem:[#allocation6 + $0x150] sm:$0xff]
        %v713 = vld [vmem:[#allocation6 + $0x158] sm:$0xff]
        %v714 = vld [vmem:[#allocation6 + $0x160] sm:$0xff]
        %v715 = vld [vmem:[#allocation6 + $0x168] sm:$0xff]
        %v716 = vld [vmem:[#allocation6 + $0x170] sm:$0xff]
        %v717 = vld [vmem:[#allocation6 + $0x178] sm:$0xff]
        %v718 = vld [vmem:[#allocation6 + $0x180] sm:$0xff]
        %v719 = vld [vmem:[#allocation6 + $0x188] sm:$0xff]
        %v720 = vld [vmem:[#allocation6 + $0x190] sm:$0xff]
        %v721 = vld [vmem:[#allocation6 + $0x198] sm:$0xff]
        %v722 = vld [vmem:[#allocation6 + $0x1a0] sm:$0xff]
        %v723 = vld [vmem:[#allocation6 + $0x1a8] sm:$0xff]
        %v724 = vld [vmem:[#allocation6 + $0x1b0] sm:$0xff]
        %v725 = vld [vmem:[#allocation6 + $0x1b8] sm:$0xff]
        %v726 = vld [vmem:[#allocation6 + $0x1c0] sm:$0xff]
        %v727 = vld [vmem:[#allocation6 + $0x1c8] sm:$0xff]
        %v728 = vld [vmem:[#allocation6 + $0x1d0] sm:$0xff]
        %v729 = vld [vmem:[#allocation6 + $0x1d8] sm:$0xff]
        %v730 = vld [vmem:[#allocation6 + $0x1e0] sm:$0xff]
        %v731 = vld [vmem:[#allocation6 + $0x1e8] sm:$0xff]
        %v732 = vld [vmem:[#allocation6 + $0x1f0] sm:$0xff]
        %v733 = vld [vmem:[#allocation6 + $0x1f8] sm:$0xff]
        %v734 = vld [vmem:[#allocation6 + $0x200] sm:$0xff]
        %v735 = vld [vmem:[#allocation6 + $0x208] sm:$0xff]
        %v736 = vld [vmem:[#allocation6 + $0x210] sm:$0xff]
        %v737 = vld [vmem:[#allocation6 + $0x218] sm:$0xff]
        %v738 = vld [vmem:[#allocation6 + $0x220] sm:$0xff]
        %v739 = vld [vmem:[#allocation6 + $0x228] sm:$0xff]
        %v740 = vld [vmem:[#allocation6 + $0x230] sm:$0xff]
        %v741 = vld [vmem:[#allocation6 + $0x238] sm:$0xff]
        %v742 = vld [vmem:[#allocation6 + $0x240] sm:$0xff]
        %v743 = vld [vmem:[#allocation6 + $0x248] sm:$0xff]
        %v744 = vld [vmem:[#allocation6 + $0x250] sm:$0xff]
        %v745 = vld [vmem:[#allocation6 + $0x258] sm:$0xff]
        %v746 = vld [vmem:[#allocation6 + $0x260] sm:$0xff]
        %v747 = vld [vmem:[#allocation6 + $0x268] sm:$0xff]
        %v748 = vld [vmem:[#allocation6 + $0x270] sm:$0xff]
        %v749 = vld [vmem:[#allocation6 + $0x278] sm:$0xff]
        %v750 = vld [vmem:[#allocation6 + $0x280] sm:$0xff]
        %v751 = vld [vmem:[#allocation6 + $0x288] sm:$0xff]
        %v752 = vld [vmem:[#allocation6 + $0x290] sm:$0xff]
        %v753 = vld [vmem:[#allocation6 + $0x298] sm:$0xff]
        %v754 = vld [vmem:[#allocation6 + $0x2a0] sm:$0xff]
        %v755 = vld [vmem:[#allocation6 + $0x2a8] sm:$0xff]
        %v756 = vld [vmem:[#allocation6 + $0x2b0] sm:$0xff]
        %v757 = vld [vmem:[#allocation6 + $0x2b8] sm:$0xff]
        %v758 = vld [vmem:[#allocation6 + $0x2c0] sm:$0xff]
        %v759 = vld [vmem:[#allocation6 + $0x2c8] sm:$0xff]
        %v760 = vld [vmem:[#allocation6 + $0x2d0] sm:$0xff]
        %v761 = vld [vmem:[#allocation6 + $0x2d8] sm:$0xff]
        %v762 = vld [vmem:[#allocation6 + $0x2e0] sm:$0xff]
        %v763 = vld [vmem:[#allocation6 + $0x2e8] sm:$0xff]
        %v764 = vld [vmem:[#allocation6 + $0x2f0] sm:$0xff]
        %v765 = vld [vmem:[#allocation6 + $0x2f8] sm:$0xff]
        %v766 = vld [vmem:[%s4] sm:$0x3f]
        %v768 = vlaneseq
        %v769 = vshrl.u32 %v768, 7
        %v770 = vsub.s32 0, %v769
        %v771 = vrot.slane %v766, %v770
        %v772 = vlaneseq
        %v773 = vshrl.u32 %v772, 7
        %v774 = vsub.s32 1, %v773
        %v775 = vrot.slane %v766, %v774
        %v776 = vlaneseq
        %v777 = vshrl.u32 %v776, 7
        %v778 = vsub.s32 2, %v777
        %v779 = vrot.slane %v766, %v778
        %v780 = vlaneseq
        %v781 = vshrl.u32 %v780, 7
        %v782 = vsub.s32 3, %v781
        %v783 = vrot.slane %v766, %v782
        %v784 = vlaneseq
        %v785 = vshrl.u32 %v784, 7
        %v786 = vsub.s32 4, %v785
        %v787 = vrot.slane %v766, %v786
        %v788 = vlaneseq
        %v789 = vshrl.u32 %v788, 7
        %v790 = vsub.s32 5, %v789
        %v791 = vrot.slane %v766, %v790
        %v894 = vunpack.c.l.b16 %v670
        %v895 = vunpack.c.h.b16 %v670
        %v896 = vunpack.c.l.b16 %v671
        %v897 = vunpack.c.h.b16 %v671
        %v898 = vunpack.c.l.b16 %v672
        %v899 = vunpack.c.h.b16 %v672
        %v900 = vunpack.c.l.b16 %v673
        %v901 = vunpack.c.h.b16 %v673
        %v902 = vunpack.c.l.b16 %v674
        %v903 = vunpack.c.h.b16 %v674
        %v904 = vunpack.c.l.b16 %v675
        %v905 = vunpack.c.h.b16 %v675
        %v906 = vunpack.c.l.b16 %v676
        %v907 = vunpack.c.h.b16 %v676
        %v908 = vunpack.c.l.b16 %v677
        %v909 = vunpack.c.h.b16 %v677
        %v910 = vunpack.c.l.b16 %v678
        %v911 = vunpack.c.h.b16 %v678
        %v912 = vunpack.c.l.b16 %v679
        %v913 = vunpack.c.h.b16 %v679
        %v914 = vunpack.c.l.b16 %v680
        %v915 = vunpack.c.h.b16 %v680
        %v916 = vunpack.c.l.b16 %v681
        %v917 = vunpack.c.h.b16 %v681
        %v918 = vunpack.c.l.b16 %v682
        %v919 = vunpack.c.h.b16 %v682
        %v920 = vunpack.c.l.b16 %v683
        %v921 = vunpack.c.h.b16 %v683
        %v922 = vunpack.c.l.b16 %v684
        %v923 = vunpack.c.h.b16 %v684
        %v924 = vunpack.c.l.b16 %v685
        %v925 = vunpack.c.h.b16 %v685
        %v926 = vunpack.c.l.b16 %v686
        %v927 = vunpack.c.h.b16 %v686
        %v928 = vunpack.c.l.b16 %v687
        %v929 = vunpack.c.h.b16 %v687
        %v930 = vunpack.c.l.b16 %v688
        %v931 = vunpack.c.h.b16 %v688
        %v932 = vunpack.c.l.b16 %v689
        %v933 = vunpack.c.h.b16 %v689
        %v934 = vunpack.c.l.b16 %v690
        %v935 = vunpack.c.h.b16 %v690
        %v936 = vunpack.c.l.b16 %v691
        %v937 = vunpack.c.h.b16 %v691
        %v938 = vunpack.c.l.b16 %v692
        %v939 = vunpack.c.h.b16 %v692
        %v940 = vunpack.c.l.b16 %v693
        %v941 = vunpack.c.h.b16 %v693
        %v942 = vunpack.c.l.b16 %v694
        %v943 = vunpack.c.h.b16 %v694
        %v944 = vunpack.c.l.b16 %v695
        %v945 = vunpack.c.h.b16 %v695
        %v946 = vunpack.c.l.b16 %v696
        %v947 = vunpack.c.h.b16 %v696
        %v948 = vunpack.c.l.b16 %v697
        %v949 = vunpack.c.h.b16 %v697
        %v950 = vunpack.c.l.b16 %v698
        %v951 = vunpack.c.h.b16 %v698
        %v952 = vunpack.c.l.b16 %v699
        %v953 = vunpack.c.h.b16 %v699
        %v954 = vunpack.c.l.b16 %v700
        %v955 = vunpack.c.h.b16 %v700
        %v956 = vunpack.c.l.b16 %v701
        %v957 = vunpack.c.h.b16 %v701
        %v958 = vunpack.c.l.b16 %v702
        %v959 = vunpack.c.h.b16 %v702
        %v960 = vunpack.c.l.b16 %v703
        %v961 = vunpack.c.h.b16 %v703
        %v962 = vunpack.c.l.b16 %v704
        %v963 = vunpack.c.h.b16 %v704
        %v964 = vunpack.c.l.b16 %v705
        %v965 = vunpack.c.h.b16 %v705
        %v966 = vunpack.c.l.b16 %v706
        %v967 = vunpack.c.h.b16 %v706
        %v968 = vunpack.c.l.b16 %v707
        %v969 = vunpack.c.h.b16 %v707
        %v970 = vunpack.c.l.b16 %v708
        %v971 = vunpack.c.h.b16 %v708
        %v972 = vunpack.c.l.b16 %v709
        %v973 = vunpack.c.h.b16 %v709
        %v974 = vunpack.c.l.b16 %v710
        %v975 = vunpack.c.h.b16 %v710
        %v976 = vunpack.c.l.b16 %v711
        %v977 = vunpack.c.h.b16 %v711
        %v978 = vunpack.c.l.b16 %v712
        %v979 = vunpack.c.h.b16 %v712
        %v980 = vunpack.c.l.b16 %v713
        %v981 = vunpack.c.h.b16 %v713
        %v982 = vunpack.c.l.b16 %v714
        %v983 = vunpack.c.h.b16 %v714
        %v984 = vunpack.c.l.b16 %v715
        %v985 = vunpack.c.h.b16 %v715
        %v986 = vunpack.c.l.b16 %v716
        %v987 = vunpack.c.h.b16 %v716
        %v988 = vunpack.c.l.b16 %v717
        %v989 = vunpack.c.h.b16 %v717
        %v990 = vunpack.c.l.b16 %v718
        %v991 = vunpack.c.h.b16 %v718
        %v992 = vunpack.c.l.b16 %v719
        %v993 = vunpack.c.h.b16 %v719
        %v994 = vunpack.c.l.b16 %v720
        %v995 = vunpack.c.h.b16 %v720
        %v996 = vunpack.c.l.b16 %v721
        %v997 = vunpack.c.h.b16 %v721
        %v998 = vunpack.c.l.b16 %v722
        %v999 = vunpack.c.h.b16 %v722
        %v1000 = vunpack.c.l.b16 %v723
        %v1001 = vunpack.c.h.b16 %v723
        %v1002 = vunpack.c.l.b16 %v724
        %v1003 = vunpack.c.h.b16 %v724
        %v1004 = vunpack.c.l.b16 %v725
        %v1005 = vunpack.c.h.b16 %v725
        %v1006 = vunpack.c.l.b16 %v726
        %v1007 = vunpack.c.h.b16 %v726
        %v1008 = vunpack.c.l.b16 %v727
        %v1009 = vunpack.c.h.b16 %v727
        %v1010 = vunpack.c.l.b16 %v728
        %v1011 = vunpack.c.h.b16 %v728
        %v1012 = vunpack.c.l.b16 %v729
        %v1013 = vunpack.c.h.b16 %v729
        %v1014 = vunpack.c.l.b16 %v730
        %v1015 = vunpack.c.h.b16 %v730
        %v1016 = vunpack.c.l.b16 %v731
        %v1017 = vunpack.c.h.b16 %v731
        %v1018 = vunpack.c.l.b16 %v732
        %v1019 = vunpack.c.h.b16 %v732
        %v1020 = vunpack.c.l.b16 %v733
        %v1021 = vunpack.c.h.b16 %v733
        %v1022 = vunpack.c.l.b16 %v734
        %v1023 = vunpack.c.h.b16 %v734
        %v1024 = vunpack.c.l.b16 %v735
        %v1025 = vunpack.c.h.b16 %v735
        %v1026 = vunpack.c.l.b16 %v736
        %v1027 = vunpack.c.h.b16 %v736
        %v1028 = vunpack.c.l.b16 %v737
        %v1029 = vunpack.c.h.b16 %v737
        %v1030 = vunpack.c.l.b16 %v738
        %v1031 = vunpack.c.h.b16 %v738
        %v1032 = vunpack.c.l.b16 %v739
        %v1033 = vunpack.c.h.b16 %v739
        %v1034 = vunpack.c.l.b16 %v740
        %v1035 = vunpack.c.h.b16 %v740
        %v1036 = vunpack.c.l.b16 %v741
        %v1037 = vunpack.c.h.b16 %v741
        %v1038 = vunpack.c.l.b16 %v742
        %v1039 = vunpack.c.h.b16 %v742
        %v1040 = vunpack.c.l.b16 %v743
        %v1041 = vunpack.c.h.b16 %v743
        %v1042 = vunpack.c.l.b16 %v744
        %v1043 = vunpack.c.h.b16 %v744
        %v1044 = vunpack.c.l.b16 %v745
        %v1045 = vunpack.c.h.b16 %v745
        %v1046 = vunpack.c.l.b16 %v746
        %v1047 = vunpack.c.h.b16 %v746
        %v1048 = vunpack.c.l.b16 %v747
        %v1049 = vunpack.c.h.b16 %v747
        %v1050 = vunpack.c.l.b16 %v748
        %v1051 = vunpack.c.h.b16 %v748
        %v1052 = vunpack.c.l.b16 %v749
        %v1053 = vunpack.c.h.b16 %v749
        %v1054 = vunpack.c.l.b16 %v750
        %v1055 = vunpack.c.h.b16 %v750
        %v1056 = vunpack.c.l.b16 %v751
        %v1057 = vunpack.c.h.b16 %v751
        %v1058 = vunpack.c.l.b16 %v752
        %v1059 = vunpack.c.h.b16 %v752
        %v1060 = vunpack.c.l.b16 %v753
        %v1061 = vunpack.c.h.b16 %v753
        %v1062 = vunpack.c.l.b16 %v754
        %v1063 = vunpack.c.h.b16 %v754
        %v1064 = vunpack.c.l.b16 %v755
        %v1065 = vunpack.c.h.b16 %v755
        %v1066 = vunpack.c.l.b16 %v756
        %v1067 = vunpack.c.h.b16 %v756
        %v1068 = vunpack.c.l.b16 %v757
        %v1069 = vunpack.c.h.b16 %v757
        %v1070 = vunpack.c.l.b16 %v758
        %v1071 = vunpack.c.h.b16 %v758
        %v1072 = vunpack.c.l.b16 %v759
        %v1073 = vunpack.c.h.b16 %v759
        %v1074 = vunpack.c.l.b16 %v760
        %v1075 = vunpack.c.h.b16 %v760
        %v1076 = vunpack.c.l.b16 %v761
        %v1077 = vunpack.c.h.b16 %v761
        %v1078 = vunpack.c.l.b16 %v762
        %v1079 = vunpack.c.h.b16 %v762
        %v1080 = vunpack.c.l.b16 %v763
        %v1081 = vunpack.c.h.b16 %v763
        %v1082 = vunpack.c.l.b16 %v764
        %v1083 = vunpack.c.h.b16 %v764
        %v1084 = vunpack.c.l.b16 %v765
        %v1085 = vunpack.c.h.b16 %v765
        %v1086 = vpack.c.b16 %v900, %v894
        %v1087 = vpack.c.b16 %v901, %v895
        %v1088 = vpack.c.b16 %v902, %v896
        %v1089 = vpack.c.b16 %v903, %v897
        %v1090 = vpack.c.b16 %v904, %v898
        %v1091 = vpack.c.b16 %v905, %v899
        %v1092 = vpack.c.b16 %v912, %v906
        %v1093 = vpack.c.b16 %v913, %v907
        %v1094 = vpack.c.b16 %v914, %v908
        %v1095 = vpack.c.b16 %v915, %v909
        %v1096 = vpack.c.b16 %v916, %v910
        %v1097 = vpack.c.b16 %v917, %v911
        %v1098 = vpack.c.b16 %v924, %v918
        %v1099 = vpack.c.b16 %v925, %v919
        %v1100 = vpack.c.b16 %v926, %v920
        %v1101 = vpack.c.b16 %v927, %v921
        %v1102 = vpack.c.b16 %v928, %v922
        %v1103 = vpack.c.b16 %v929, %v923
        %v1104 = vpack.c.b16 %v936, %v930
        %v1105 = vpack.c.b16 %v937, %v931
        %v1106 = vpack.c.b16 %v938, %v932
        %v1107 = vpack.c.b16 %v939, %v933
        %v1108 = vpack.c.b16 %v940, %v934
        %v1109 = vpack.c.b16 %v941, %v935
        %v1110 = vpack.c.b16 %v948, %v942
        %v1111 = vpack.c.b16 %v949, %v943
        %v1112 = vpack.c.b16 %v950, %v944
        %v1113 = vpack.c.b16 %v951, %v945
        %v1114 = vpack.c.b16 %v952, %v946
        %v1115 = vpack.c.b16 %v953, %v947
        %v1116 = vpack.c.b16 %v960, %v954
        %v1117 = vpack.c.b16 %v961, %v955
        %v1118 = vpack.c.b16 %v962, %v956
        %v1119 = vpack.c.b16 %v963, %v957
        %v1120 = vpack.c.b16 %v964, %v958
        %v1121 = vpack.c.b16 %v965, %v959
        %v1122 = vpack.c.b16 %v972, %v966
        %v1123 = vpack.c.b16 %v973, %v967
        %v1124 = vpack.c.b16 %v974, %v968
        %v1125 = vpack.c.b16 %v975, %v969
        %v1126 = vpack.c.b16 %v976, %v970
        %v1127 = vpack.c.b16 %v977, %v971
        %v1128 = vpack.c.b16 %v984, %v978
        %v1129 = vpack.c.b16 %v985, %v979
        %v1130 = vpack.c.b16 %v986, %v980
        %v1131 = vpack.c.b16 %v987, %v981
        %v1132 = vpack.c.b16 %v988, %v982
        %v1133 = vpack.c.b16 %v989, %v983
        %v1134 = vpack.c.b16 %v996, %v990
        %v1135 = vpack.c.b16 %v997, %v991
        %v1136 = vpack.c.b16 %v998, %v992
        %v1137 = vpack.c.b16 %v999, %v993
        %v1138 = vpack.c.b16 %v1000, %v994
        %v1139 = vpack.c.b16 %v1001, %v995
        %v1140 = vpack.c.b16 %v1008, %v1002
        %v1141 = vpack.c.b16 %v1009, %v1003
        %v1142 = vpack.c.b16 %v1010, %v1004
        %v1143 = vpack.c.b16 %v1011, %v1005
        %v1144 = vpack.c.b16 %v1012, %v1006
        %v1145 = vpack.c.b16 %v1013, %v1007
        %v1146 = vpack.c.b16 %v1020, %v1014
        %v1147 = vpack.c.b16 %v1021, %v1015
        %v1148 = vpack.c.b16 %v1022, %v1016
        %v1149 = vpack.c.b16 %v1023, %v1017
        %v1150 = vpack.c.b16 %v1024, %v1018
        %v1151 = vpack.c.b16 %v1025, %v1019
        %v1152 = vpack.c.b16 %v1032, %v1026
        %v1153 = vpack.c.b16 %v1033, %v1027
        %v1154 = vpack.c.b16 %v1034, %v1028
        %v1155 = vpack.c.b16 %v1035, %v1029
        %v1156 = vpack.c.b16 %v1036, %v1030
        %v1157 = vpack.c.b16 %v1037, %v1031
        %v1158 = vpack.c.b16 %v1044, %v1038
        %v1159 = vpack.c.b16 %v1045, %v1039
        %v1160 = vpack.c.b16 %v1046, %v1040
        %v1161 = vpack.c.b16 %v1047, %v1041
        %v1162 = vpack.c.b16 %v1048, %v1042
        %v1163 = vpack.c.b16 %v1049, %v1043
        %v1164 = vpack.c.b16 %v1056, %v1050
        %v1165 = vpack.c.b16 %v1057, %v1051
        %v1166 = vpack.c.b16 %v1058, %v1052
        %v1167 = vpack.c.b16 %v1059, %v1053
        %v1168 = vpack.c.b16 %v1060, %v1054
        %v1169 = vpack.c.b16 %v1061, %v1055
        %v1170 = vpack.c.b16 %v1068, %v1062
        %v1171 = vpack.c.b16 %v1069, %v1063
        %v1172 = vpack.c.b16 %v1070, %v1064
        %v1173 = vpack.c.b16 %v1071, %v1065
        %v1174 = vpack.c.b16 %v1072, %v1066
        %v1175 = vpack.c.b16 %v1073, %v1067
        %v1176 = vpack.c.b16 %v1080, %v1074
        %v1177 = vpack.c.b16 %v1081, %v1075
        %v1178 = vpack.c.b16 %v1082, %v1076
        %v1179 = vpack.c.b16 %v1083, %v1077
        %v1180 = vpack.c.b16 %v1084, %v1078
        %v1181 = vpack.c.b16 %v1085, %v1079
        %1278 = vmatprep.subr.bf16.mxu0 %v1087
        %1279 = vmatpush1.bf16.msra.mxu0 %v1086
        %1280 = vmatprep.subr.bf16.mxu0 %v1093
        %1281 = vmatpush1.bf16.msra.mxu0 %v1092
        %1282 = vmatprep.subr.bf16.mxu0 %v1099
        %1283 = vmatpush1.bf16.msra.mxu0 %v1098
        %1284 = vmatprep.subr.bf16.mxu0 %v1105
        %1285 = vmatpush1.bf16.msra.mxu0 %v1104
        %1286 = vmatprep.subr.bf16.mxu0 %v1111
        %1287 = vmatpush1.bf16.msra.mxu0 %v1110
        %1288 = vmatprep.subr.bf16.mxu0 %v1117
        %1289 = vmatpush1.bf16.msra.mxu0 %v1116
        %1290 = vmatprep.subr.bf16.mxu0 %v1123
        %1291 = vmatpush1.bf16.msra.mxu0 %v1122
        %1292 = vmatprep.subr.bf16.mxu0 %v1129
        %1293 = vmatpush1.bf16.msra.mxu0 %v1128
        %1294 = vmatprep.subr.bf16.mxu0 %v1135
        %1295 = vmatpush1.bf16.msra.mxu0 %v1134
        %1296 = vmatprep.subr.bf16.mxu0 %v1141
        %1297 = vmatpush1.bf16.msra.mxu0 %v1140
        %1298 = vmatprep.subr.bf16.mxu0 %v1147
        %1299 = vmatpush1.bf16.msra.mxu0 %v1146
        %1300 = vmatprep.subr.bf16.mxu0 %v1153
        %1301 = vmatpush1.bf16.msra.mxu0 %v1152
        %1302 = vmatprep.subr.bf16.mxu0 %v1159
        %1303 = vmatpush1.bf16.msra.mxu0 %v1158
        %1304 = vmatprep.subr.bf16.mxu0 %v1165
        %1305 = vmatpush1.bf16.msra.mxu0 %v1164
        %1306 = vmatprep.subr.bf16.mxu0 %v1171
        %1307 = vmatpush1.bf16.msra.mxu0 %v1170
        %1308 = vmatprep.subr.bf16.mxu0 %v1177
        %1309 = vmatpush1.bf16.msra.mxu0 %v1176
        %1310 = vmatprep.mubr.bf16.mxu0 %v655
        %1311 = vmatmul.mubr.bf16.gmra.mrb[0].mxu0 %v654
        %v1312 = vpop.f32.mrb[0].mxu0
        %v1313 = vadd.f32 %v771, %v1312
        %v1314 = vpop.f32.mrb[0].mxu0
        %v1315 = vadd.f32 %v775, %v1314
        %v1316 = vpop.f32.mrb[0].mxu0
        %v1317 = vadd.f32 %v771, %v1316
        %v1318 = vpop.f32.mrb[0].mxu0
        %v1319 = vadd.f32 %v775, %v1318
        %1320 = vmatprep.mubr.bf16.mxu0 %v657
        %1321 = vmatmul.mubr.bf16.gmra.mrb[0].mxu0 %v656
        %v1322 = vpop.f32.mrb[0].mxu0
        %v1323 = vadd.f32 %v771, %v1322
        %v1324 = vpop.f32.mrb[0].mxu0
        %v1325 = vadd.f32 %v775, %v1324
        %v1326 = vpop.f32.mrb[0].mxu0
        %v1327 = vadd.f32 %v771, %v1326
        %v1328 = vpop.f32.mrb[0].mxu0
        %v1329 = vadd.f32 %v775, %v1328
        %1330 = vmatprep.mubr.bf16.mxu0 %v659
        %1331 = vmatmul.mubr.bf16.gmra.mrb[0].mxu0 %v658
        %v1332 = vpop.f32.mrb[0].mxu0
        %v1333 = vadd.f32 %v771, %v1332
        %v1334 = vpop.f32.mrb[0].mxu0
        %v1335 = vadd.f32 %v775, %v1334
        %v1336 = vpop.f32.mrb[0].mxu0
        %v1337 = vadd.f32 %v771, %v1336
        %v1338 = vpop.f32.mrb[0].mxu0
        %v1339 = vadd.f32 %v775, %v1338
        %1340 = vmatprep.mubr.bf16.mxu0 %v661
        %1341 = vmatmul.mubr.bf16.gmra.mrb[0].mxu0 %v660
        %v1342 = vpop.f32.mrb[0].mxu0
        %v1343 = vadd.f32 %v771, %v1342
        %v1344 = vpop.f32.mrb[0].mxu0
        %v1345 = vadd.f32 %v775, %v1344
        %v1346 = vpop.f32.mrb[0].mxu0
        %v1347 = vadd.f32 %v771, %v1346
        %v1348 = vpop.f32.mrb[0].mxu0
        %v1349 = vadd.f32 %v775, %v1348
        %1350 = vmatprep.mubr.bf16.mxu0 %v663
        %1351 = vmatmul.mubr.bf16.gmra.mrb[0].mxu0 %v662
        %v1352 = vpop.f32.mrb[0].mxu0
        %v1353 = vadd.f32 %v771, %v1352
        %v1354 = vpop.f32.mrb[0].mxu0
        %v1355 = vadd.f32 %v775, %v1354
        %v1356 = vpop.f32.mrb[0].mxu0
        %v1357 = vadd.f32 %v771, %v1356
        %v1358 = vpop.f32.mrb[0].mxu0
        %v1359 = vadd.f32 %v775, %v1358
        %1360 = vmatprep.mubr.bf16.mxu0 %v665
        %1361 = vmatmul.mubr.bf16.gmra.mrb[0].mxu0 %v664
        %v1362 = vpop.f32.mrb[0].mxu0
        %v1363 = vadd.f32 %v771, %v1362
        %v1364 = vpop.f32.mrb[0].mxu0
        %v1365 = vadd.f32 %v775, %v1364
        %v1366 = vpop.f32.mrb[0].mxu0
        %v1367 = vadd.f32 %v771, %v1366
        %v1368 = vpop.f32.mrb[0].mxu0
        %v1369 = vadd.f32 %v775, %v1368
        %1370 = vmatprep.mubr.bf16.mxu0 %v667
        %1371 = vmatmul.mubr.bf16.gmra.mrb[0].mxu0 %v666
        %v1372 = vpop.f32.mrb[0].mxu0
        %v1373 = vadd.f32 %v771, %v1372
        %v1374 = vpop.f32.mrb[0].mxu0
        %v1375 = vadd.f32 %v775, %v1374
        %v1376 = vpop.f32.mrb[0].mxu0
        %v1377 = vadd.f32 %v771, %v1376
        %v1378 = vpop.f32.mrb[0].mxu0
        %v1379 = vadd.f32 %v775, %v1378
        %1380 = vmatprep.mubr.bf16.mxu0 %v669
        %1381 = vmatmul.mubr.bf16.gmra.mrb[0].mxu0 %v668
        %v1382 = vpop.f32.mrb[0].mxu0
        %v1383 = vadd.f32 %v771, %v1382
        %v1384 = vpop.f32.mrb[0].mxu0
        %v1385 = vadd.f32 %v775, %v1384
        %v1386 = vpop.f32.mrb[0].mxu0
        %v1387 = vadd.f32 %v771, %v1386
        %v1388 = vpop.f32.mrb[0].mxu0
        %v1389 = vadd.f32 %v775, %v1388
        %1390 = vdwg.mxu0
        %1391 = vmatprep.subr.bf16.mxu0 %v1089
        %1392 = vmatpush1.bf16.msra.mxu0 %v1088
        %1393 = vmatprep.subr.bf16.mxu0 %v1095
        %1394 = vmatpush1.bf16.msra.mxu0 %v1094
        %1395 = vmatprep.subr.bf16.mxu0 %v1101
        %1396 = vmatpush1.bf16.msra.mxu0 %v1100
        %1397 = vmatprep.subr.bf16.mxu0 %v1107
        %1398 = vmatpush1.bf16.msra.mxu0 %v1106
        %1399 = vmatprep.subr.bf16.mxu0 %v1113
        %1400 = vmatpush1.bf16.msra.mxu0 %v1112
        %1401 = vmatprep.subr.bf16.mxu0 %v1119
        %1402 = vmatpush1.bf16.msra.mxu0 %v1118
        %1403 = vmatprep.subr.bf16.mxu0 %v1125
        %1404 = vmatpush1.bf16.msra.mxu0 %v1124
        %1405 = vmatprep.subr.bf16.mxu0 %v1131
        %1406 = vmatpush1.bf16.msra.mxu0 %v1130
        %1407 = vmatprep.subr.bf16.mxu0 %v1137
        %1408 = vmatpush1.bf16.msra.mxu0 %v1136
        %1409 = vmatprep.subr.bf16.mxu0 %v1143
        %1410 = vmatpush1.bf16.msra.mxu0 %v1142
        %1411 = vmatprep.subr.bf16.mxu0 %v1149
        %1412 = vmatpush1.bf16.msra.mxu0 %v1148
        %1413 = vmatprep.subr.bf16.mxu0 %v1155
        %1414 = vmatpush1.bf16.msra.mxu0 %v1154
        %1415 = vmatprep.subr.bf16.mxu0 %v1161
        %1416 = vmatpush1.bf16.msra.mxu0 %v1160
        %1417 = vmatprep.subr.bf16.mxu0 %v1167
        %1418 = vmatpush1.bf16.msra.mxu0 %v1166
        %1419 = vmatprep.subr.bf16.mxu0 %v1173
        %1420 = vmatpush1.bf16.msra.mxu0 %v1172
        %1421 = vmatprep.subr.bf16.mxu0 %v1179
        %1422 = vmatpush1.bf16.msra.mxu0 %v1178
        %1423 = vmatprep.mubr.bf16.mxu0 %v655
        %1424 = vmatmul.mubr.bf16.gmra.mrb[0].mxu0 %v654
        %v1425 = vpop.f32.mrb[0].mxu0
        %v1426 = vadd.f32 %v779, %v1425
        %v1427 = vpop.f32.mrb[0].mxu0
        %v1428 = vadd.f32 %v783, %v1427
        %v1429 = vpop.f32.mrb[0].mxu0
        %v1430 = vadd.f32 %v779, %v1429
        %v1431 = vpop.f32.mrb[0].mxu0
        %v1432 = vadd.f32 %v783, %v1431
        %1433 = vmatprep.mubr.bf16.mxu0 %v657
        %1434 = vmatmul.mubr.bf16.gmra.mrb[0].mxu0 %v656
        %v1435 = vpop.f32.mrb[0].mxu0
        %v1436 = vadd.f32 %v779, %v1435
        %v1437 = vpop.f32.mrb[0].mxu0
        %v1438 = vadd.f32 %v783, %v1437
        %v1439 = vpop.f32.mrb[0].mxu0
        %v1440 = vadd.f32 %v779, %v1439
        %v1441 = vpop.f32.mrb[0].mxu0
        %v1442 = vadd.f32 %v783, %v1441
        %1443 = vmatprep.mubr.bf16.mxu0 %v659
        %1444 = vmatmul.mubr.bf16.gmra.mrb[0].mxu0 %v658
        %v1445 = vpop.f32.mrb[0].mxu0
        %v1446 = vadd.f32 %v779, %v1445
        %v1447 = vpop.f32.mrb[0].mxu0
        %v1448 = vadd.f32 %v783, %v1447
        %v1449 = vpop.f32.mrb[0].mxu0
        %v1450 = vadd.f32 %v779, %v1449
        %v1451 = vpop.f32.mrb[0].mxu0
        %v1452 = vadd.f32 %v783, %v1451
        %1453 = vmatprep.mubr.bf16.mxu0 %v661
        %1454 = vmatmul.mubr.bf16.gmra.mrb[0].mxu0 %v660
        %v1455 = vpop.f32.mrb[0].mxu0
        %v1456 = vadd.f32 %v779, %v1455
        %v1457 = vpop.f32.mrb[0].mxu0
        %v1458 = vadd.f32 %v783, %v1457
        %v1459 = vpop.f32.mrb[0].mxu0
        %v1460 = vadd.f32 %v779, %v1459
        %v1461 = vpop.f32.mrb[0].mxu0
        %v1462 = vadd.f32 %v783, %v1461
        %1463 = vmatprep.mubr.bf16.mxu0 %v663
        %1464 = vmatmul.mubr.bf16.gmra.mrb[0].mxu0 %v662
        %v1465 = vpop.f32.mrb[0].mxu0
        %v1466 = vadd.f32 %v779, %v1465
        %v1467 = vpop.f32.mrb[0].mxu0
        %v1468 = vadd.f32 %v783, %v1467
        %v1469 = vpop.f32.mrb[0].mxu0
        %v1470 = vadd.f32 %v779, %v1469
        %v1471 = vpop.f32.mrb[0].mxu0
        %v1472 = vadd.f32 %v783, %v1471
        %1473 = vmatprep.mubr.bf16.mxu0 %v665
        %1474 = vmatmul.mubr.bf16.gmra.mrb[0].mxu0 %v664
        %v1475 = vpop.f32.mrb[0].mxu0
        %v1476 = vadd.f32 %v779, %v1475
        %v1477 = vpop.f32.mrb[0].mxu0
        %v1478 = vadd.f32 %v783, %v1477
        %v1479 = vpop.f32.mrb[0].mxu0
        %v1480 = vadd.f32 %v779, %v1479
        %v1481 = vpop.f32.mrb[0].mxu0
        %v1482 = vadd.f32 %v783, %v1481
        %1483 = vmatprep.mubr.bf16.mxu0 %v667
        %1484 = vmatmul.mubr.bf16.gmra.mrb[0].mxu0 %v666
        %v1485 = vpop.f32.mrb[0].mxu0
        %v1486 = vadd.f32 %v779, %v1485
        %v1487 = vpop.f32.mrb[0].mxu0
        %v1488 = vadd.f32 %v783, %v1487
        %v1489 = vpop.f32.mrb[0].mxu0
        %v1490 = vadd.f32 %v779, %v1489
        %v1491 = vpop.f32.mrb[0].mxu0
        %v1492 = vadd.f32 %v783, %v1491
        %1493 = vmatprep.mubr.bf16.mxu0 %v669
        %1494 = vmatmul.mubr.bf16.gmra.mrb[0].mxu0 %v668
        %v1495 = vpop.f32.mrb[0].mxu0
        %v1496 = vadd.f32 %v779, %v1495
        %v1497 = vpop.f32.mrb[0].mxu0
        %v1498 = vadd.f32 %v783, %v1497
        %v1499 = vpop.f32.mrb[0].mxu0
        %v1500 = vadd.f32 %v779, %v1499
        %v1501 = vpop.f32.mrb[0].mxu0
        %v1502 = vadd.f32 %v783, %v1501
        %1503 = vdwg.mxu0
        %1504 = vmatprep.subr.bf16.mxu0 %v1091
        %1505 = vmatpush1.bf16.msra.mxu0 %v1090
        %1506 = vmatprep.subr.bf16.mxu0 %v1097
        %1507 = vmatpush1.bf16.msra.mxu0 %v1096
        %1508 = vmatprep.subr.bf16.mxu0 %v1103
        %1509 = vmatpush1.bf16.msra.mxu0 %v1102
        %1510 = vmatprep.subr.bf16.mxu0 %v1109
        %1511 = vmatpush1.bf16.msra.mxu0 %v1108
        %1512 = vmatprep.subr.bf16.mxu0 %v1115
        %1513 = vmatpush1.bf16.msra.mxu0 %v1114
        %1514 = vmatprep.subr.bf16.mxu0 %v1121
        %1515 = vmatpush1.bf16.msra.mxu0 %v1120
        %1516 = vmatprep.subr.bf16.mxu0 %v1127
        %1517 = vmatpush1.bf16.msra.mxu0 %v1126
        %1518 = vmatprep.subr.bf16.mxu0 %v1133
        %1519 = vmatpush1.bf16.msra.mxu0 %v1132
        %1520 = vmatprep.subr.bf16.mxu0 %v1139
        %1521 = vmatpush1.bf16.msra.mxu0 %v1138
        %1522 = vmatprep.subr.bf16.mxu0 %v1145
        %1523 = vmatpush1.bf16.msra.mxu0 %v1144
        %1524 = vmatprep.subr.bf16.mxu0 %v1151
        %1525 = vmatpush1.bf16.msra.mxu0 %v1150
        %1526 = vmatprep.subr.bf16.mxu0 %v1157
        %1527 = vmatpush1.bf16.msra.mxu0 %v1156
        %1528 = vmatprep.subr.bf16.mxu0 %v1163
        %1529 = vmatpush1.bf16.msra.mxu0 %v1162
        %1530 = vmatprep.subr.bf16.mxu0 %v1169
        %1531 = vmatpush1.bf16.msra.mxu0 %v1168
        %1532 = vmatprep.subr.bf16.mxu0 %v1175
        %1533 = vmatpush1.bf16.msra.mxu0 %v1174
        %1534 = vmatprep.subr.bf16.mxu0 %v1181
        %1535 = vmatpush1.bf16.msra.mxu0 %v1180
        %1536 = vmatprep.mubr.bf16.mxu0 %v655
        %1537 = vmatmul.mubr.bf16.gmra.mrb[0].mxu0 %v654
        %v1538 = vpop.f32.mrb[0].mxu0
        %v1539 = vadd.f32 %v787, %v1538
        %v1540 = vpop.f32.mrb[0].mxu0
        %v1541 = vadd.f32 %v791, %v1540
        %v1542 = vpop.f32.mrb[0].mxu0
        %v1543 = vadd.f32 %v787, %v1542
        %v1544 = vpop.f32.mrb[0].mxu0
        %v1545 = vadd.f32 %v791, %v1544
        %1546 = vmatprep.mubr.bf16.mxu0 %v657
        %1547 = vmatmul.mubr.bf16.gmra.mrb[0].mxu0 %v656
        %v1548 = vpop.f32.mrb[0].mxu0
        %v1549 = vadd.f32 %v787, %v1548
        %v1550 = vpop.f32.mrb[0].mxu0
        %v1551 = vadd.f32 %v791, %v1550
        %v1552 = vpop.f32.mrb[0].mxu0
        %v1553 = vadd.f32 %v787, %v1552
        %v1554 = vpop.f32.mrb[0].mxu0
        %v1555 = vadd.f32 %v791, %v1554
        %1556 = vmatprep.mubr.bf16.mxu0 %v659
        %1557 = vmatmul.mubr.bf16.gmra.mrb[0].mxu0 %v658
        %v1558 = vpop.f32.mrb[0].mxu0
        %v1559 = vadd.f32 %v787, %v1558
        %v1560 = vpop.f32.mrb[0].mxu0
        %v1561 = vadd.f32 %v791, %v1560
        %v1562 = vpop.f32.mrb[0].mxu0
        %v1563 = vadd.f32 %v787, %v1562
        %v1564 = vpop.f32.mrb[0].mxu0
        %v1565 = vadd.f32 %v791, %v1564
        %1566 = vmatprep.mubr.bf16.mxu0 %v661
        %1567 = vmatmul.mubr.bf16.gmra.mrb[0].mxu0 %v660
        %v1568 = vpop.f32.mrb[0].mxu0
        %v1569 = vadd.f32 %v787, %v1568
        %v1570 = vpop.f32.mrb[0].mxu0
        %v1571 = vadd.f32 %v791, %v1570
        %v1572 = vpop.f32.mrb[0].mxu0
        %v1573 = vadd.f32 %v787, %v1572
        %v1574 = vpop.f32.mrb[0].mxu0
        %v1575 = vadd.f32 %v791, %v1574
        %1576 = vmatprep.mubr.bf16.mxu0 %v663
        %1577 = vmatmul.mubr.bf16.gmra.mrb[0].mxu0 %v662
        %v1578 = vpop.f32.mrb[0].mxu0
        %v1579 = vadd.f32 %v787, %v1578
        %v1580 = vpop.f32.mrb[0].mxu0
        %v1581 = vadd.f32 %v791, %v1580
        %v1582 = vpop.f32.mrb[0].mxu0
        %v1583 = vadd.f32 %v787, %v1582
        %v1584 = vpop.f32.mrb[0].mxu0
        %v1585 = vadd.f32 %v791, %v1584
        %1586 = vmatprep.mubr.bf16.mxu0 %v665
        %1587 = vmatmul.mubr.bf16.gmra.mrb[0].mxu0 %v664
        %v1588 = vpop.f32.mrb[0].mxu0
        %v1589 = vadd.f32 %v787, %v1588
        %v1590 = vpop.f32.mrb[0].mxu0
        %v1591 = vadd.f32 %v791, %v1590
        %v1592 = vpop.f32.mrb[0].mxu0
        %v1593 = vadd.f32 %v787, %v1592
        %v1594 = vpop.f32.mrb[0].mxu0
        %v1595 = vadd.f32 %v791, %v1594
        %1596 = vmatprep.mubr.bf16.mxu0 %v667
        %1597 = vmatmul.mubr.bf16.gmra.mrb[0].mxu0 %v666
        %v1598 = vpop.f32.mrb[0].mxu0
        %v1599 = vadd.f32 %v787, %v1598
        %v1600 = vpop.f32.mrb[0].mxu0
        %v1601 = vadd.f32 %v791, %v1600
        %v1602 = vpop.f32.mrb[0].mxu0
        %v1603 = vadd.f32 %v787, %v1602
        %v1604 = vpop.f32.mrb[0].mxu0
        %v1605 = vadd.f32 %v791, %v1604
        %1606 = vmatprep.mubr.bf16.mxu0 %v669
        %1607 = vmatmul.mubr.bf16.gmra.mrb[0].mxu0 %v668
        %v1608 = vpop.f32.mrb[0].mxu0
        %v1609 = vadd.f32 %v787, %v1608
        %v1610 = vpop.f32.mrb[0].mxu0
        %v1611 = vadd.f32 %v791, %v1610
        %v1612 = vpop.f32.mrb[0].mxu0
        %v1613 = vadd.f32 %v787, %v1612
        %v1614 = vpop.f32.mrb[0].mxu0
        %v1615 = vadd.f32 %v791, %v1614
        %1616 = vdwg.mxu0
        %v1617 = vpack.c.bf16 %v1317, %v1313
        %v1618 = vpack.c.bf16 %v1319, %v1315
        %v1619 = vpack.c.bf16 %v1430, %v1426
        %v1620 = vpack.c.bf16 %v1432, %v1428
        %v1621 = vpack.c.bf16 %v1543, %v1539
        %v1622 = vpack.c.bf16 %v1545, %v1541
        %v1623 = vpack.c.bf16 %v1327, %v1323
        %v1624 = vpack.c.bf16 %v1329, %v1325
        %v1625 = vpack.c.bf16 %v1440, %v1436
        %v1626 = vpack.c.bf16 %v1442, %v1438
        %v1627 = vpack.c.bf16 %v1553, %v1549
        %v1628 = vpack.c.bf16 %v1555, %v1551
        %v1629 = vpack.c.bf16 %v1337, %v1333
        %v1630 = vpack.c.bf16 %v1339, %v1335
        %v1631 = vpack.c.bf16 %v1450, %v1446
        %v1632 = vpack.c.bf16 %v1452, %v1448
        %v1633 = vpack.c.bf16 %v1563, %v1559
        %v1634 = vpack.c.bf16 %v1565, %v1561
        %v1635 = vpack.c.bf16 %v1347, %v1343
        %v1636 = vpack.c.bf16 %v1349, %v1345
        %v1637 = vpack.c.bf16 %v1460, %v1456
        %v1638 = vpack.c.bf16 %v1462, %v1458
        %v1639 = vpack.c.bf16 %v1573, %v1569
        %v1640 = vpack.c.bf16 %v1575, %v1571
        %v1641 = vpack.c.bf16 %v1357, %v1353
        %v1642 = vpack.c.bf16 %v1359, %v1355
        %v1643 = vpack.c.bf16 %v1470, %v1466
        %v1644 = vpack.c.bf16 %v1472, %v1468
        %v1645 = vpack.c.bf16 %v1583, %v1579
        %v1646 = vpack.c.bf16 %v1585, %v1581
        %v1647 = vpack.c.bf16 %v1367, %v1363
        %v1648 = vpack.c.bf16 %v1369, %v1365
        %v1649 = vpack.c.bf16 %v1480, %v1476
        %v1650 = vpack.c.bf16 %v1482, %v1478
        %v1651 = vpack.c.bf16 %v1593, %v1589
        %v1652 = vpack.c.bf16 %v1595, %v1591
        %v1653 = vpack.c.bf16 %v1377, %v1373
        %v1654 = vpack.c.bf16 %v1379, %v1375
        %v1655 = vpack.c.bf16 %v1490, %v1486
        %v1656 = vpack.c.bf16 %v1492, %v1488
        %v1657 = vpack.c.bf16 %v1603, %v1599
        %v1658 = vpack.c.bf16 %v1605, %v1601
        %v1659 = vpack.c.bf16 %v1387, %v1383
        %v1660 = vpack.c.bf16 %v1389, %v1385
        %v1661 = vpack.c.bf16 %v1500, %v1496
        %v1662 = vpack.c.bf16 %v1502, %v1498
        %v1663 = vpack.c.bf16 %v1613, %v1609
        %v1664 = vpack.c.bf16 %v1615, %v1611
        %v1713 = vunpack.c.l.b16 %v1617
        %v1714 = vunpack.c.l.b16 %v1618
        %v1715 = vunpack.c.l.b16 %v1619
        %v1716 = vunpack.c.l.b16 %v1620
        %v1717 = vunpack.c.l.b16 %v1621
        %v1718 = vunpack.c.l.b16 %v1622
        %v1719 = vunpack.c.h.b16 %v1617
        %v1720 = vunpack.c.h.b16 %v1618
        %v1721 = vunpack.c.h.b16 %v1619
        %v1722 = vunpack.c.h.b16 %v1620
        %v1723 = vunpack.c.h.b16 %v1621
        %v1724 = vunpack.c.h.b16 %v1622
        %v1725 = vunpack.c.l.b16 %v1623
        %v1726 = vunpack.c.l.b16 %v1624
        %v1727 = vunpack.c.l.b16 %v1625
        %v1728 = vunpack.c.l.b16 %v1626
        %v1729 = vunpack.c.l.b16 %v1627
        %v1730 = vunpack.c.l.b16 %v1628
        %v1731 = vunpack.c.h.b16 %v1623
        %v1732 = vunpack.c.h.b16 %v1624
        %v1733 = vunpack.c.h.b16 %v1625
        %v1734 = vunpack.c.h.b16 %v1626
        %v1735 = vunpack.c.h.b16 %v1627
        %v1736 = vunpack.c.h.b16 %v1628
        %v1737 = vunpack.c.l.b16 %v1629
        %v1738 = vunpack.c.l.b16 %v1630
        %v1739 = vunpack.c.l.b16 %v1631
        %v1740 = vunpack.c.l.b16 %v1632
        %v1741 = vunpack.c.l.b16 %v1633
        %v1742 = vunpack.c.l.b16 %v1634
        %v1743 = vunpack.c.h.b16 %v1629
        %v1744 = vunpack.c.h.b16 %v1630
        %v1745 = vunpack.c.h.b16 %v1631
        %v1746 = vunpack.c.h.b16 %v1632
        %v1747 = vunpack.c.h.b16 %v1633
        %v1748 = vunpack.c.h.b16 %v1634
        %v1749 = vunpack.c.l.b16 %v1635
        %v1750 = vunpack.c.l.b16 %v1636
        %v1751 = vunpack.c.l.b16 %v1637
        %v1752 = vunpack.c.l.b16 %v1638
        %v1753 = vunpack.c.l.b16 %v1639
        %v1754 = vunpack.c.l.b16 %v1640
        %v1755 = vunpack.c.h.b16 %v1635
        %v1756 = vunpack.c.h.b16 %v1636
        %v1757 = vunpack.c.h.b16 %v1637
        %v1758 = vunpack.c.h.b16 %v1638
        %v1759 = vunpack.c.h.b16 %v1639
        %v1760 = vunpack.c.h.b16 %v1640
        %v1761 = vunpack.c.l.b16 %v1641
        %v1762 = vunpack.c.l.b16 %v1642
        %v1763 = vunpack.c.l.b16 %v1643
        %v1764 = vunpack.c.l.b16 %v1644
        %v1765 = vunpack.c.l.b16 %v1645
        %v1766 = vunpack.c.l.b16 %v1646
        %v1767 = vunpack.c.h.b16 %v1641
        %v1768 = vunpack.c.h.b16 %v1642
        %v1769 = vunpack.c.h.b16 %v1643
        %v1770 = vunpack.c.h.b16 %v1644
        %v1771 = vunpack.c.h.b16 %v1645
        %v1772 = vunpack.c.h.b16 %v1646
        %v1773 = vunpack.c.l.b16 %v1647
        %v1774 = vunpack.c.l.b16 %v1648
        %v1775 = vunpack.c.l.b16 %v1649
        %v1776 = vunpack.c.l.b16 %v1650
        %v1777 = vunpack.c.l.b16 %v1651
        %v1778 = vunpack.c.l.b16 %v1652
        %v1779 = vunpack.c.h.b16 %v1647
        %v1780 = vunpack.c.h.b16 %v1648
        %v1781 = vunpack.c.h.b16 %v1649
        %v1782 = vunpack.c.h.b16 %v1650
        %v1783 = vunpack.c.h.b16 %v1651
        %v1784 = vunpack.c.h.b16 %v1652
        %v1785 = vunpack.c.l.b16 %v1653
        %v1786 = vunpack.c.l.b16 %v1654
        %v1787 = vunpack.c.l.b16 %v1655
        %v1788 = vunpack.c.l.b16 %v1656
        %v1789 = vunpack.c.l.b16 %v1657
        %v1790 = vunpack.c.l.b16 %v1658
        %v1791 = vunpack.c.h.b16 %v1653
        %v1792 = vunpack.c.h.b16 %v1654
        %v1793 = vunpack.c.h.b16 %v1655
        %v1794 = vunpack.c.h.b16 %v1656
        %v1795 = vunpack.c.h.b16 %v1657
        %v1796 = vunpack.c.h.b16 %v1658
        %v1797 = vunpack.c.l.b16 %v1659
        %v1798 = vunpack.c.l.b16 %v1660
        %v1799 = vunpack.c.l.b16 %v1661
        %v1800 = vunpack.c.l.b16 %v1662
        %v1801 = vunpack.c.l.b16 %v1663
        %v1802 = vunpack.c.l.b16 %v1664
        %v1803 = vunpack.c.h.b16 %v1659
        %v1804 = vunpack.c.h.b16 %v1660
        %v1805 = vunpack.c.h.b16 %v1661
        %v1806 = vunpack.c.h.b16 %v1662
        %v1807 = vunpack.c.h.b16 %v1663
        %v1808 = vunpack.c.h.b16 %v1664
        %v1809 = vpack.c.b16 %v1714, %v1713
        %v1810 = vpack.c.b16 %v1716, %v1715
        %v1811 = vpack.c.b16 %v1718, %v1717
        %v1812 = vpack.c.b16 %v1720, %v1719
        %v1813 = vpack.c.b16 %v1722, %v1721
        %v1814 = vpack.c.b16 %v1724, %v1723
        %v1815 = vpack.c.b16 %v1726, %v1725
        %v1816 = vpack.c.b16 %v1728, %v1727
        %v1817 = vpack.c.b16 %v1730, %v1729
        %v1818 = vpack.c.b16 %v1732, %v1731
        %v1819 = vpack.c.b16 %v1734, %v1733
        %v1820 = vpack.c.b16 %v1736, %v1735
        %v1821 = vpack.c.b16 %v1738, %v1737
        %v1822 = vpack.c.b16 %v1740, %v1739
        %v1823 = vpack.c.b16 %v1742, %v1741
        %v1824 = vpack.c.b16 %v1744, %v1743
        %v1825 = vpack.c.b16 %v1746, %v1745
        %v1826 = vpack.c.b16 %v1748, %v1747
        %v1827 = vpack.c.b16 %v1750, %v1749
        %v1828 = vpack.c.b16 %v1752, %v1751
        %v1829 = vpack.c.b16 %v1754, %v1753
        %v1830 = vpack.c.b16 %v1756, %v1755
        %v1831 = vpack.c.b16 %v1758, %v1757
        %v1832 = vpack.c.b16 %v1760, %v1759
        %v1833 = vpack.c.b16 %v1762, %v1761
        %v1834 = vpack.c.b16 %v1764, %v1763
        %v1835 = vpack.c.b16 %v1766, %v1765
        %v1836 = vpack.c.b16 %v1768, %v1767
        %v1837 = vpack.c.b16 %v1770, %v1769
        %v1838 = vpack.c.b16 %v1772, %v1771
        %v1839 = vpack.c.b16 %v1774, %v1773
        %v1840 = vpack.c.b16 %v1776, %v1775
        %v1841 = vpack.c.b16 %v1778, %v1777
        %v1842 = vpack.c.b16 %v1780, %v1779
        %v1843 = vpack.c.b16 %v1782, %v1781
        %v1844 = vpack.c.b16 %v1784, %v1783
        %v1845 = vpack.c.b16 %v1786, %v1785
        %v1846 = vpack.c.b16 %v1788, %v1787
        %v1847 = vpack.c.b16 %v1790, %v1789
        %v1848 = vpack.c.b16 %v1792, %v1791
        %v1849 = vpack.c.b16 %v1794, %v1793
        %v1850 = vpack.c.b16 %v1796, %v1795
        %v1851 = vpack.c.b16 %v1798, %v1797
        %v1852 = vpack.c.b16 %v1800, %v1799
        %v1853 = vpack.c.b16 %v1802, %v1801
        %v1854 = vpack.c.b16 %v1804, %v1803
        %v1855 = vpack.c.b16 %v1806, %v1805
        %v1856 = vpack.c.b16 %v1808, %v1807
        %1905 = vst [vmem:[%s275] sm:$0xff] %v1809
        %1906 = vst [vmem:[%s275 + $0x8] sm:$0xff] %v1810
        %1907 = vst [vmem:[%s275 + $0x10] sm:$0xff] %v1811
        %1908 = vst [vmem:[%s275 + $0x18] sm:$0xff] %v1812
        %1909 = vst [vmem:[%s275 + $0x20] sm:$0xff] %v1813
        %1910 = vst [vmem:[%s275 + $0x28] sm:$0xff] %v1814
        %1911 = vst [vmem:[%s275 + $0x30] sm:$0xff] %v1815
        %1912 = vst [vmem:[%s275 + $0x38] sm:$0xff] %v1816
        %1913 = vst [vmem:[%s275 + $0x40] sm:$0xff] %v1817
        %1914 = vst [vmem:[%s275 + $0x48] sm:$0xff] %v1818
        %1915 = vst [vmem:[%s275 + $0x50] sm:$0xff] %v1819
        %1916 = vst [vmem:[%s275 + $0x58] sm:$0xff] %v1820
        %1917 = vst [vmem:[%s275 + $0x60] sm:$0xff] %v1821
        %1918 = vst [vmem:[%s275 + $0x68] sm:$0xff] %v1822
        %1919 = vst [vmem:[%s275 + $0x70] sm:$0xff] %v1823
        %1920 = vst [vmem:[%s275 + $0x78] sm:$0xff] %v1824
        %1921 = vst [vmem:[%s275 + $0x80] sm:$0xff] %v1825
        %1922 = vst [vmem:[%s275 + $0x88] sm:$0xff] %v1826
        %1923 = vst [vmem:[%s275 + $0x90] sm:$0xff] %v1827
        %1924 = vst [vmem:[%s275 + $0x98] sm:$0xff] %v1828
        %1925 = vst [vmem:[%s275 + $0xa0] sm:$0xff] %v1829
        %1926 = vst [vmem:[%s275 + $0xa8] sm:$0xff] %v1830
        %1927 = vst [vmem:[%s275 + $0xb0] sm:$0xff] %v1831
        %1928 = vst [vmem:[%s275 + $0xb8] sm:$0xff] %v1832
        %1929 = vst [vmem:[%s275 + $0xc0] sm:$0xff] %v1833
        %1930 = vst [vmem:[%s275 + $0xc8] sm:$0xff] %v1834
        %1931 = vst [vmem:[%s275 + $0xd0] sm:$0xff] %v1835
        %1932 = vst [vmem:[%s275 + $0xd8] sm:$0xff] %v1836
        %1933 = vst [vmem:[%s275 + $0xe0] sm:$0xff] %v1837
        %1934 = vst [vmem:[%s275 + $0xe8] sm:$0xff] %v1838
        %1935 = vst [vmem:[%s275 + $0xf0] sm:$0xff] %v1839
        %1936 = vst [vmem:[%s275 + $0xf8] sm:$0xff] %v1840
        %1937 = vst [vmem:[%s275 + $0x100] sm:$0xff] %v1841
        %1938 = vst [vmem:[%s275 + $0x108] sm:$0xff] %v1842
        %1939 = vst [vmem:[%s275 + $0x110] sm:$0xff] %v1843
        %1940 = vst [vmem:[%s275 + $0x118] sm:$0xff] %v1844
        %1941 = vst [vmem:[%s275 + $0x120] sm:$0xff] %v1845
        %1942 = vst [vmem:[%s275 + $0x128] sm:$0xff] %v1846
        %1943 = vst [vmem:[%s275 + $0x130] sm:$0xff] %v1847
        %1944 = vst [vmem:[%s275 + $0x138] sm:$0xff] %v1848
        %1945 = vst [vmem:[%s275 + $0x140] sm:$0xff] %v1849
        %1946 = vst [vmem:[%s275 + $0x148] sm:$0xff] %v1850
        %1947 = vst [vmem:[%s275 + $0x150] sm:$0xff] %v1851
        %1948 = vst [vmem:[%s275 + $0x158] sm:$0xff] %v1852
        %1949 = vst [vmem:[%s275 + $0x160] sm:$0xff] %v1853
        %1950 = vst [vmem:[%s275 + $0x168] sm:$0xff] %v1854
        %1951 = vst [vmem:[%s275 + $0x170] sm:$0xff] %v1855
        %1952 = vst [vmem:[%s275 + $0x178] sm:$0xff] %v1856
        %s1953 = smul.u32 16, %s20
        %p1954 = scmp.lt.s32.totalorder %s1953, 31
        %s1955 = scalar_select %p1954, %s1953, 31
        %s1956 = smul.addr %s1955, 6
        %s1957 = smul.addr %s1956, 4
        %s1958 = scalar_lea.vmem %s5, %s1957
        // Predicated region
        $region53: #{transformer_block.2} parent=39 // pred_check
          %p1959 = pneg %p148
        $region54: #{transformer_block.2} parent=39 // pred_check_branch
          %1961 = sbr.rel (%p1959) target = $region56
        $region55: #{transformer_block.2} parent=39 // pred_region
          %s1962 = smul.u32 16, %s20
        $region56: #{transformer_block.2} parent=39 // pred_fallthru
          _
      $region40: #{transformer_block.2} parent=5 // pred_fallthru
        _
      %p1963 = scmp.le.s32.totalorder 2, %s15
      // Predicated region
      $region57: #{transformer_block.2} parent=5 // pred_check
        %p1964 = pneg %p1963
      $region58: #{transformer_block.2} parent=5 // pred_check_branch
        %1966 = sbr.rel (%p1964) target = $region60
      $region59: #{transformer_block.2} parent=5 // pred_region
        %s1967 = ssub.s32 %s15, 2
        // Predicated region
        $region61: #{transformer_block.2} parent=59 // pred_check
          %p1968 = pneg %p154
        $region62: #{transformer_block.2} parent=59 // pred_check_branch
          %1970 = sbr.rel (%p1968) target = $region64
        $region63: #{transformer_block.2} parent=59 // pred_region
          %s1971 = smul.u32 16, %s21
          %p1972 = scmp.lt.s32.totalorder %s1971, 31
          %s1973 = scalar_select %p1972, %s1971, 31
          %s1974 = smul.addr %s1973, 6
          %s1975 = smul.addr %s1974, 4
          %s1976 = scalar_lea.vmem %s5, %s1975
        $region64: #{transformer_block.2} parent=59 // pred_fallthru
          _
      $region60: #{transformer_block.2} parent=5 // pred_fallthru
        _
    $region6: #{transformer_block.2} parent=1 // loop_footer
      %s19 = sadd.s32 1, %s15
    $region7: #{transformer_block.2} parent=1 // loop_footer_branch
      %14 = sbr.rel target = $region3
    $region8: #{transformer_block.2} parent=1 // loop_exit
      _
    %1977 = vsyncpa [#allocation3], 1
    %s1978 = scalar_lea.sflag [#allocation3], 1
    %1979 = vsyncpa %s1978, 1
    %1980 = vsyncpa [#allocation5], 1

// kernel: transformer_block.3
$region0: #{transformer_block.3}
  #allocation0 [shape = 'u32[]', space=smem, size = 0x4, offset = 0x4, fixed_abs, tag = 'smem constant byte address 0x4 - core index']
  #allocation1 [shape = 'u32[144,128]{1,0:T(1,128)}', space=vmem, size = 0x12000, scoped, tag = 'internal scratch']
  %s0 = inlined_call_operand.vmem [shape: f32[256,256], index: 0, kind: input, shape index: {}]
  %s1 = inlined_call_operand.vmem [shape: bf16[2,256,128], index: 1, kind: input, shape index: {}]
  %s2 = inlined_call_operand.vmem [shape: bf16[2,256,128], index: 2, kind: input, shape index: {}]
  %s3 = inlined_call_operand.vmem [shape: bf16[2,256,128], index: 3, kind: input, shape index: {}]
  %s4 = inlined_call_operand.vmem [shape: bf16[256,256], index: 4, kind: input, shape index: {}]
  %s5 = inlined_call_operand.vmem [shape: f32[1,256], index: 5, kind: input, shape index: {}]
  %s6 = inlined_call_operand.vmem [shape: f32[1,256], index: 6, kind: input, shape index: {}]
  %s7 = inlined_call_operand.vmem [shape: f32[1,256], index: 7, kind: input, shape index: {}]
  %s8 = inlined_call_operand.vmem [shape: bf16[256,256], index: 8, kind: input, shape index: {}]
  %s9 = inlined_call_operand.vmem [shape: f32[1,256], index: 9, kind: input, shape index: {}]
  %s10 = inlined_call_operand.vmem [shape: bf16[256,256], index: 10, kind: input, shape index: {}]
  %s11 = inlined_call_operand.vmem [shape: f32[1,256], index: 11, kind: input, shape index: {}]
  %s12 = inlined_call_operand.hbm [shape: f32[256,256], index: 12, kind: output, shape index: {}]
  %s13 = sld [smem:[#allocation0]]
  $region122: #{transformer_block.3} parent=0
    _
  %s15 = ssub.s32 1, %s13
  %s16 = scalar_select 0, %s15, %s13
  $region1: #{transformer_block.3} parent=0
    #allocation2 [shape = 'u8[131072]{0}', space=vmem, size = 0x20000, scoped, tag = 'input window, operand 1']
    #allocation3 [shape = 'u8[262144]{0}', space=vmem, size = 0x40000, scoped, tag = 'output window, operand 0']
    #allocation4 [shape = 's32[2]{0}', space=sflag, size = 0x8, scoped, tag = 'scoped memory for transformer_block.3']
    %17 = vsyncpa [#allocation4], 0
    %s18 = scalar_lea.sflag [#allocation4], 1
    %19 = vsyncpa %s18, 0
    loop: start=0, step=1, limit=4
    $region2: #{transformer_block.3} parent=1 // loop_pre_header
      _
    $region3: #{transformer_block.3} parent=1 // loop_header
      %s21 = sphi 0, %s25
      %p22 = scmp.ge.s32.totalorder %s21, 4
      %s31 = sphi 0, %s33
      %s34 = sphi 0, %s31
      %s35 = sphi 0, %s34
      %s51 = sphi 0, %s35
      %s57 = sphi 0, %s59
      %s60 = sphi 0, %s57
      %s61 = sphi 0, %s60
      %s77 = sphi 0, %s61
      %s81 = sphi 0, %s81
      %s83 = sphi 0, %s81
      %s84 = sphi 0, %s83
      %s98 = sphi 0, %s84
      %s102 = sphi 0, %s102
      %s104 = sphi 0, %s102
      %s105 = sphi 0, %s104
      %s119 = sphi 0, %s105
      %s123 = sphi 0, %s123
      %s125 = sphi 0, %s123
      %s126 = sphi 0, %s125
      %s140 = sphi 0, %s126
      %s144 = sphi 0, %s144
      %s146 = sphi 0, %s144
      %s147 = sphi 0, %s146
      %s161 = sphi 0, %s147
      %s165 = sphi 0, %s165
      %s167 = sphi 0, %s165
      %s168 = sphi 0, %s167
      %s182 = sphi 0, %s168
      %s186 = sphi 0, %s186
      %s188 = sphi 0, %s186
      %s189 = sphi 0, %s188
      %s203 = sphi 0, %s189
      %s207 = sphi 0, %s207
      %s209 = sphi 0, %s207
      %s210 = sphi 0, %s209
      %s224 = sphi 0, %s210
      %s228 = sphi 0, %s228
      %s230 = sphi 0, %s228
      %s231 = sphi 0, %s230
      %s245 = sphi 0, %s231
      %s249 = sphi 0, %s249
      %s251 = sphi 0, %s249
      %s252 = sphi 0, %s251
      %s266 = sphi 0, %s252
      %s270 = sphi 0, %s270
      %s272 = sphi 0, %s270
      %s273 = sphi 0, %s272
      %s287 = sphi 0, %s273
      %s293 = sphi 0, %s295
      %s296 = sphi 0, %s293
      %s297 = sphi 0, %s296
      %s313 = sphi 0, %s297
    $region4: #{transformer_block.3} parent=1 // loop_header_branch
      %24 = sbr.rel (%p22) target = $region8
    $region5: #{transformer_block.3} parent=1 // loop_body
      %s26 = ssub.s32 %s21, 1
      %s27 = ssub.s32 %s21, 2
      %s28 = sadd.s32 %s21, 1
      %s29 = ssub.s32 %s21, %s28
      %p30 = scmp.eq.s32.totalorder %s29, 0
      %s32 = sadd.s32 %s31, 1
      %s33 = scalar_select %p30, %s31, %s32
      %p36 = pneg %p30
      %p37 = scmp.eq.s32.totalorder %s21, 1
      %p38 = por %p36, %p37
      %p39 = scmp.ne.s32.totalorder %s31, %s34
      %p40 = scmp.eq.s32.totalorder %s21, 0
      %p41 = por %p39, %p40
      %p42 = scmp.ne.s32.totalorder %s31, %s34
      %p43 = scmp.eq.s32.totalorder %s26, 1
      %p44 = por %p42, %p43
      %p45 = scmp.ne.s32.totalorder %s34, %s35
      %p46 = scmp.eq.s32.totalorder %s26, 0
      %p47 = por %p45, %p46
      %p48 = scmp.ne.s32.totalorder %s34, %s35
      %p49 = scmp.eq.s32.totalorder %s27, 1
      %p50 = por %p48, %p49
      %p52 = scmp.ne.s32.totalorder %s35, %s51
      %p53 = scmp.eq.s32.totalorder %s27, 0
      %p54 = por %p52, %p53
      %s55 = ssub.s32 %s21, %s28
      %p56 = scmp.eq.s32.totalorder %s55, 0
      %s58 = sadd.s32 %s57, 1
      %s59 = scalar_select %p56, %s57, %s58
      %p62 = pneg %p56
      %p63 = scmp.eq.s32.totalorder %s21, 1
      %p64 = por %p62, %p63
      %p65 = scmp.ne.s32.totalorder %s57, %s60
      %p66 = scmp.eq.s32.totalorder %s21, 0
      %p67 = por %p65, %p66
      %p68 = scmp.ne.s32.totalorder %s57, %s60
      %p69 = scmp.eq.s32.totalorder %s26, 1
      %p70 = por %p68, %p69
      %p71 = scmp.ne.s32.totalorder %s60, %s61
      %p72 = scmp.eq.s32.totalorder %s26, 0
      %p73 = por %p71, %p72
      %p74 = scmp.ne.s32.totalorder %s60, %s61
      %p75 = scmp.eq.s32.totalorder %s27, 1
      %p76 = por %p74, %p75
      %p78 = scmp.ne.s32.totalorder %s61, %s77
      %p79 = scmp.eq.s32.totalorder %s27, 0
      %p80 = por %p78, %p79
      %s82 = sadd.s32 %s81, 1
      %p85 = scmp.eq.s32.totalorder %s21, 1
      %p86 = scmp.ne.s32.totalorder %s81, %s83
      %p87 = scmp.eq.s32.totalorder %s21, 0
      %p88 = por %p86, %p87
      %p89 = scmp.ne.s32.totalorder %s81, %s83
      %p90 = scmp.eq.s32.totalorder %s26, 1
      %p91 = por %p89, %p90
      %p92 = scmp.ne.s32.totalorder %s83, %s84
      %p93 = scmp.eq.s32.totalorder %s26, 0
      %p94 = por %p92, %p93
      %p95 = scmp.ne.s32.totalorder %s83, %s84
      %p96 = scmp.eq.s32.totalorder %s27, 1
      %p97 = por %p95, %p96
      %p99 = scmp.ne.s32.totalorder %s84, %s98
      %p100 = scmp.eq.s32.totalorder %s27, 0
      %p101 = por %p99, %p100
      %s103 = sadd.s32 %s102, 1
      %p106 = scmp.eq.s32.totalorder %s21, 1
      %p107 = scmp.ne.s32.totalorder %s102, %s104
      %p108 = scmp.eq.s32.totalorder %s21, 0
      %p109 = por %p107, %p108
      %p110 = scmp.ne.s32.totalorder %s102, %s104
      %p111 = scmp.eq.s32.totalorder %s26, 1
      %p112 = por %p110, %p111
      %p113 = scmp.ne.s32.totalorder %s104, %s105
      %p114 = scmp.eq.s32.totalorder %s26, 0
      %p115 = por %p113, %p114
      %p116 = scmp.ne.s32.totalorder %s104, %s105
      %p117 = scmp.eq.s32.totalorder %s27, 1
      %p118 = por %p116, %p117
      %p120 = scmp.ne.s32.totalorder %s105, %s119
      %p121 = scmp.eq.s32.totalorder %s27, 0
      %p122 = por %p120, %p121
      %s124 = sadd.s32 %s123, 1
      %p127 = scmp.eq.s32.totalorder %s21, 1
      %p128 = scmp.ne.s32.totalorder %s123, %s125
      %p129 = scmp.eq.s32.totalorder %s21, 0
      %p130 = por %p128, %p129
      %p131 = scmp.ne.s32.totalorder %s123, %s125
      %p132 = scmp.eq.s32.totalorder %s26, 1
      %p133 = por %p131, %p132
      %p134 = scmp.ne.s32.totalorder %s125, %s126
      %p135 = scmp.eq.s32.totalorder %s26, 0
      %p136 = por %p134, %p135
      %p137 = scmp.ne.s32.totalorder %s125, %s126
      %p138 = scmp.eq.s32.totalorder %s27, 1
      %p139 = por %p137, %p138
      %p141 = scmp.ne.s32.totalorder %s126, %s140
      %p142 = scmp.eq.s32.totalorder %s27, 0
      %p143 = por %p141, %p142
      %s145 = sadd.s32 %s144, 1
      %p148 = scmp.eq.s32.totalorder %s21, 1
      %p149 = scmp.ne.s32.totalorder %s144, %s146
      %p150 = scmp.eq.s32.totalorder %s21, 0
      %p151 = por %p149, %p150
      %p152 = scmp.ne.s32.totalorder %s144, %s146
      %p153 = scmp.eq.s32.totalorder %s26, 1
      %p154 = por %p152, %p153
      %p155 = scmp.ne.s32.totalorder %s146, %s147
      %p156 = scmp.eq.s32.totalorder %s26, 0
      %p157 = por %p155, %p156
      %p158 = scmp.ne.s32.totalorder %s146, %s147
      %p159 = scmp.eq.s32.totalorder %s27, 1
      %p160 = por %p158, %p159
      %p162 = scmp.ne.s32.totalorder %s147, %s161
      %p163 = scmp.eq.s32.totalorder %s27, 0
      %p164 = por %p162, %p163
      %s166 = sadd.s32 %s165, 1
      %p169 = scmp.eq.s32.totalorder %s21, 1
      %p170 = scmp.ne.s32.totalorder %s165, %s167
      %p171 = scmp.eq.s32.totalorder %s21, 0
      %p172 = por %p170, %p171
      %p173 = scmp.ne.s32.totalorder %s165, %s167
      %p174 = scmp.eq.s32.totalorder %s26, 1
      %p175 = por %p173, %p174
      %p176 = scmp.ne.s32.totalorder %s167, %s168
      %p177 = scmp.eq.s32.totalorder %s26, 0
      %p178 = por %p176, %p177
      %p179 = scmp.ne.s32.totalorder %s167, %s168
      %p180 = scmp.eq.s32.totalorder %s27, 1
      %p181 = por %p179, %p180
      %p183 = scmp.ne.s32.totalorder %s168, %s182
      %p184 = scmp.eq.s32.totalorder %s27, 0
      %p185 = por %p183, %p184
      %s187 = sadd.s32 %s186, 1
      %p190 = scmp.eq.s32.totalorder %s21, 1
      %p191 = scmp.ne.s32.totalorder %s186, %s188
      %p192 = scmp.eq.s32.totalorder %s21, 0
      %p193 = por %p191, %p192
      %p194 = scmp.ne.s32.totalorder %s186, %s188
      %p195 = scmp.eq.s32.totalorder %s26, 1
      %p196 = por %p194, %p195
      %p197 = scmp.ne.s32.totalorder %s188, %s189
      %p198 = scmp.eq.s32.totalorder %s26, 0
      %p199 = por %p197, %p198
      %p200 = scmp.ne.s32.totalorder %s188, %s189
      %p201 = scmp.eq.s32.totalorder %s27, 1
      %p202 = por %p200, %p201
      %p204 = scmp.ne.s32.totalorder %s189, %s203
      %p205 = scmp.eq.s32.totalorder %s27, 0
      %p206 = por %p204, %p205
      %s208 = sadd.s32 %s207, 1
      %p211 = scmp.eq.s32.totalorder %s21, 1
      %p212 = scmp.ne.s32.totalorder %s207, %s209
      %p213 = scmp.eq.s32.totalorder %s21, 0
      %p214 = por %p212, %p213
      %p215 = scmp.ne.s32.totalorder %s207, %s209
      %p216 = scmp.eq.s32.totalorder %s26, 1
      %p217 = por %p215, %p216
      %p218 = scmp.ne.s32.totalorder %s209, %s210
      %p219 = scmp.eq.s32.totalorder %s26, 0
      %p220 = por %p218, %p219
      %p221 = scmp.ne.s32.totalorder %s209, %s210
      %p222 = scmp.eq.s32.totalorder %s27, 1
      %p223 = por %p221, %p222
      %p225 = scmp.ne.s32.totalorder %s210, %s224
      %p226 = scmp.eq.s32.totalorder %s27, 0
      %p227 = por %p225, %p226
      %s229 = sadd.s32 %s228, 1
      %p232 = scmp.eq.s32.totalorder %s21, 1
      %p233 = scmp.ne.s32.totalorder %s228, %s230
      %p234 = scmp.eq.s32.totalorder %s21, 0
      %p235 = por %p233, %p234
      %p236 = scmp.ne.s32.totalorder %s228, %s230
      %p237 = scmp.eq.s32.totalorder %s26, 1
      %p238 = por %p236, %p237
      %p239 = scmp.ne.s32.totalorder %s230, %s231
      %p240 = scmp.eq.s32.totalorder %s26, 0
      %p241 = por %p239, %p240
      %p242 = scmp.ne.s32.totalorder %s230, %s231
      %p243 = scmp.eq.s32.totalorder %s27, 1
      %p244 = por %p242, %p243
      %p246 = scmp.ne.s32.totalorder %s231, %s245
      %p247 = scmp.eq.s32.totalorder %s27, 0
      %p248 = por %p246, %p247
      %s250 = sadd.s32 %s249, 1
      %p253 = scmp.eq.s32.totalorder %s21, 1
      %p254 = scmp.ne.s32.totalorder %s249, %s251
      %p255 = scmp.eq.s32.totalorder %s21, 0
      %p256 = por %p254, %p255
      %p257 = scmp.ne.s32.totalorder %s249, %s251
      %p258 = scmp.eq.s32.totalorder %s26, 1
      %p259 = por %p257, %p258
      %p260 = scmp.ne.s32.totalorder %s251, %s252
      %p261 = scmp.eq.s32.totalorder %s26, 0
      %p262 = por %p260, %p261
      %p263 = scmp.ne.s32.totalorder %s251, %s252
      %p264 = scmp.eq.s32.totalorder %s27, 1
      %p265 = por %p263, %p264
      %p267 = scmp.ne.s32.totalorder %s252, %s266
      %p268 = scmp.eq.s32.totalorder %s27, 0
      %p269 = por %p267, %p268
      %s271 = sadd.s32 %s270, 1
      %p274 = scmp.eq.s32.totalorder %s21, 1
      %p275 = scmp.ne.s32.totalorder %s270, %s272
      %p276 = scmp.eq.s32.totalorder %s21, 0
      %p277 = por %p275, %p276
      %p278 = scmp.ne.s32.totalorder %s270, %s272
      %p279 = scmp.eq.s32.totalorder %s26, 1
      %p280 = por %p278, %p279
      %p281 = scmp.ne.s32.totalorder %s272, %s273
      %p282 = scmp.eq.s32.totalorder %s26, 0
      %p283 = por %p281, %p282
      %p284 = scmp.ne.s32.totalorder %s272, %s273
      %p285 = scmp.eq.s32.totalorder %s27, 1
      %p286 = por %p284, %p285
      %p288 = scmp.ne.s32.totalorder %s273, %s287
      %p289 = scmp.eq.s32.totalorder %s27, 0
      %p290 = por %p288, %p289
      %s291 = ssub.s32 %s21, %s28
      %p292 = scmp.eq.s32.totalorder %s291, 0
      %s294 = sadd.s32 %s293, 1
      %s295 = scalar_select %p292, %s293, %s294
      %p298 = pneg %p292
      %p299 = scmp.eq.s32.totalorder %s21, 1
      %p300 = por %p298, %p299
      %p301 = scmp.ne.s32.totalorder %s293, %s296
      %p302 = scmp.eq.s32.totalorder %s21, 0
      %p303 = por %p301, %p302
      %p304 = scmp.ne.s32.totalorder %s293, %s296
      %p305 = scmp.eq.s32.totalorder %s26, 1
      %p306 = por %p304, %p305
      %p307 = scmp.ne.s32.totalorder %s296, %s297
      %p308 = scmp.eq.s32.totalorder %s26, 0
      %p309 = por %p307, %p308
      %p310 = scmp.ne.s32.totalorder %s296, %s297
      %p311 = scmp.eq.s32.totalorder %s27, 1
      %p312 = por %p310, %p311
      %p314 = scmp.ne.s32.totalorder %s297, %s313
      %p315 = scmp.eq.s32.totalorder %s27, 0
      %p316 = por %p314, %p315
      %p317 = scmp.le.s32.totalorder 1, %s21
      %p318 = scmp.lt.s32.totalorder %s21, 3
      %p319 = pnand %p317, %p318
      %p320 = pneg %p319
      // Predicated region
      $region9: #{transformer_block.3} parent=5 // pred_check
        _
      $region10: #{transformer_block.3} parent=5 // pred_check_branch
        %322 = sbr.rel (%p319) target = $region12
      $region11: #{transformer_block.3} parent=5 // pred_region
        %s323 = ssub.s32 %s21, 1
        // Predicated region
        $region13: #{transformer_block.3} parent=11 // pred_check
          %p324 = pneg %p94
        $region14: #{transformer_block.3} parent=11 // pred_check_branch
          %326 = sbr.rel (%p324) target = $region16
        $region15: #{transformer_block.3} parent=11 // pred_region
          _
        $region16: #{transformer_block.3} parent=11 // pred_fallthru
          _
        // Predicated region
        $region17: #{transformer_block.3} parent=11 // pred_check
          %p327 = pneg %p115
        $region18: #{transformer_block.3} parent=11 // pred_check_branch
          %329 = sbr.rel (%p327) target = $region20
        $region19: #{transformer_block.3} parent=11 // pred_region
          _
        $region20: #{transformer_block.3} parent=11 // pred_fallthru
          _
        // Predicated region
        $region21: #{transformer_block.3} parent=11 // pred_check
          %p330 = pneg %p136
        $region22: #{transformer_block.3} parent=11 // pred_check_branch
          %332 = sbr.rel (%p330) target = $region24
        $region23: #{transformer_block.3} parent=11 // pred_region
          _
        $region24: #{transformer_block.3} parent=11 // pred_fallthru
          _
        // Predicated region
        $region25: #{transformer_block.3} parent=11 // pred_check
          %p333 = pneg %p157
        $region26: #{transformer_block.3} parent=11 // pred_check_branch
          %335 = sbr.rel (%p333) target = $region28
        $region27: #{transformer_block.3} parent=11 // pred_region
          _
        $region28: #{transformer_block.3} parent=11 // pred_fallthru
          _
        // Predicated region
        $region29: #{transformer_block.3} parent=11 // pred_check
          %p336 = pneg %p178
        $region30: #{transformer_block.3} parent=11 // pred_check_branch
          %338 = sbr.rel (%p336) target = $region32
        $region31: #{transformer_block.3} parent=11 // pred_region
          _
        $region32: #{transformer_block.3} parent=11 // pred_fallthru
          _
        // Predicated region
        $region33: #{transformer_block.3} parent=11 // pred_check
          %p339 = pneg %p199
        $region34: #{transformer_block.3} parent=11 // pred_check_branch
          %341 = sbr.rel (%p339) target = $region36
        $region35: #{transformer_block.3} parent=11 // pred_region
          _
        $region36: #{transformer_block.3} parent=11 // pred_fallthru
          _
        // Predicated region
        $region37: #{transformer_block.3} parent=11 // pred_check
          %p342 = pneg %p220
        $region38: #{transformer_block.3} parent=11 // pred_check_branch
          %344 = sbr.rel (%p342) target = $region40
        $region39: #{transformer_block.3} parent=11 // pred_region
          _
        $region40: #{transformer_block.3} parent=11 // pred_fallthru
          _
        // Predicated region
        $region41: #{transformer_block.3} parent=11 // pred_check
          %p345 = pneg %p241
        $region42: #{transformer_block.3} parent=11 // pred_check_branch
          %347 = sbr.rel (%p345) target = $region44
        $region43: #{transformer_block.3} parent=11 // pred_region
          _
        $region44: #{transformer_block.3} parent=11 // pred_fallthru
          _
        // Predicated region
        $region45: #{transformer_block.3} parent=11 // pred_check
          %p348 = pneg %p262
        $region46: #{transformer_block.3} parent=11 // pred_check_branch
          %350 = sbr.rel (%p348) target = $region48
        $region47: #{transformer_block.3} parent=11 // pred_region
          _
        $region48: #{transformer_block.3} parent=11 // pred_fallthru
          _
        // Predicated region
        $region49: #{transformer_block.3} parent=11 // pred_check
          %p351 = pneg %p283
        $region50: #{transformer_block.3} parent=11 // pred_check_branch
          %353 = sbr.rel (%p351) target = $region52
        $region51: #{transformer_block.3} parent=11 // pred_region
          _
        $region52: #{transformer_block.3} parent=11 // pred_fallthru
          _
      $region12: #{transformer_block.3} parent=5 // pred_fallthru
        _
      %p354 = scmp.lt.s32.totalorder %s21, 2
      // Predicated region
      $region53: #{transformer_block.3} parent=5 // pred_check
        %p355 = pneg %p354
      $region54: #{transformer_block.3} parent=5 // pred_check_branch
        %357 = sbr.rel (%p355) target = $region56
      $region55: #{transformer_block.3} parent=5 // pred_region
        // Predicated region
        $region57: #{transformer_block.3} parent=55 // pred_check
          %p358 = pneg %p41
        $region58: #{transformer_block.3} parent=55 // pred_check_branch
          %360 = sbr.rel (%p358) target = $region60
        $region59: #{transformer_block.3} parent=55 // pred_region
          %s361 = smul.u32 16, %s21
          %p362 = scmp.lt.s32.totalorder %s361, 31
          %s363 = scalar_select %p362, %s361, 31
          %s364 = smul.addr %s363, 2
          %s365 = smul.addr %s364, 8
          %s366 = scalar_lea.vmem %s0, %s365
          %s367 = smul.u32 16, %s21
        $region60: #{transformer_block.3} parent=55 // pred_fallthru
          _
        // Predicated region
        $region61: #{transformer_block.3} parent=55 // pred_check
          %p368 = pneg %p67
        $region62: #{transformer_block.3} parent=55 // pred_check_branch
          %370 = sbr.rel (%p368) target = $region64
        $region63: #{transformer_block.3} parent=55 // pred_region
          %s371 = sand.u32 %s57, 1
          %s372 = sand.u32 %s57, 1
          %s373 = smul.addr %s372, 128
          %s374 = scalar_lea.vmem [#allocation2], %s373
          %s375 = smul.u32 16, %s21
          %s376 = smul.addr %s375, 4
          %s377 = scalar_lea.vmem %s1, %s376
          // Predicated region
          $region65: #{transformer_block.3} parent=63 // pred_check
            _
          $region66: #{transformer_block.3} parent=63 // pred_check_branch
            %379 = sbr.rel (0) target = $region68
          $region67: #{transformer_block.3} parent=63 // pred_region
            // Predicated region
            $region69: #{transformer_block.3} parent=67 // pred_check
              _
            $region70: #{transformer_block.3} parent=67 // pred_check_branch
              %381 = sbr.rel target = $region72
            $region71: #{transformer_block.3} parent=67 // pred_region
              // Predicated region
              $region84: #{transformer_block.3} parent=71 // pred_check
                _
              $region85: #{transformer_block.3} parent=71 // pred_check_branch
                %458 = sbr.rel (0) target = $region87
              $region86: #{transformer_block.3} parent=71 // pred_region
                loop: start=0, step=1, limit=1
                $region88: #{transformer_block.3} parent=86 // loop_pre_header
                  _
                $region89: #{transformer_block.3} parent=86 // loop_header
                  %s460 = sphi 0, %s464
                  %p461 = scmp.ge.s32.totalorder %s460, 1
                  %s465 = sphi %s377, %s377
                  %s466 = sphi %s374, %s374
                $region90: #{transformer_block.3} parent=86 // loop_header_branch
                  %463 = sbr.rel (%p461) target = $region94
                $region91: #{transformer_block.3} parent=86 // loop_body
                  _
                $region92: #{transformer_block.3} parent=86 // loop_footer
                  %s464 = sadd.s32 1, %s460
                $region93: #{transformer_block.3} parent=86 // loop_footer_branch
                  %459 = sbr.rel target = $region89
                $region94: #{transformer_block.3} parent=86 // loop_exit
                  _
                loop: start=0, step=1, limit=1
                $region95: #{transformer_block.3} parent=86 // loop_pre_header
                  _
                $region96: #{transformer_block.3} parent=86 // loop_header
                  %s469 = sphi 0, %s473
                  %p470 = scmp.ge.s32.totalorder %s469, 1
                  %s474 = sphi %s377, %s377
                  %s475 = sphi %s374, %s374
                $region97: #{transformer_block.3} parent=86 // loop_header_branch
                  %472 = sbr.rel (%p470) target = $region101
                $region98: #{transformer_block.3} parent=86 // loop_body
                  %v476 = vld [vmem:[%s474] sm:$0xf]
                  %477 = vst [vmem:[%s475] sm:$0xf] %v476
                  %v478 = vld [vmem:[%s474 + $0x4] sm:$0xf]
                  %479 = vst [vmem:[%s475 + $0x4] sm:$0xf] %v478
                  %v480 = vld [vmem:[%s474 + $0x8] sm:$0xf]
                  %481 = vst [vmem:[%s475 + $0x8] sm:$0xf] %v480
                  %v482 = vld [vmem:[%s474 + $0xc] sm:$0xf]
                  %483 = vst [vmem:[%s475 + $0xc] sm:$0xf] %v482
                  %v484 = vld [vmem:[%s474 + $0x10] sm:$0xf]
                  %485 = vst [vmem:[%s475 + $0x10] sm:$0xf] %v484
                  %v486 = vld [vmem:[%s474 + $0x14] sm:$0xf]
                  %487 = vst [vmem:[%s475 + $0x14] sm:$0xf] %v486
                  %v488 = vld [vmem:[%s474 + $0x18] sm:$0xf]
                  %489 = vst [vmem:[%s475 + $0x18] sm:$0xf] %v488
                  %v490 = vld [vmem:[%s474 + $0x1c] sm:$0xf]
                  %491 = vst [vmem:[%s475 + $0x1c] sm:$0xf] %v490
                  %v492 = vld [vmem:[%s474 + $0x20] sm:$0xf]
                  %493 = vst [vmem:[%s475 + $0x20] sm:$0xf] %v492
                  %v494 = vld [vmem:[%s474 + $0x24] sm:$0xf]
                  %495 = vst [vmem:[%s475 + $0x24] sm:$0xf] %v494
                  %v496 = vld [vmem:[%s474 + $0x28] sm:$0xf]
                  %497 = vst [vmem:[%s475 + $0x28] sm:$0xf] %v496
                  %v498 = vld [vmem:[%s474 + $0x2c] sm:$0xf]
                  %499 = vst [vmem:[%s475 + $0x2c] sm:$0xf] %v498
                  %v500 = vld [vmem:[%s474 + $0x30] sm:$0xf]
                  %501 = vst [vmem:[%s475 + $0x30] sm:$0xf] %v500
                  %v502 = vld [vmem:[%s474 + $0x34] sm:$0xf]
                  %503 = vst [vmem:[%s475 + $0x34] sm:$0xf] %v502
                  %v504 = vld [vmem:[%s474 + $0x38] sm:$0xf]
                  %505 = vst [vmem:[%s475 + $0x38] sm:$0xf] %v504
                  %v506 = vld [vmem:[%s474 + $0x3c] sm:$0xf]
                  %507 = vst [vmem:[%s475 + $0x3c] sm:$0xf] %v506
                  %v508 = vld [vmem:[%s474 + $0x80] sm:$0xf]
                  %509 = vst [vmem:[%s475 + $0x40] sm:$0xf] %v508
                  %v510 = vld [vmem:[%s474 + $0x84] sm:$0xf]
                  %511 = vst [vmem:[%s475 + $0x44] sm:$0xf] %v510
                  %v512 = vld [vmem:[%s474 + $0x88] sm:$0xf]
                  %513 = vst [vmem:[%s475 + $0x48] sm:$0xf] %v512
                  %v514 = vld [vmem:[%s474 + $0x8c] sm:$0xf]
                  %515 = vst [vmem:[%s475 + $0x4c] sm:$0xf] %v514
                  %v516 = vld [vmem:[%s474 + $0x90] sm:$0xf]
                  %517 = vst [vmem:[%s475 + $0x50] sm:$0xf] %v516
                  %v518 = vld [vmem:[%s474 + $0x94] sm:$0xf]
                  %519 = vst [vmem:[%s475 + $0x54] sm:$0xf] %v518
                  %v520 = vld [vmem:[%s474 + $0x98] sm:$0xf]
                  %521 = vst [vmem:[%s475 + $0x58] sm:$0xf] %v520
                  %v522 = vld [vmem:[%s474 + $0x9c] sm:$0xf]
                  %523 = vst [vmem:[%s475 + $0x5c] sm:$0xf] %v522
                  %v524 = vld [vmem:[%s474 + $0xa0] sm:$0xf]
                  %525 = vst [vmem:[%s475 + $0x60] sm:$0xf] %v524
                  %v526 = vld [vmem:[%s474 + $0xa4] sm:$0xf]
                  %527 = vst [vmem:[%s475 + $0x64] sm:$0xf] %v526
                  %v528 = vld [vmem:[%s474 + $0xa8] sm:$0xf]
                  %529 = vst [vmem:[%s475 + $0x68] sm:$0xf] %v528
                  %v530 = vld [vmem:[%s474 + $0xac] sm:$0xf]
                  %531 = vst [vmem:[%s475 + $0x6c] sm:$0xf] %v530
                  %v532 = vld [vmem:[%s474 + $0xb0] sm:$0xf]
                  %533 = vst [vmem:[%s475 + $0x70] sm:$0xf] %v532
                  %v534 = vld [vmem:[%s474 + $0xb4] sm:$0xf]
                  %535 = vst [vmem:[%s475 + $0x74] sm:$0xf] %v534
                  %v536 = vld [vmem:[%s474 + $0xb8] sm:$0xf]
                  %537 = vst [vmem:[%s475 + $0x78] sm:$0xf] %v536
                  %v538 = vld [vmem:[%s474 + $0xbc] sm:$0xf]
                  %539 = vst [vmem:[%s475 + $0x7c] sm:$0xf] %v538
                $region99: #{transformer_block.3} parent=86 // loop_footer
                  %s473 = sadd.s32 1, %s469
                $region100: #{transformer_block.3} parent=86 // loop_footer_branch
                  %468 = sbr.rel target = $region96
                $region101: #{transformer_block.3} parent=86 // loop_exit
                  _
              $region87: #{transformer_block.3} parent=71 // pred_fallthru
                _
            $region72: #{transformer_block.3} parent=67 // pred_fallthru
              _
            // Predicated region
            $region73: #{transformer_block.3} parent=67 // pred_check
              _
            $region74: #{transformer_block.3} parent=67 // pred_check_branch
              %383 = sbr.rel (0) target = $region76
            $region75: #{transformer_block.3} parent=67 // pred_region
              loop: start=0, step=1, limit=1
              $region77: #{transformer_block.3} parent=75 // loop_pre_header
                _
              $region78: #{transformer_block.3} parent=75 // loop_header
                %s386 = sphi 0, %s390
                %p387 = scmp.ge.s32.totalorder %s386, 1
                %s391 = sphi %s377, %s377
                %s392 = sphi %s374, %s374
              $region79: #{transformer_block.3} parent=75 // loop_header_branch
                %389 = sbr.rel (%p387) target = $region83
              $region80: #{transformer_block.3} parent=75 // loop_body
                %v393 = vld [vmem:[%s391] sm:$0xf]
                %394 = vst [vmem:[%s392] sm:$0xf] %v393
                %v395 = vld [vmem:[%s391 + $0x4] sm:$0xf]
                %396 = vst [vmem:[%s392 + $0x4] sm:$0xf] %v395
                %v397 = vld [vmem:[%s391 + $0x8] sm:$0xf]
                %398 = vst [vmem:[%s392 + $0x8] sm:$0xf] %v397
                %v399 = vld [vmem:[%s391 + $0xc] sm:$0xf]
                %400 = vst [vmem:[%s392 + $0xc] sm:$0xf] %v399
                %v401 = vld [vmem:[%s391 + $0x10] sm:$0xf]
                %402 = vst [vmem:[%s392 + $0x10] sm:$0xf] %v401
                %v403 = vld [vmem:[%s391 + $0x14] sm:$0xf]
                %404 = vst [vmem:[%s392 + $0x14] sm:$0xf] %v403
                %v405 = vld [vmem:[%s391 + $0x18] sm:$0xf]
                %406 = vst [vmem:[%s392 + $0x18] sm:$0xf] %v405
                %v407 = vld [vmem:[%s391 + $0x1c] sm:$0xf]
                %408 = vst [vmem:[%s392 + $0x1c] sm:$0xf] %v407
                %v409 = vld [vmem:[%s391 + $0x20] sm:$0xf]
                %410 = vst [vmem:[%s392 + $0x20] sm:$0xf] %v409
                %v411 = vld [vmem:[%s391 + $0x24] sm:$0xf]
                %412 = vst [vmem:[%s392 + $0x24] sm:$0xf] %v411
                %v413 = vld [vmem:[%s391 + $0x28] sm:$0xf]
                %414 = vst [vmem:[%s392 + $0x28] sm:$0xf] %v413
                %v415 = vld [vmem:[%s391 + $0x2c] sm:$0xf]
                %416 = vst [vmem:[%s392 + $0x2c] sm:$0xf] %v415
                %v417 = vld [vmem:[%s391 + $0x30] sm:$0xf]
                %418 = vst [vmem:[%s392 + $0x30] sm:$0xf] %v417
                %v419 = vld [vmem:[%s391 + $0x34] sm:$0xf]
                %420 = vst [vmem:[%s392 + $0x34] sm:$0xf] %v419
                %v421 = vld [vmem:[%s391 + $0x38] sm:$0xf]
                %422 = vst [vmem:[%s392 + $0x38] sm:$0xf] %v421
                %v423 = vld [vmem:[%s391 + $0x3c] sm:$0xf]
                %424 = vst [vmem:[%s392 + $0x3c] sm:$0xf] %v423
                %v425 = vld [vmem:[%s391 + $0x80] sm:$0xf]
                %426 = vst [vmem:[%s392 + $0x40] sm:$0xf] %v425
                %v427 = vld [vmem:[%s391 + $0x84] sm:$0xf]
                %428 = vst [vmem:[%s392 + $0x44] sm:$0xf] %v427
                %v429 = vld [vmem:[%s391 + $0x88] sm:$0xf]
                %430 = vst [vmem:[%s392 + $0x48] sm:$0xf] %v429
                %v431 = vld [vmem:[%s391 + $0x8c] sm:$0xf]
                %432 = vst [vmem:[%s392 + $0x4c] sm:$0xf] %v431
                %v433 = vld [vmem:[%s391 + $0x90] sm:$0xf]
                %434 = vst [vmem:[%s392 + $0x50] sm:$0xf] %v433
                %v435 = vld [vmem:[%s391 + $0x94] sm:$0xf]
                %436 = vst [vmem:[%s392 + $0x54] sm:$0xf] %v435
                %v437 = vld [vmem:[%s391 + $0x98] sm:$0xf]
                %438 = vst [vmem:[%s392 + $0x58] sm:$0xf] %v437
                %v439 = vld [vmem:[%s391 + $0x9c] sm:$0xf]
                %440 = vst [vmem:[%s392 + $0x5c] sm:$0xf] %v439
                %v441 = vld [vmem:[%s391 + $0xa0] sm:$0xf]
                %442 = vst [vmem:[%s392 + $0x60] sm:$0xf] %v441
                %v443 = vld [vmem:[%s391 + $0xa4] sm:$0xf]
                %444 = vst [vmem:[%s392 + $0x64] sm:$0xf] %v443
                %v445 = vld [vmem:[%s391 + $0xa8] sm:$0xf]
                %446 = vst [vmem:[%s392 + $0x68] sm:$0xf] %v445
                %v447 = vld [vmem:[%s391 + $0xac] sm:$0xf]
                %448 = vst [vmem:[%s392 + $0x6c] sm:$0xf] %v447
                %v449 = vld [vmem:[%s391 + $0xb0] sm:$0xf]
                %450 = vst [vmem:[%s392 + $0x70] sm:$0xf] %v449
                %v451 = vld [vmem:[%s391 + $0xb4] sm:$0xf]
                %452 = vst [vmem:[%s392 + $0x74] sm:$0xf] %v451
                %v453 = vld [vmem:[%s391 + $0xb8] sm:$0xf]
                %454 = vst [vmem:[%s392 + $0x78] sm:$0xf] %v453
                %v455 = vld [vmem:[%s391 + $0xbc] sm:$0xf]
                %456 = vst [vmem:[%s392 + $0x7c] sm:$0xf] %v455
              $region81: #{transformer_block.3} parent=75 // loop_footer
                %s390 = sadd.s32 1, %s386
              $region82: #{transformer_block.3} parent=75 // loop_footer_branch
                %385 = sbr.rel target = $region78
              $region83: #{transformer_block.3} parent=75 // loop_exit
                _
            $region76: #{transformer_block.3} parent=67 // pred_fallthru
              _
          $region68: #{transformer_block.3} parent=63 // pred_fallthru
            _
          %540 = vnop
        $region64: #{transformer_block.3} parent=55 // pred_fallthru
          _
      $region56: #{transformer_block.3} parent=5 // pred_fallthru
        _
      %p541 = scmp.le.s32.totalorder 1, %s21
      %p542 = scmp.lt.s32.totalorder %s21, 3
      %p543 = pnand %p541, %p542
      %p544 = pneg %p543
      // Predicated region
      $region102: #{transformer_block.3} parent=5 // pred_check
        _
      $region103: #{transformer_block.3} parent=5 // pred_check_branch
        %546 = sbr.rel (%p543) target = $region105
      $region104: #{transformer_block.3} parent=5 // pred_region
        %s547 = ssub.s32 %s21, 1
        %s548 = sand.u32 %s60, 1
        %s549 = sand.u32 %s60, 1
        %s550 = smul.addr %s549, 128
        %s551 = scalar_lea.vmem [#allocation2], %s550
        // Predicated region
        $region106: #{transformer_block.3} parent=104 // pred_check
          %p552 = pneg %p73
        $region107: #{transformer_block.3} parent=104 // pred_check_branch
          %554 = sbr.rel (%p552) target = $region109
        $region108: #{transformer_block.3} parent=104 // pred_region
          _
        $region109: #{transformer_block.3} parent=104 // pred_fallthru
          _
        %s555 = smul.u32 16, %s26
        %p556 = scmp.lt.s32.totalorder %s555, 31
        %s557 = scalar_select %p556, %s555, 31
        %s558 = smul.addr %s557, 2
        %s559 = smul.addr %s558, 8
        %s560 = scalar_lea.vmem %s0, %s559
        %p561 = pneg %p47
        %p562 = pneg %p44
        %s563 = sand.u32 %s60, 1
        %s564 = sand.u32 %s60, 1
        %s565 = smul.addr %s564, 128
        %s566 = scalar_lea.vmem [#allocation2], %s565
        %p567 = pneg %p73
        %p568 = pneg %p70
        %p569 = pneg %p94
        %p570 = pneg %p91
        %p571 = pneg %p115
        %p572 = pneg %p112
        %p573 = pneg %p136
        %p574 = pneg %p133
        %p575 = pneg %p157
        %p576 = pneg %p154
        %p577 = pneg %p178
        %p578 = pneg %p175
        %p579 = pneg %p199
        %p580 = pneg %p196
        %p581 = pneg %p220
        %p582 = pneg %p217
        %p583 = pneg %p241
        %p584 = pneg %p238
        %p585 = pneg %p262
        %p586 = pneg %p259
        %p587 = pneg %p283
        %p588 = pneg %p280
        %p589 = pneg %p309
        %p590 = pneg %p306
        %s591 = sand.u32 %s296, 1
        %s592 = scalar_lea.sflag [#allocation4], %s591
        %s593 = sand.u32 %s296, 1
        %s594 = smul.addr %s593, 256
        %s595 = scalar_lea.vmem [#allocation3], %s594
        %s596 = smul.u32 16, %s26
        %p597 = scmp.lt.s32.totalorder %s596, 31
        %s598 = scalar_select %p597, %s596, 31
        %s599 = smul.addr %s598, 2
        %s600 = smul.addr %s599, 8
        %s601 = scalar_lea.vmem %s0, %s600
        %s602 = smul.u32 16, %s26
        %s603 = smul.u32 16, %s26
        %s604 = smul.u32 16, %s26
        %v606 = vld [vmem:[%s551] sm:$0xf]
        %v607 = vld [vmem:[%s551 + $0x4] sm:$0xf]
        %v608 = vld [vmem:[%s551 + $0x8] sm:$0xf]
        %v609 = vld [vmem:[%s551 + $0xc] sm:$0xf]
        %v610 = vld [vmem:[%s551 + $0x10] sm:$0xf]
        %v611 = vld [vmem:[%s551 + $0x14] sm:$0xf]
        %v612 = vld [vmem:[%s551 + $0x18] sm:$0xf]
        %v613 = vld [vmem:[%s551 + $0x1c] sm:$0xf]
        %v614 = vld [vmem:[%s551 + $0x20] sm:$0xf]
        %v615 = vld [vmem:[%s551 + $0x24] sm:$0xf]
        %v616 = vld [vmem:[%s551 + $0x28] sm:$0xf]
        %v617 = vld [vmem:[%s551 + $0x2c] sm:$0xf]
        %v618 = vld [vmem:[%s551 + $0x30] sm:$0xf]
        %v619 = vld [vmem:[%s551 + $0x34] sm:$0xf]
        %v620 = vld [vmem:[%s551 + $0x38] sm:$0xf]
        %v621 = vld [vmem:[%s551 + $0x3c] sm:$0xf]
        %v622 = vld [vmem:[%s551 + $0x40] sm:$0xf]
        %v623 = vld [vmem:[%s551 + $0x44] sm:$0xf]
        %v624 = vld [vmem:[%s551 + $0x48] sm:$0xf]
        %v625 = vld [vmem:[%s551 + $0x4c] sm:$0xf]
        %v626 = vld [vmem:[%s551 + $0x50] sm:$0xf]
        %v627 = vld [vmem:[%s551 + $0x54] sm:$0xf]
        %v628 = vld [vmem:[%s551 + $0x58] sm:$0xf]
        %v629 = vld [vmem:[%s551 + $0x5c] sm:$0xf]
        %v630 = vld [vmem:[%s551 + $0x60] sm:$0xf]
        %v631 = vld [vmem:[%s551 + $0x64] sm:$0xf]
        %v632 = vld [vmem:[%s551 + $0x68] sm:$0xf]
        %v633 = vld [vmem:[%s551 + $0x6c] sm:$0xf]
        %v634 = vld [vmem:[%s551 + $0x70] sm:$0xf]
        %v635 = vld [vmem:[%s551 + $0x74] sm:$0xf]
        %v636 = vld [vmem:[%s551 + $0x78] sm:$0xf]
        %v637 = vld [vmem:[%s551 + $0x7c] sm:$0xf]
        %v638 = vld [vmem:[%s2] sm:$0xf]
        %v639 = vld [vmem:[%s2 + $0x4] sm:$0xf]
        %v640 = vld [vmem:[%s2 + $0x8] sm:$0xf]
        %v641 = vld [vmem:[%s2 + $0xc] sm:$0xf]
        %v642 = vld [vmem:[%s2 + $0x10] sm:$0xf]
        %v643 = vld [vmem:[%s2 + $0x14] sm:$0xf]
        %v644 = vld [vmem:[%s2 + $0x18] sm:$0xf]
        %v645 = vld [vmem:[%s2 + $0x1c] sm:$0xf]
        %v646 = vld [vmem:[%s2 + $0x20] sm:$0xf]
        %v647 = vld [vmem:[%s2 + $0x24] sm:$0xf]
        %v648 = vld [vmem:[%s2 + $0x28] sm:$0xf]
        %v649 = vld [vmem:[%s2 + $0x2c] sm:$0xf]
        %v650 = vld [vmem:[%s2 + $0x30] sm:$0xf]
        %v651 = vld [vmem:[%s2 + $0x34] sm:$0xf]
        %v652 = vld [vmem:[%s2 + $0x38] sm:$0xf]
        %v653 = vld [vmem:[%s2 + $0x3c] sm:$0xf]
        %v654 = vld [vmem:[%s2 + $0x40] sm:$0xf]
        %v655 = vld [vmem:[%s2 + $0x44] sm:$0xf]
        %v656 = vld [vmem:[%s2 + $0x48] sm:$0xf]
        %v657 = vld [vmem:[%s2 + $0x4c] sm:$0xf]
        %v658 = vld [vmem:[%s2 + $0x50] sm:$0xf]
        %v659 = vld [vmem:[%s2 + $0x54] sm:$0xf]
        %v660 = vld [vmem:[%s2 + $0x58] sm:$0xf]
        %v661 = vld [vmem:[%s2 + $0x5c] sm:$0xf]
        %v662 = vld [vmem:[%s2 + $0x60] sm:$0xf]
        %v663 = vld [vmem:[%s2 + $0x64] sm:$0xf]
        %v664 = vld [vmem:[%s2 + $0x68] sm:$0xf]
        %v665 = vld [vmem:[%s2 + $0x6c] sm:$0xf]
        %v666 = vld [vmem:[%s2 + $0x70] sm:$0xf]
        %v667 = vld [vmem:[%s2 + $0x74] sm:$0xf]
        %v668 = vld [vmem:[%s2 + $0x78] sm:$0xf]
        %v669 = vld [vmem:[%s2 + $0x7c] sm:$0xf]
        %v670 = vld [vmem:[%s2 + $0x80] sm:$0xf]
        %v671 = vld [vmem:[%s2 + $0x84] sm:$0xf]
        %v672 = vld [vmem:[%s2 + $0x88] sm:$0xf]
        %v673 = vld [vmem:[%s2 + $0x8c] sm:$0xf]
        %v674 = vld [vmem:[%s2 + $0x90] sm:$0xf]
        %v675 = vld [vmem:[%s2 + $0x94] sm:$0xf]
        %v676 = vld [vmem:[%s2 + $0x98] sm:$0xf]
        %v677 = vld [vmem:[%s2 + $0x9c] sm:$0xf]
        %v678 = vld [vmem:[%s2 + $0xa0] sm:$0xf]
        %v679 = vld [vmem:[%s2 + $0xa4] sm:$0xf]
        %v680 = vld [vmem:[%s2 + $0xa8] sm:$0xf]
        %v681 = vld [vmem:[%s2 + $0xac] sm:$0xf]
        %v682 = vld [vmem:[%s2 + $0xb0] sm:$0xf]
        %v683 = vld [vmem:[%s2 + $0xb4] sm:$0xf]
        %v684 = vld [vmem:[%s2 + $0xb8] sm:$0xf]
        %v685 = vld [vmem:[%s2 + $0xbc] sm:$0xf]
        %v686 = vld [vmem:[%s2 + $0xc0] sm:$0xf]
        %v687 = vld [vmem:[%s2 + $0xc4] sm:$0xf]
        %v688 = vld [vmem:[%s2 + $0xc8] sm:$0xf]
        %v689 = vld [vmem:[%s2 + $0xcc] sm:$0xf]
        %v690 = vld [vmem:[%s2 + $0xd0] sm:$0xf]
        %v691 = vld [vmem:[%s2 + $0xd4] sm:$0xf]
        %v692 = vld [vmem:[%s2 + $0xd8] sm:$0xf]
        %v693 = vld [vmem:[%s2 + $0xdc] sm:$0xf]
        %v694 = vld [vmem:[%s2 + $0xe0] sm:$0xf]
        %v695 = vld [vmem:[%s2 + $0xe4] sm:$0xf]
        %v696 = vld [vmem:[%s2 + $0xe8] sm:$0xf]
        %v697 = vld [vmem:[%s2 + $0xec] sm:$0xf]
        %v698 = vld [vmem:[%s2 + $0xf0] sm:$0xf]
        %v699 = vld [vmem:[%s2 + $0xf4] sm:$0xf]
        %v700 = vld [vmem:[%s2 + $0xf8] sm:$0xf]
        %v701 = vld [vmem:[%s2 + $0xfc] sm:$0xf]
        %v702 = vld [vmem:[%s3] sm:$0xf]
        %v703 = vld [vmem:[%s3 + $0x4] sm:$0xf]
        %v704 = vld [vmem:[%s3 + $0x8] sm:$0xf]
        %v705 = vld [vmem:[%s3 + $0xc] sm:$0xf]
        %v706 = vld [vmem:[%s3 + $0x10] sm:$0xf]
        %v707 = vld [vmem:[%s3 + $0x14] sm:$0xf]
        %v708 = vld [vmem:[%s3 + $0x18] sm:$0xf]
        %v709 = vld [vmem:[%s3 + $0x1c] sm:$0xf]
        %v710 = vld [vmem:[%s3 + $0x20] sm:$0xf]
        %v711 = vld [vmem:[%s3 + $0x24] sm:$0xf]
        %v712 = vld [vmem:[%s3 + $0x28] sm:$0xf]
        %v713 = vld [vmem:[%s3 + $0x2c] sm:$0xf]
        %v714 = vld [vmem:[%s3 + $0x30] sm:$0xf]
        %v715 = vld [vmem:[%s3 + $0x34] sm:$0xf]
        %v716 = vld [vmem:[%s3 + $0x38] sm:$0xf]
        %v717 = vld [vmem:[%s3 + $0x3c] sm:$0xf]
        %v718 = vld [vmem:[%s3 + $0x40] sm:$0xf]
        %v719 = vld [vmem:[%s3 + $0x44] sm:$0xf]
        %v720 = vld [vmem:[%s3 + $0x48] sm:$0xf]
        %v721 = vld [vmem:[%s3 + $0x4c] sm:$0xf]
        %v722 = vld [vmem:[%s3 + $0x50] sm:$0xf]
        %v723 = vld [vmem:[%s3 + $0x54] sm:$0xf]
        %v724 = vld [vmem:[%s3 + $0x58] sm:$0xf]
        %v725 = vld [vmem:[%s3 + $0x5c] sm:$0xf]
        %v726 = vld [vmem:[%s3 + $0x60] sm:$0xf]
        %v727 = vld [vmem:[%s3 + $0x64] sm:$0xf]
        %v728 = vld [vmem:[%s3 + $0x68] sm:$0xf]
        %v729 = vld [vmem:[%s3 + $0x6c] sm:$0xf]
        %v730 = vld [vmem:[%s3 + $0x70] sm:$0xf]
        %v731 = vld [vmem:[%s3 + $0x74] sm:$0xf]
        %v732 = vld [vmem:[%s3 + $0x78] sm:$0xf]
        %v733 = vld [vmem:[%s3 + $0x7c] sm:$0xf]
        %v734 = vld [vmem:[%s3 + $0x80] sm:$0xf]
        %v735 = vld [vmem:[%s3 + $0x84] sm:$0xf]
        %v736 = vld [vmem:[%s3 + $0x88] sm:$0xf]
        %v737 = vld [vmem:[%s3 + $0x8c] sm:$0xf]
        %v738 = vld [vmem:[%s3 + $0x90] sm:$0xf]
        %v739 = vld [vmem:[%s3 + $0x94] sm:$0xf]
        %v740 = vld [vmem:[%s3 + $0x98] sm:$0xf]
        %v741 = vld [vmem:[%s3 + $0x9c] sm:$0xf]
        %v742 = vld [vmem:[%s3 + $0xa0] sm:$0xf]
        %v743 = vld [vmem:[%s3 + $0xa4] sm:$0xf]
        %v744 = vld [vmem:[%s3 + $0xa8] sm:$0xf]
        %v745 = vld [vmem:[%s3 + $0xac] sm:$0xf]
        %v746 = vld [vmem:[%s3 + $0xb0] sm:$0xf]
        %v747 = vld [vmem:[%s3 + $0xb4] sm:$0xf]
        %v748 = vld [vmem:[%s3 + $0xb8] sm:$0xf]
        %v749 = vld [vmem:[%s3 + $0xbc] sm:$0xf]
        %v750 = vld [vmem:[%s3 + $0xc0] sm:$0xf]
        %v751 = vld [vmem:[%s3 + $0xc4] sm:$0xf]
        %v752 = vld [vmem:[%s3 + $0xc8] sm:$0xf]
        %v753 = vld [vmem:[%s3 + $0xcc] sm:$0xf]
        %v754 = vld [vmem:[%s3 + $0xd0] sm:$0xf]
        %v755 = vld [vmem:[%s3 + $0xd4] sm:$0xf]
        %v756 = vld [vmem:[%s3 + $0xd8] sm:$0xf]
        %v757 = vld [vmem:[%s3 + $0xdc] sm:$0xf]
        %v758 = vld [vmem:[%s3 + $0xe0] sm:$0xf]
        %v759 = vld [vmem:[%s3 + $0xe4] sm:$0xf]
        %v760 = vld [vmem:[%s3 + $0xe8] sm:$0xf]
        %v761 = vld [vmem:[%s3 + $0xec] sm:$0xf]
        %v762 = vld [vmem:[%s3 + $0xf0] sm:$0xf]
        %v763 = vld [vmem:[%s3 + $0xf4] sm:$0xf]
        %v764 = vld [vmem:[%s3 + $0xf8] sm:$0xf]
        %v765 = vld [vmem:[%s3 + $0xfc] sm:$0xf]
        %v782 = vunpack.c.l.b16 %v606
        %v783 = vunpack.c.l.b16 %v607
        %v784 = vunpack.c.l.b16 %v608
        %v785 = vunpack.c.l.b16 %v609
        %v786 = vunpack.c.l.b16 %v610
        %v787 = vunpack.c.l.b16 %v611
        %v788 = vunpack.c.l.b16 %v612
        %v789 = vunpack.c.l.b16 %v613
        %v790 = vunpack.c.l.b16 %v614
        %v791 = vunpack.c.l.b16 %v615
        %v792 = vunpack.c.l.b16 %v616
        %v793 = vunpack.c.l.b16 %v617
        %v794 = vunpack.c.l.b16 %v618
        %v795 = vunpack.c.l.b16 %v619
        %v796 = vunpack.c.l.b16 %v620
        %v797 = vunpack.c.l.b16 %v621
        %v798 = vpack.c.b16 %v783, %v782
        %v799 = vpack.c.b16 %v785, %v784
        %v800 = vpack.c.b16 %v787, %v786
        %v801 = vpack.c.b16 %v789, %v788
        %v802 = vpack.c.b16 %v791, %v790
        %v803 = vpack.c.b16 %v793, %v792
        %v804 = vpack.c.b16 %v795, %v794
        %v805 = vpack.c.b16 %v797, %v796
        %v846 = vunpack.c.l.b16 %v638
        %v847 = vunpack.c.l.b16 %v639
        %v848 = vunpack.c.l.b16 %v640
        %v849 = vunpack.c.l.b16 %v641
        %v850 = vunpack.c.l.b16 %v642
        %v851 = vunpack.c.l.b16 %v643
        %v852 = vunpack.c.l.b16 %v644
        %v853 = vunpack.c.l.b16 %v645
        %v854 = vunpack.c.l.b16 %v646
        %v855 = vunpack.c.l.b16 %v647
        %v856 = vunpack.c.l.b16 %v648
        %v857 = vunpack.c.l.b16 %v649
        %v858 = vunpack.c.l.b16 %v650
        %v859 = vunpack.c.l.b16 %v651
        %v860 = vunpack.c.l.b16 %v652
        %v861 = vunpack.c.l.b16 %v653
        %v862 = vunpack.c.l.b16 %v654
        %v863 = vunpack.c.l.b16 %v655
        %v864 = vunpack.c.l.b16 %v656
        %v865 = vunpack.c.l.b16 %v657
        %v866 = vunpack.c.l.b16 %v658
        %v867 = vunpack.c.l.b16 %v659
        %v868 = vunpack.c.l.b16 %v660
        %v869 = vunpack.c.l.b16 %v661
        %v870 = vunpack.c.l.b16 %v662
        %v871 = vunpack.c.l.b16 %v663
        %v872 = vunpack.c.l.b16 %v664
        %v873 = vunpack.c.l.b16 %v665
        %v874 = vunpack.c.l.b16 %v666
        %v875 = vunpack.c.l.b16 %v667
        %v876 = vunpack.c.l.b16 %v668
        %v877 = vunpack.c.l.b16 %v669
        %v878 = vpack.c.b16 %v847, %v846
        %v879 = vpack.c.b16 %v849, %v848
        %v880 = vpack.c.b16 %v851, %v850
        %v881 = vpack.c.b16 %v853, %v852
        %v882 = vpack.c.b16 %v855, %v854
        %v883 = vpack.c.b16 %v857, %v856
        %v884 = vpack.c.b16 %v859, %v858
        %v885 = vpack.c.b16 %v861, %v860
        %v886 = vpack.c.b16 %v863, %v862
        %v887 = vpack.c.b16 %v865, %v864
        %v888 = vpack.c.b16 %v867, %v866
        %v889 = vpack.c.b16 %v869, %v868
        %v890 = vpack.c.b16 %v871, %v870
        %v891 = vpack.c.b16 %v873, %v872
        %v892 = vpack.c.b16 %v875, %v874
        %v893 = vpack.c.b16 %v877, %v876
        %910 = vmatprep.subr.bf16.mxu0 0
        %911 = vmatpush1.bf16.xpose.msra.mxu0 %v878
        %912 = vmatprep.subr.bf16.mxu0 0
        %913 = vmatpush1.bf16.xpose.msra.mxu0 %v879
        %914 = vmatprep.subr.bf16.mxu0 0
        %915 = vmatpush1.bf16.xpose.msra.mxu0 %v880
        %916 = vmatprep.subr.bf16.mxu0 0
        %917 = vmatpush1.bf16.xpose.msra.mxu0 %v881
        %918 = vmatprep.subr.bf16.mxu0 0
        %919 = vmatpush1.bf16.xpose.msra.mxu0 %v882
        %920 = vmatprep.subr.bf16.mxu0 0
        %921 = vmatpush1.bf16.xpose.msra.mxu0 %v883
        %922 = vmatprep.subr.bf16.mxu0 0
        %923 = vmatpush1.bf16.xpose.msra.mxu0 %v884
        %924 = vmatprep.subr.bf16.mxu0 0
        %925 = vmatpush1.bf16.xpose.msra.mxu0 %v885
        %926 = vmatprep.subr.bf16.mxu0 0
        %927 = vmatpush1.bf16.xpose.msra.mxu0 %v886
        %928 = vmatprep.subr.bf16.mxu0 0
        %929 = vmatpush1.bf16.xpose.msra.mxu0 %v887
        %930 = vmatprep.subr.bf16.mxu0 0
        %931 = vmatpush1.bf16.xpose.msra.mxu0 %v888
        %932 = vmatprep.subr.bf16.mxu0 0
        %933 = vmatpush1.bf16.xpose.msra.mxu0 %v889
        %934 = vmatprep.subr.bf16.mxu0 0
        %935 = vmatpush1.bf16.xpose.msra.mxu0 %v890
        %936 = vmatprep.subr.bf16.mxu0 0
        %937 = vmatpush1.bf16.xpose.msra.mxu0 %v891
        %938 = vmatprep.subr.bf16.mxu0 0
        %939 = vmatpush1.bf16.xpose.msra.mxu0 %v892
        %940 = vmatprep.subr.bf16.mxu0 0
        %941 = vmatpush1.bf16.xpose.msra.mxu0 %v893
        %942 = vmatprep.mubr.bf16.mxu0 0
        %943 = vmatmul.mubr.bf16.gmra.mrb[0].mxu0 %v798
        %v944 = vpop.f32.mrb[0].mxu0
        %v945 = vadd.f32 0.0, %v944
        %v946 = vpop.f32.mrb[0].mxu0
        %v947 = vadd.f32 0.0, %v946
        %v948 = vpop.f32.mrb[0].mxu0
        %v949 = vadd.f32 0.0, %v948
        %v950 = vpop.f32.mrb[0].mxu0
        %v951 = vadd.f32 0.0, %v950
        %952 = vmatprep.mubr.bf16.mxu0 0
        %953 = vmatmul.mubr.bf16.gmra.mrb[0].mxu0 %v799
        %v954 = vpop.f32.mrb[0].mxu0
        %v955 = vadd.f32 0.0, %v954
        %v956 = vpop.f32.mrb[0].mxu0
        %v957 = vadd.f32 0.0, %v956
        %v958 = vpop.f32.mrb[0].mxu0
        %v959 = vadd.f32 0.0, %v958
        %v960 = vpop.f32.mrb[0].mxu0
        %v961 = vadd.f32 0.0, %v960
        %962 = vmatprep.mubr.bf16.mxu0 0
        %963 = vmatmul.mubr.bf16.gmra.mrb[0].mxu0 %v800
        %v964 = vpop.f32.mrb[0].mxu0
        %v965 = vadd.f32 0.0, %v964
        %v966 = vpop.f32.mrb[0].mxu0
        %v967 = vadd.f32 0.0, %v966
        %v968 = vpop.f32.mrb[0].mxu0
        %v969 = vadd.f32 0.0, %v968
        %v970 = vpop.f32.mrb[0].mxu0
        %v971 = vadd.f32 0.0, %v970
        %972 = vmatprep.mubr.bf16.mxu0 0
        %973 = vmatmul.mubr.bf16.gmra.mrb[0].mxu0 %v801
        %v974 = vpop.f32.mrb[0].mxu0
        %v975 = vadd.f32 0.0, %v974
        %v976 = vpop.f32.mrb[0].mxu0
        %v977 = vadd.f32 0.0, %v976
        %v978 = vpop.f32.mrb[0].mxu0
        %v979 = vadd.f32 0.0, %v978
        %v980 = vpop.f32.mrb[0].mxu0
        %v981 = vadd.f32 0.0, %v980
        %982 = vmatprep.mubr.bf16.mxu0 0
        %983 = vmatmul.mubr.bf16.gmra.mrb[0].mxu0 %v802
        %v984 = vpop.f32.mrb[0].mxu0
        %v985 = vadd.f32 0.0, %v984
        %v986 = vpop.f32.mrb[0].mxu0
        %v987 = vadd.f32 0.0, %v986
        %v988 = vpop.f32.mrb[0].mxu0
        %v989 = vadd.f32 0.0, %v988
        %v990 = vpop.f32.mrb[0].mxu0
        %v991 = vadd.f32 0.0, %v990
        %992 = vmatprep.mubr.bf16.mxu0 0
        %993 = vmatmul.mubr.bf16.gmra.mrb[0].mxu0 %v803
        %v994 = vpop.f32.mrb[0].mxu0
        %v995 = vadd.f32 0.0, %v994
        %v996 = vpop.f32.mrb[0].mxu0
        %v997 = vadd.f32 0.0, %v996
        %v998 = vpop.f32.mrb[0].mxu0
        %v999 = vadd.f32 0.0, %v998
        %v1000 = vpop.f32.mrb[0].mxu0
        %v1001 = vadd.f32 0.0, %v1000
        %1002 = vmatprep.mubr.bf16.mxu0 0
        %1003 = vmatmul.mubr.bf16.gmra.mrb[0].mxu0 %v804
        %v1004 = vpop.f32.mrb[0].mxu0
        %v1005 = vadd.f32 0.0, %v1004
        %v1006 = vpop.f32.mrb[0].mxu0
        %v1007 = vadd.f32 0.0, %v1006
        %v1008 = vpop.f32.mrb[0].mxu0
        %v1009 = vadd.f32 0.0, %v1008
        %v1010 = vpop.f32.mrb[0].mxu0
        %v1011 = vadd.f32 0.0, %v1010
        %1012 = vmatprep.mubr.bf16.mxu0 0
        %1013 = vmatmul.mubr.bf16.gmra.mrb[0].mxu0 %v805
        %v1014 = vpop.f32.mrb[0].mxu0
        %v1015 = vadd.f32 0.0, %v1014
        %v1016 = vpop.f32.mrb[0].mxu0
        %v1017 = vadd.f32 0.0, %v1016
        %v1018 = vpop.f32.mrb[0].mxu0
        %v1019 = vadd.f32 0.0, %v1018
        %v1020 = vpop.f32.mrb[0].mxu0
        %v1021 = vadd.f32 0.0, %v1020
        %1022 = vdwg.mxu0
        %v1039 = vunpack.c.l.b16 %v622
        %v1040 = vunpack.c.l.b16 %v623
        %v1041 = vunpack.c.l.b16 %v624
        %v1042 = vunpack.c.l.b16 %v625
        %v1043 = vunpack.c.l.b16 %v626
        %v1044 = vunpack.c.l.b16 %v627
        %v1045 = vunpack.c.l.b16 %v628
        %v1046 = vunpack.c.l.b16 %v629
        %v1047 = vunpack.c.l.b16 %v630
        %v1048 = vunpack.c.l.b16 %v631
        %v1049 = vunpack.c.l.b16 %v632
        %v1050 = vunpack.c.l.b16 %v633
        %v1051 = vunpack.c.l.b16 %v634
        %v1052 = vunpack.c.l.b16 %v635
        %v1053 = vunpack.c.l.b16 %v636
        %v1054 = vunpack.c.l.b16 %v637
        %v1055 = vpack.c.b16 %v1040, %v1039
        %v1056 = vpack.c.b16 %v1042, %v1041
        %v1057 = vpack.c.b16 %v1044, %v1043
        %v1058 = vpack.c.b16 %v1046, %v1045
        %v1059 = vpack.c.b16 %v1048, %v1047
        %v1060 = vpack.c.b16 %v1050, %v1049
        %v1061 = vpack.c.b16 %v1052, %v1051
        %v1062 = vpack.c.b16 %v1054, %v1053
        %v1103 = vunpack.c.l.b16 %v670
        %v1104 = vunpack.c.l.b16 %v671
        %v1105 = vunpack.c.l.b16 %v672
        %v1106 = vunpack.c.l.b16 %v673
        %v1107 = vunpack.c.l.b16 %v674
        %v1108 = vunpack.c.l.b16 %v675
        %v1109 = vunpack.c.l.b16 %v676
        %v1110 = vunpack.c.l.b16 %v677
        %v1111 = vunpack.c.l.b16 %v678
        %v1112 = vunpack.c.l.b16 %v679
        %v1113 = vunpack.c.l.b16 %v680
        %v1114 = vunpack.c.l.b16 %v681
        %v1115 = vunpack.c.l.b16 %v682
        %v1116 = vunpack.c.l.b16 %v683
        %v1117 = vunpack.c.l.b16 %v684
        %v1118 = vunpack.c.l.b16 %v685
        %v1119 = vunpack.c.l.b16 %v686
        %v1120 = vunpack.c.l.b16 %v687
        %v1121 = vunpack.c.l.b16 %v688
        %v1122 = vunpack.c.l.b16 %v689
        %v1123 = vunpack.c.l.b16 %v690
        %v1124 = vunpack.c.l.b16 %v691
        %v1125 = vunpack.c.l.b16 %v692
        %v1126 = vunpack.c.l.b16 %v693
        %v1127 = vunpack.c.l.b16 %v694
        %v1128 = vunpack.c.l.b16 %v695
        %v1129 = vunpack.c.l.b16 %v696
        %v1130 = vunpack.c.l.b16 %v697
        %v1131 = vunpack.c.l.b16 %v698
        %v1132 = vunpack.c.l.b16 %v699
        %v1133 = vunpack.c.l.b16 %v700
        %v1134 = vunpack.c.l.b16 %v701
        %v1135 = vpack.c.b16 %v1104, %v1103
        %v1136 = vpack.c.b16 %v1106, %v1105
        %v1137 = vpack.c.b16 %v1108, %v1107
        %v1138 = vpack.c.b16 %v1110, %v1109
        %v1139 = vpack.c.b16 %v1112, %v1111
        %v1140 = vpack.c.b16 %v1114, %v1113
        %v1141 = vpack.c.b16 %v1116, %v1115
        %v1142 = vpack.c.b16 %v1118, %v1117
        %v1143 = vpack.c.b16 %v1120, %v1119
        %v1144 = vpack.c.b16 %v1122, %v1121
        %v1145 = vpack.c.b16 %v1124, %v1123
        %v1146 = vpack.c.b16 %v1126, %v1125
        %v1147 = vpack.c.b16 %v1128, %v1127
        %v1148 = vpack.c.b16 %v1130, %v1129
        %v1149 = vpack.c.b16 %v1132, %v1131
        %v1150 = vpack.c.b16 %v1134, %v1133
        %1167 = vmatprep.subr.bf16.mxu0 0
        %1168 = vmatpush1.bf16.xpose.msra.mxu0 %v1135
        %1169 = vmatprep.subr.bf16.mxu0 0
        %1170 = vmatpush1.bf16.xpose.msra.mxu0 %v1136
        %1171 = vmatprep.subr.bf16.mxu0 0
        %1172 = vmatpush1.bf16.xpose.msra.mxu0 %v1137
        %1173 = vmatprep.subr.bf16.mxu0 0
        %1174 = vmatpush1.bf16.xpose.msra.mxu0 %v1138
        %1175 = vmatprep.subr.bf16.mxu0 0
        %1176 = vmatpush1.bf16.xpose.msra.mxu0 %v1139
        %1177 = vmatprep.subr.bf16.mxu0 0
        %1178 = vmatpush1.bf16.xpose.msra.mxu0 %v1140
        %1179 = vmatprep.subr.bf16.mxu0 0
        %1180 = vmatpush1.bf16.xpose.msra.mxu0 %v1141
        %1181 = vmatprep.subr.bf16.mxu0 0
        %1182 = vmatpush1.bf16.xpose.msra.mxu0 %v1142
        %1183 = vmatprep.subr.bf16.mxu0 0
        %1184 = vmatpush1.bf16.xpose.msra.mxu0 %v1143
        %1185 = vmatprep.subr.bf16.mxu0 0
        %1186 = vmatpush1.bf16.xpose.msra.mxu0 %v1144
        %1187 = vmatprep.subr.bf16.mxu0 0
        %1188 = vmatpush1.bf16.xpose.msra.mxu0 %v1145
        %1189 = vmatprep.subr.bf16.mxu0 0
        %1190 = vmatpush1.bf16.xpose.msra.mxu0 %v1146
        %1191 = vmatprep.subr.bf16.mxu0 0
        %1192 = vmatpush1.bf16.xpose.msra.mxu0 %v1147
        %1193 = vmatprep.subr.bf16.mxu0 0
        %1194 = vmatpush1.bf16.xpose.msra.mxu0 %v1148
        %1195 = vmatprep.subr.bf16.mxu0 0
        %1196 = vmatpush1.bf16.xpose.msra.mxu0 %v1149
        %1197 = vmatprep.subr.bf16.mxu0 0
        %1198 = vmatpush1.bf16.xpose.msra.mxu0 %v1150
        %1199 = vmatprep.mubr.bf16.mxu0 0
        %1200 = vmatmul.mubr.bf16.gmra.mrb[0].mxu0 %v1055
        %v1201 = vpop.f32.mrb[0].mxu0
        %v1202 = vadd.f32 0.0, %v1201
        %v1203 = vpop.f32.mrb[0].mxu0
        %v1204 = vadd.f32 0.0, %v1203
        %v1205 = vpop.f32.mrb[0].mxu0
        %v1206 = vadd.f32 0.0, %v1205
        %v1207 = vpop.f32.mrb[0].mxu0
        %v1208 = vadd.f32 0.0, %v1207
        %1209 = vmatprep.mubr.bf16.mxu0 0
        %1210 = vmatmul.mubr.bf16.gmra.mrb[0].mxu0 %v1056
        %v1211 = vpop.f32.mrb[0].mxu0
        %v1212 = vadd.f32 0.0, %v1211
        %v1213 = vpop.f32.mrb[0].mxu0
        %v1214 = vadd.f32 0.0, %v1213
        %v1215 = vpop.f32.mrb[0].mxu0
        %v1216 = vadd.f32 0.0, %v1215
        %v1217 = vpop.f32.mrb[0].mxu0
        %v1218 = vadd.f32 0.0, %v1217
        %1219 = vmatprep.mubr.bf16.mxu0 0
        %1220 = vmatmul.mubr.bf16.gmra.mrb[0].mxu0 %v1057
        %v1221 = vpop.f32.mrb[0].mxu0
        %v1222 = vadd.f32 0.0, %v1221
        %v1223 = vpop.f32.mrb[0].mxu0
        %v1224 = vadd.f32 0.0, %v1223
        %v1225 = vpop.f32.mrb[0].mxu0
        %v1226 = vadd.f32 0.0, %v1225
        %v1227 = vpop.f32.mrb[0].mxu0
        %v1228 = vadd.f32 0.0, %v1227
        %1229 = vmatprep.mubr.bf16.mxu0 0
        %1230 = vmatmul.mubr.bf16.gmra.mrb[0].mxu0 %v1058
        %v1231 = vpop.f32.mrb[0].mxu0
        %v1232 = vadd.f32 0.0, %v1231
        %v1233 = vpop.f32.mrb[0].mxu0
        %v1234 = vadd.f32 0.0, %v1233
        %v1235 = vpop.f32.mrb[0].mxu0
        %v1236 = vadd.f32 0.0, %v1235
        %v1237 = vpop.f32.mrb[0].mxu0
        %v1238 = vadd.f32 0.0, %v1237
        %1239 = vmatprep.mubr.bf16.mxu0 0
        %1240 = vmatmul.mubr.bf16.gmra.mrb[0].mxu0 %v1059
        %v1241 = vpop.f32.mrb[0].mxu0
        %v1242 = vadd.f32 0.0, %v1241
        %v1243 = vpop.f32.mrb[0].mxu0
        %v1244 = vadd.f32 0.0, %v1243
        %v1245 = vpop.f32.mrb[0].mxu0
        %v1246 = vadd.f32 0.0, %v1245
        %v1247 = vpop.f32.mrb[0].mxu0
        %v1248 = vadd.f32 0.0, %v1247
        %1249 = vmatprep.mubr.bf16.mxu0 0
        %1250 = vmatmul.mubr.bf16.gmra.mrb[0].mxu0 %v1060
        %v1251 = vpop.f32.mrb[0].mxu0
        %v1252 = vadd.f32 0.0, %v1251
        %v1253 = vpop.f32.mrb[0].mxu0
        %v1254 = vadd.f32 0.0, %v1253
        %v1255 = vpop.f32.mrb[0].mxu0
        %v1256 = vadd.f32 0.0, %v1255
        %v1257 = vpop.f32.mrb[0].mxu0
        %v1258 = vadd.f32 0.0, %v1257
        %1259 = vmatprep.mubr.bf16.mxu0 0
        %1260 = vmatmul.mubr.bf16.gmra.mrb[0].mxu0 %v1061
        %v1261 = vpop.f32.mrb[0].mxu0
        %v1262 = vadd.f32 0.0, %v1261
        %v1263 = vpop.f32.mrb[0].mxu0
        %v1264 = vadd.f32 0.0, %v1263
        %v1265 = vpop.f32.mrb[0].mxu0
        %v1266 = vadd.f32 0.0, %v1265
        %v1267 = vpop.f32.mrb[0].mxu0
        %v1268 = vadd.f32 0.0, %v1267
        %1269 = vmatprep.mubr.bf16.mxu0 0
        %1270 = vmatmul.mubr.bf16.gmra.mrb[0].mxu0 %v1062
        %v1271 = vpop.f32.mrb[0].mxu0
        %v1272 = vadd.f32 0.0, %v1271
        %v1273 = vpop.f32.mrb[0].mxu0
        %v1274 = vadd.f32 0.0, %v1273
        %v1275 = vpop.f32.mrb[0].mxu0
        %v1276 = vadd.f32 0.0, %v1275
        %v1277 = vpop.f32.mrb[0].mxu0
        %v1278 = vadd.f32 0.0, %v1277
        %1279 = vdwg.mxu0
        %v1280 = vmax.f32 %v945, %v947
        %1281 = vmax.xlane.f32.xlu0 %v1280
        %v1282 = vpop.xlane.xlu0 %1281
        %v1283 = vmax.f32 %v949, %v951
        %1284 = vmax.xlane.f32.xlu0 %v1283
        %v1285 = vpop.xlane.xlu0 %1284
        %v1286 = vmax.f32 %v955, %v957
        %1287 = vmax.xlane.f32.xlu0 %v1286
        %v1288 = vpop.xlane.xlu0 %1287
        %v1289 = vmax.f32 %v959, %v961
        %1290 = vmax.xlane.f32.xlu0 %v1289
        %v1291 = vpop.xlane.xlu0 %1290
        %v1292 = vmax.f32 %v965, %v967
        %1293 = vmax.xlane.f32.xlu0 %v1292
        %v1294 = vpop.xlane.xlu0 %1293
        %v1295 = vmax.f32 %v969, %v971
        %1296 = vmax.xlane.f32.xlu0 %v1295
        %v1297 = vpop.xlane.xlu0 %1296
        %v1298 = vmax.f32 %v975, %v977
        %1299 = vmax.xlane.f32.xlu0 %v1298
        %v1300 = vpop.xlane.xlu0 %1299
        %v1301 = vmax.f32 %v979, %v981
        %1302 = vmax.xlane.f32.xlu0 %v1301
        %v1303 = vpop.xlane.xlu0 %1302
        %v1304 = vmax.f32 %v985, %v987
        %1305 = vmax.xlane.f32.xlu0 %v1304
        %v1306 = vpop.xlane.xlu0 %1305
        %v1307 = vmax.f32 %v989, %v991
        %1308 = vmax.xlane.f32.xlu0 %v1307
        %v1309 = vpop.xlane.xlu0 %1308
        %v1310 = vmax.f32 %v995, %v997
        %1311 = vmax.xlane.f32.xlu0 %v1310
        %v1312 = vpop.xlane.xlu0 %1311
        %v1313 = vmax.f32 %v999, %v1001
        %1314 = vmax.xlane.f32.xlu0 %v1313
        %v1315 = vpop.xlane.xlu0 %1314
        %v1316 = vmax.f32 %v1005, %v1007
        %1317 = vmax.xlane.f32.xlu0 %v1316
        %v1318 = vpop.xlane.xlu0 %1317
        %v1319 = vmax.f32 %v1009, %v1011
        %1320 = vmax.xlane.f32.xlu0 %v1319
        %v1321 = vpop.xlane.xlu0 %1320
        %v1322 = vmax.f32 %v1015, %v1017
        %1323 = vmax.xlane.f32.xlu0 %v1322
        %v1324 = vpop.xlane.xlu0 %1323
        %v1325 = vmax.f32 %v1019, %v1021
        %1326 = vmax.xlane.f32.xlu0 %v1325
        %v1327 = vpop.xlane.xlu0 %1326
        %v1328 = vmax.f32 %v1202, %v1204
        %1329 = vmax.xlane.f32.xlu0 %v1328
        %v1330 = vpop.xlane.xlu0 %1329
        %v1331 = vmax.f32 %v1206, %v1208
        %1332 = vmax.xlane.f32.xlu0 %v1331
        %v1333 = vpop.xlane.xlu0 %1332
        %v1334 = vmax.f32 %v1212, %v1214
        %1335 = vmax.xlane.f32.xlu0 %v1334
        %v1336 = vpop.xlane.xlu0 %1335
        %v1337 = vmax.f32 %v1216, %v1218
        %1338 = vmax.xlane.f32.xlu0 %v1337
        %v1339 = vpop.xlane.xlu0 %1338
        %v1340 = vmax.f32 %v1222, %v1224
        %1341 = vmax.xlane.f32.xlu0 %v1340
        %v1342 = vpop.xlane.xlu0 %1341
        %v1343 = vmax.f32 %v1226, %v1228
        %1344 = vmax.xlane.f32.xlu0 %v1343
        %v1345 = vpop.xlane.xlu0 %1344
        %v1346 = vmax.f32 %v1232, %v1234
        %1347 = vmax.xlane.f32.xlu0 %v1346
        %v1348 = vpop.xlane.xlu0 %1347
        %v1349 = vmax.f32 %v1236, %v1238
        %1350 = vmax.xlane.f32.xlu0 %v1349
        %v1351 = vpop.xlane.xlu0 %1350
        %v1352 = vmax.f32 %v1242, %v1244
        %1353 = vmax.xlane.f32.xlu0 %v1352
        %v1354 = vpop.xlane.xlu0 %1353
        %v1355 = vmax.f32 %v1246, %v1248
        %1356 = vmax.xlane.f32.xlu0 %v1355
        %v1357 = vpop.xlane.xlu0 %1356
        %v1358 = vmax.f32 %v1252, %v1254
        %1359 = vmax.xlane.f32.xlu0 %v1358
        %v1360 = vpop.xlane.xlu0 %1359
        %v1361 = vmax.f32 %v1256, %v1258
        %1362 = vmax.xlane.f32.xlu0 %v1361
        %v1363 = vpop.xlane.xlu0 %1362
        %v1364 = vmax.f32 %v1262, %v1264
        %1365 = vmax.xlane.f32.xlu0 %v1364
        %v1366 = vpop.xlane.xlu0 %1365
        %v1367 = vmax.f32 %v1266, %v1268
        %1368 = vmax.xlane.f32.xlu0 %v1367
        %v1369 = vpop.xlane.xlu0 %1368
        %v1370 = vmax.f32 %v1272, %v1274
        %1371 = vmax.xlane.f32.xlu0 %v1370
        %v1372 = vpop.xlane.xlu0 %1371
        %v1373 = vmax.f32 %v1276, %v1278
        %1374 = vmax.xlane.f32.xlu0 %v1373
        %v1375 = vpop.xlane.xlu0 %1374
        %v1376 = vsub.f32 %v945, %v1282
        %v1377 = vsub.f32 %v947, %v1282
        %v1378 = vsub.f32 %v949, %v1285
        %v1379 = vsub.f32 %v951, %v1285
        %v1380 = vsub.f32 %v955, %v1288
        %v1381 = vsub.f32 %v957, %v1288
        %v1382 = vsub.f32 %v959, %v1291
        %v1383 = vsub.f32 %v961, %v1291
        %v1384 = vsub.f32 %v965, %v1294
        %v1385 = vsub.f32 %v967, %v1294
        %v1386 = vsub.f32 %v969, %v1297
        %v1387 = vsub.f32 %v971, %v1297
        %v1388 = vsub.f32 %v975, %v1300
        %v1389 = vsub.f32 %v977, %v1300
        %v1390 = vsub.f32 %v979, %v1303
        %v1391 = vsub.f32 %v981, %v1303
        %v1392 = vsub.f32 %v985, %v1306
        %v1393 = vsub.f32 %v987, %v1306
        %v1394 = vsub.f32 %v989, %v1309
        %v1395 = vsub.f32 %v991, %v1309
        %v1396 = vsub.f32 %v995, %v1312
        %v1397 = vsub.f32 %v997, %v1312
        %v1398 = vsub.f32 %v999, %v1315
        %v1399 = vsub.f32 %v1001, %v1315
        %v1400 = vsub.f32 %v1005, %v1318
        %v1401 = vsub.f32 %v1007, %v1318
        %v1402 = vsub.f32 %v1009, %v1321
        %v1403 = vsub.f32 %v1011, %v1321
        %v1404 = vsub.f32 %v1015, %v1324
        %v1405 = vsub.f32 %v1017, %v1324
        %v1406 = vsub.f32 %v1019, %v1327
        %v1407 = vsub.f32 %v1021, %v1327
        %v1408 = vsub.f32 %v1202, %v1330
        %v1409 = vsub.f32 %v1204, %v1330
        %v1410 = vsub.f32 %v1206, %v1333
        %v1411 = vsub.f32 %v1208, %v1333
        %v1412 = vsub.f32 %v1212, %v1336
        %v1413 = vsub.f32 %v1214, %v1336
        %v1414 = vsub.f32 %v1216, %v1339
        %v1415 = vsub.f32 %v1218, %v1339
        %v1416 = vsub.f32 %v1222, %v1342
        %v1417 = vsub.f32 %v1224, %v1342
        %v1418 = vsub.f32 %v1226, %v1345
        %v1419 = vsub.f32 %v1228, %v1345
        %v1420 = vsub.f32 %v1232, %v1348
        %v1421 = vsub.f32 %v1234, %v1348
        %v1422 = vsub.f32 %v1236, %v1351
        %v1423 = vsub.f32 %v1238, %v1351
        %v1424 = vsub.f32 %v1242, %v1354
        %v1425 = vsub.f32 %v1244, %v1354
        %v1426 = vsub.f32 %v1246, %v1357
        %v1427 = vsub.f32 %v1248, %v1357
        %v1428 = vsub.f32 %v1252, %v1360
        %v1429 = vsub.f32 %v1254, %v1360
        %v1430 = vsub.f32 %v1256, %v1363
        %v1431 = vsub.f32 %v1258, %v1363
        %v1432 = vsub.f32 %v1262, %v1366
        %v1433 = vsub.f32 %v1264, %v1366
        %v1434 = vsub.f32 %v1266, %v1369
        %v1435 = vsub.f32 %v1268, %v1369
        %v1436 = vsub.f32 %v1272, %v1372
        %v1437 = vsub.f32 %v1274, %v1372
        %v1438 = vsub.f32 %v1276, %v1375
        %v1439 = vsub.f32 %v1278, %v1375
        %v1440 = vmul.f32 %v1376, 1.442695
        %v1441 = vpow.pop %v1440
        %v1442 = vmul.f32 %v1377, 1.442695
        %v1443 = vpow.pop %v1442
        %v1444 = vmul.f32 %v1378, 1.442695
        %v1445 = vpow.pop %v1444
        %v1446 = vmul.f32 %v1379, 1.442695
        %v1447 = vpow.pop %v1446
        %v1448 = vmul.f32 %v1380, 1.442695
        %v1449 = vpow.pop %v1448
        %v1450 = vmul.f32 %v1381, 1.442695
        %v1451 = vpow.pop %v1450
        %v1452 = vmul.f32 %v1382, 1.442695
        %v1453 = vpow.pop %v1452
        %v1454 = vmul.f32 %v1383, 1.442695
        %v1455 = vpow.pop %v1454
        %v1456 = vmul.f32 %v1384, 1.442695
        %v1457 = vpow.pop %v1456
        %v1458 = vmul.f32 %v1385, 1.442695
        %v1459 = vpow.pop %v1458
        %v1460 = vmul.f32 %v1386, 1.442695
        %v1461 = vpow.pop %v1460
        %v1462 = vmul.f32 %v1387, 1.442695
        %v1463 = vpow.pop %v1462
        %v1464 = vmul.f32 %v1388, 1.442695
        %v1465 = vpow.pop %v1464
        %v1466 = vmul.f32 %v1389, 1.442695
        %v1467 = vpow.pop %v1466
        %v1468 = vmul.f32 %v1390, 1.442695
        %v1469 = vpow.pop %v1468
        %v1470 = vmul.f32 %v1391, 1.442695
        %v1471 = vpow.pop %v1470
        %v1472 = vmul.f32 %v1392, 1.442695
        %v1473 = vpow.pop %v1472
        %v1474 = vmul.f32 %v1393, 1.442695
        %v1475 = vpow.pop %v1474
        %v1476 = vmul.f32 %v1394, 1.442695
        %v1477 = vpow.pop %v1476
        %v1478 = vmul.f32 %v1395, 1.442695
        %v1479 = vpow.pop %v1478
        %v1480 = vmul.f32 %v1396, 1.442695
        %v1481 = vpow.pop %v1480
        %v1482 = vmul.f32 %v1397, 1.442695
        %v1483 = vpow.pop %v1482
        %v1484 = vmul.f32 %v1398, 1.442695
        %v1485 = vpow.pop %v1484
        %v1486 = vmul.f32 %v1399, 1.442695
        %v1487 = vpow.pop %v1486
        %v1488 = vmul.f32 %v1400, 1.442695
        %v1489 = vpow.pop %v1488
        %v1490 = vmul.f32 %v1401, 1.442695
        %v1491 = vpow.pop %v1490
        %v1492 = vmul.f32 %v1402, 1.442695
        %v1493 = vpow.pop %v1492
        %v1494 = vmul.f32 %v1403, 1.442695
        %v1495 = vpow.pop %v1494
        %v1496 = vmul.f32 %v1404, 1.442695
        %v1497 = vpow.pop %v1496
        %v1498 = vmul.f32 %v1405, 1.442695
        %v1499 = vpow.pop %v1498
        %v1500 = vmul.f32 %v1406, 1.442695
        %v1501 = vpow.pop %v1500
        %v1502 = vmul.f32 %v1407, 1.442695
        %v1503 = vpow.pop %v1502
        %v1504 = vmul.f32 %v1408, 1.442695
        %v1505 = vpow.pop %v1504
        %v1506 = vmul.f32 %v1409, 1.442695
        %v1507 = vpow.pop %v1506
        %v1508 = vmul.f32 %v1410, 1.442695
        %v1509 = vpow.pop %v1508
        %v1510 = vmul.f32 %v1411, 1.442695
        %v1511 = vpow.pop %v1510
        %v1512 = vmul.f32 %v1412, 1.442695
        %v1513 = vpow.pop %v1512
        %v1514 = vmul.f32 %v1413, 1.442695
        %v1515 = vpow.pop %v1514
        %v1516 = vmul.f32 %v1414, 1.442695
        %v1517 = vpow.pop %v1516
        %v1518 = vmul.f32 %v1415, 1.442695
        %v1519 = vpow.pop %v1518
        %v1520 = vmul.f32 %v1416, 1.442695
        %v1521 = vpow.pop %v1520
        %v1522 = vmul.f32 %v1417, 1.442695
        %v1523 = vpow.pop %v1522
        %v1524 = vmul.f32 %v1418, 1.442695
        %v1525 = vpow.pop %v1524
        %v1526 = vmul.f32 %v1419, 1.442695
        %v1527 = vpow.pop %v1526
        %v1528 = vmul.f32 %v1420, 1.442695
        %v1529 = vpow.pop %v1528
        %v1530 = vmul.f32 %v1421, 1.442695
        %v1531 = vpow.pop %v1530
        %v1532 = vmul.f32 %v1422, 1.442695
        %v1533 = vpow.pop %v1532
        %v1534 = vmul.f32 %v1423, 1.442695
        %v1535 = vpow.pop %v1534
        %v1536 = vmul.f32 %v1424, 1.442695
        %v1537 = vpow.pop %v1536
        %v1538 = vmul.f32 %v1425, 1.442695
        %v1539 = vpow.pop %v1538
        %v1540 = vmul.f32 %v1426, 1.442695
        %v1541 = vpow.pop %v1540
        %v1542 = vmul.f32 %v1427, 1.442695
        %v1543 = vpow.pop %v1542
        %v1544 = vmul.f32 %v1428, 1.442695
        %v1545 = vpow.pop %v1544
        %v1546 = vmul.f32 %v1429, 1.442695
        %v1547 = vpow.pop %v1546
        %v1548 = vmul.f32 %v1430, 1.442695
        %v1549 = vpow.pop %v1548
        %v1550 = vmul.f32 %v1431, 1.442695
        %v1551 = vpow.pop %v1550
        %v1552 = vmul.f32 %v1432, 1.442695
        %v1553 = vpow.pop %v1552
        %v1554 = vmul.f32 %v1433, 1.442695
        %v1555 = vpow.pop %v1554
        %v1556 = vmul.f32 %v1434, 1.442695
        %v1557 = vpow.pop %v1556
        %v1558 = vmul.f32 %v1435, 1.442695
        %v1559 = vpow.pop %v1558
        %v1560 = vmul.f32 %v1436, 1.442695
        %v1561 = vpow.pop %v1560
        %v1562 = vmul.f32 %v1437, 1.442695
        %v1563 = vpow.pop %v1562
        %v1564 = vmul.f32 %v1438, 1.442695
        %v1565 = vpow.pop %v1564
        %v1566 = vmul.f32 %v1439, 1.442695
        %v1567 = vpow.pop %v1566
        %v1568 = vadd.f32 %v1441, %v1443
        %1569 = vadd.xlane.f32.xlu0 %v1568
        %v1570 = vpop.xlane.xlu0 %1569
        %v1571 = vadd.f32 %v1445, %v1447
        %1572 = vadd.xlane.f32.xlu0 %v1571
        %v1573 = vpop.xlane.xlu0 %1572
        %v1574 = vadd.f32 %v1449, %v1451
        %1575 = vadd.xlane.f32.xlu0 %v1574
        %v1576 = vpop.xlane.xlu0 %1575
        %v1577 = vadd.f32 %v1453, %v1455
        %1578 = vadd.xlane.f32.xlu0 %v1577
        %v1579 = vpop.xlane.xlu0 %1578
        %v1580 = vadd.f32 %v1457, %v1459
        %1581 = vadd.xlane.f32.xlu0 %v1580
        %v1582 = vpop.xlane.xlu0 %1581
        %v1583 = vadd.f32 %v1461, %v1463
        %1584 = vadd.xlane.f32.xlu0 %v1583
        %v1585 = vpop.xlane.xlu0 %1584
        %v1586 = vadd.f32 %v1465, %v1467
        %1587 = vadd.xlane.f32.xlu0 %v1586
        %v1588 = vpop.xlane.xlu0 %1587
        %v1589 = vadd.f32 %v1469, %v1471
        %1590 = vadd.xlane.f32.xlu0 %v1589
        %v1591 = vpop.xlane.xlu0 %1590
        %v1592 = vadd.f32 %v1473, %v1475
        %1593 = vadd.xlane.f32.xlu0 %v1592
        %v1594 = vpop.xlane.xlu0 %1593
        %v1595 = vadd.f32 %v1477, %v1479
        %1596 = vadd.xlane.f32.xlu0 %v1595
        %v1597 = vpop.xlane.xlu0 %1596
        %v1598 = vadd.f32 %v1481, %v1483
        %1599 = vadd.xlane.f32.xlu0 %v1598
        %v1600 = vpop.xlane.xlu0 %1599
        %v1601 = vadd.f32 %v1485, %v1487
        %1602 = vadd.xlane.f32.xlu0 %v1601
        %v1603 = vpop.xlane.xlu0 %1602
        %v1604 = vadd.f32 %v1489, %v1491
        %1605 = vadd.xlane.f32.xlu0 %v1604
        %v1606 = vpop.xlane.xlu0 %1605
        %v1607 = vadd.f32 %v1493, %v1495
        %1608 = vadd.xlane.f32.xlu0 %v1607
        %v1609 = vpop.xlane.xlu0 %1608
        %v1610 = vadd.f32 %v1497, %v1499
        %1611 = vadd.xlane.f32.xlu0 %v1610
        %v1612 = vpop.xlane.xlu0 %1611
        %v1613 = vadd.f32 %v1501, %v1503
        %1614 = vadd.xlane.f32.xlu0 %v1613
        %v1615 = vpop.xlane.xlu0 %1614
        %v1616 = vadd.f32 %v1505, %v1507
        %1617 = vadd.xlane.f32.xlu0 %v1616
        %v1618 = vpop.xlane.xlu0 %1617
        %v1619 = vadd.f32 %v1509, %v1511
        %1620 = vadd.xlane.f32.xlu0 %v1619
        %v1621 = vpop.xlane.xlu0 %1620
        %v1622 = vadd.f32 %v1513, %v1515
        %1623 = vadd.xlane.f32.xlu0 %v1622
        %v1624 = vpop.xlane.xlu0 %1623
        %v1625 = vadd.f32 %v1517, %v1519
        %1626 = vadd.xlane.f32.xlu0 %v1625
        %v1627 = vpop.xlane.xlu0 %1626
        %v1628 = vadd.f32 %v1521, %v1523
        %1629 = vadd.xlane.f32.xlu0 %v1628
        %v1630 = vpop.xlane.xlu0 %1629
        %v1631 = vadd.f32 %v1525, %v1527
        %1632 = vadd.xlane.f32.xlu0 %v1631
        %v1633 = vpop.xlane.xlu0 %1632
        %v1634 = vadd.f32 %v1529, %v1531
        %1635 = vadd.xlane.f32.xlu0 %v1634
        %v1636 = vpop.xlane.xlu0 %1635
        %v1637 = vadd.f32 %v1533, %v1535
        %1638 = vadd.xlane.f32.xlu0 %v1637
        %v1639 = vpop.xlane.xlu0 %1638
        %v1640 = vadd.f32 %v1537, %v1539
        %1641 = vadd.xlane.f32.xlu0 %v1640
        %v1642 = vpop.xlane.xlu0 %1641
        %v1643 = vadd.f32 %v1541, %v1543
        %1644 = vadd.xlane.f32.xlu0 %v1643
        %v1645 = vpop.xlane.xlu0 %1644
        %v1646 = vadd.f32 %v1545, %v1547
        %1647 = vadd.xlane.f32.xlu0 %v1646
        %v1648 = vpop.xlane.xlu0 %1647
        %v1649 = vadd.f32 %v1549, %v1551
        %1650 = vadd.xlane.f32.xlu0 %v1649
        %v1651 = vpop.xlane.xlu0 %1650
        %v1652 = vadd.f32 %v1553, %v1555
        %1653 = vadd.xlane.f32.xlu0 %v1652
        %v1654 = vpop.xlane.xlu0 %1653
        %v1655 = vadd.f32 %v1557, %v1559
        %1656 = vadd.xlane.f32.xlu0 %v1655
        %v1657 = vpop.xlane.xlu0 %1656
        %v1658 = vadd.f32 %v1561, %v1563
        %1659 = vadd.xlane.f32.xlu0 %v1658
        %v1660 = vpop.xlane.xlu0 %1659
        %v1661 = vadd.f32 %v1565, %v1567
        %1662 = vadd.xlane.f32.xlu0 %v1661
        %v1663 = vpop.xlane.xlu0 %1662
        %v1664 = vrcp.pop %v1570
        %v1665 = vrcp.pop %v1573
        %v1666 = vrcp.pop %v1576
        %v1667 = vrcp.pop %v1579
        %v1668 = vrcp.pop %v1582
        %v1669 = vrcp.pop %v1585
        %v1670 = vrcp.pop %v1588
        %v1671 = vrcp.pop %v1591
        %v1672 = vrcp.pop %v1594
        %v1673 = vrcp.pop %v1597
        %v1674 = vrcp.pop %v1600
        %v1675 = vrcp.pop %v1603
        %v1676 = vrcp.pop %v1606
        %v1677 = vrcp.pop %v1609
        %v1678 = vrcp.pop %v1612
        %v1679 = vrcp.pop %v1615
        %v1680 = vrcp.pop %v1618
        %v1681 = vrcp.pop %v1621
        %v1682 = vrcp.pop %v1624
        %v1683 = vrcp.pop %v1627
        %v1684 = vrcp.pop %v1630
        %v1685 = vrcp.pop %v1633
        %v1686 = vrcp.pop %v1636
        %v1687 = vrcp.pop %v1639
        %v1688 = vrcp.pop %v1642
        %v1689 = vrcp.pop %v1645
        %v1690 = vrcp.pop %v1648
        %v1691 = vrcp.pop %v1651
        %v1692 = vrcp.pop %v1654
        %v1693 = vrcp.pop %v1657
        %v1694 = vrcp.pop %v1660
        %v1695 = vrcp.pop %v1663
        %v1696 = vmul.f32 %v1441, %v1664
        %v1697 = vmul.f32 %v1443, %v1664
        %v1698 = vmul.f32 %v1445, %v1665
        %v1699 = vmul.f32 %v1447, %v1665
        %v1700 = vmul.f32 %v1449, %v1666
        %v1701 = vmul.f32 %v1451, %v1666
        %v1702 = vmul.f32 %v1453, %v1667
        %v1703 = vmul.f32 %v1455, %v1667
        %v1704 = vmul.f32 %v1457, %v1668
        %v1705 = vmul.f32 %v1459, %v1668
        %v1706 = vmul.f32 %v1461, %v1669
        %v1707 = vmul.f32 %v1463, %v1669
        %v1708 = vmul.f32 %v1465, %v1670
        %v1709 = vmul.f32 %v1467, %v1670
        %v1710 = vmul.f32 %v1469, %v1671
        %v1711 = vmul.f32 %v1471, %v1671
        %v1712 = vmul.f32 %v1473, %v1672
        %v1713 = vmul.f32 %v1475, %v1672
        %v1714 = vmul.f32 %v1477, %v1673
        %v1715 = vmul.f32 %v1479, %v1673
        %v1716 = vmul.f32 %v1481, %v1674
        %v1717 = vmul.f32 %v1483, %v1674
        %v1718 = vmul.f32 %v1485, %v1675
        %v1719 = vmul.f32 %v1487, %v1675
        %v1720 = vmul.f32 %v1489, %v1676
        %v1721 = vmul.f32 %v1491, %v1676
        %v1722 = vmul.f32 %v1493, %v1677
        %v1723 = vmul.f32 %v1495, %v1677
        %v1724 = vmul.f32 %v1497, %v1678
        %v1725 = vmul.f32 %v1499, %v1678
        %v1726 = vmul.f32 %v1501, %v1679
        %v1727 = vmul.f32 %v1503, %v1679
        %v1728 = vmul.f32 %v1505, %v1680
        %v1729 = vmul.f32 %v1507, %v1680
        %v1730 = vmul.f32 %v1509, %v1681
        %v1731 = vmul.f32 %v1511, %v1681
        %v1732 = vmul.f32 %v1513, %v1682
        %v1733 = vmul.f32 %v1515, %v1682
        %v1734 = vmul.f32 %v1517, %v1683
        %v1735 = vmul.f32 %v1519, %v1683
        %v1736 = vmul.f32 %v1521, %v1684
        %v1737 = vmul.f32 %v1523, %v1684
        %v1738 = vmul.f32 %v1525, %v1685
        %v1739 = vmul.f32 %v1527, %v1685
        %v1740 = vmul.f32 %v1529, %v1686
        %v1741 = vmul.f32 %v1531, %v1686
        %v1742 = vmul.f32 %v1533, %v1687
        %v1743 = vmul.f32 %v1535, %v1687
        %v1744 = vmul.f32 %v1537, %v1688
        %v1745 = vmul.f32 %v1539, %v1688
        %v1746 = vmul.f32 %v1541, %v1689
        %v1747 = vmul.f32 %v1543, %v1689
        %v1748 = vmul.f32 %v1545, %v1690
        %v1749 = vmul.f32 %v1547, %v1690
        %v1750 = vmul.f32 %v1549, %v1691
        %v1751 = vmul.f32 %v1551, %v1691
        %v1752 = vmul.f32 %v1553, %v1692
        %v1753 = vmul.f32 %v1555, %v1692
        %v1754 = vmul.f32 %v1557, %v1693
        %v1755 = vmul.f32 %v1559, %v1693
        %v1756 = vmul.f32 %v1561, %v1694
        %v1757 = vmul.f32 %v1563, %v1694
        %v1758 = vmul.f32 %v1565, %v1695
        %v1759 = vmul.f32 %v1567, %v1695
        %v1760 = vpack.c.bf16 %v1698, %v1696
        %v1761 = vpack.c.bf16 %v1699, %v1697
        %v1762 = vpack.c.bf16 %v1702, %v1700
        %v1763 = vpack.c.bf16 %v1703, %v1701
        %v1764 = vpack.c.bf16 %v1706, %v1704
        %v1765 = vpack.c.bf16 %v1707, %v1705
        %v1766 = vpack.c.bf16 %v1710, %v1708
        %v1767 = vpack.c.bf16 %v1711, %v1709
        %v1768 = vpack.c.bf16 %v1714, %v1712
        %v1769 = vpack.c.bf16 %v1715, %v1713
        %v1770 = vpack.c.bf16 %v1718, %v1716
        %v1771 = vpack.c.bf16 %v1719, %v1717
        %v1772 = vpack.c.bf16 %v1722, %v1720
        %v1773 = vpack.c.bf16 %v1723, %v1721
        %v1774 = vpack.c.bf16 %v1726, %v1724
        %v1775 = vpack.c.bf16 %v1727, %v1725
        %v1776 = vpack.c.bf16 %v1730, %v1728
        %v1777 = vpack.c.bf16 %v1731, %v1729
        %v1778 = vpack.c.bf16 %v1734, %v1732
        %v1779 = vpack.c.bf16 %v1735, %v1733
        %v1780 = vpack.c.bf16 %v1738, %v1736
        %v1781 = vpack.c.bf16 %v1739, %v1737
        %v1782 = vpack.c.bf16 %v1742, %v1740
        %v1783 = vpack.c.bf16 %v1743, %v1741
        %v1784 = vpack.c.bf16 %v1746, %v1744
        %v1785 = vpack.c.bf16 %v1747, %v1745
        %v1786 = vpack.c.bf16 %v1750, %v1748
        %v1787 = vpack.c.bf16 %v1751, %v1749
        %v1788 = vpack.c.bf16 %v1754, %v1752
        %v1789 = vpack.c.bf16 %v1755, %v1753
        %v1790 = vpack.c.bf16 %v1758, %v1756
        %v1791 = vpack.c.bf16 %v1759, %v1757
        %v1824 = vunpack.c.l.b16 %v702
        %v1825 = vunpack.c.l.b16 %v703
        %v1826 = vunpack.c.l.b16 %v704
        %v1827 = vunpack.c.l.b16 %v705
        %v1828 = vunpack.c.l.b16 %v706
        %v1829 = vunpack.c.l.b16 %v707
        %v1830 = vunpack.c.l.b16 %v708
        %v1831 = vunpack.c.l.b16 %v709
        %v1832 = vunpack.c.l.b16 %v710
        %v1833 = vunpack.c.l.b16 %v711
        %v1834 = vunpack.c.l.b16 %v712
        %v1835 = vunpack.c.l.b16 %v713
        %v1836 = vunpack.c.l.b16 %v714
        %v1837 = vunpack.c.l.b16 %v715
        %v1838 = vunpack.c.l.b16 %v716
        %v1839 = vunpack.c.l.b16 %v717
        %v1840 = vunpack.c.l.b16 %v718
        %v1841 = vunpack.c.l.b16 %v719
        %v1842 = vunpack.c.l.b16 %v720
        %v1843 = vunpack.c.l.b16 %v721
        %v1844 = vunpack.c.l.b16 %v722
        %v1845 = vunpack.c.l.b16 %v723
        %v1846 = vunpack.c.l.b16 %v724
        %v1847 = vunpack.c.l.b16 %v725
        %v1848 = vunpack.c.l.b16 %v726
        %v1849 = vunpack.c.l.b16 %v727
        %v1850 = vunpack.c.l.b16 %v728
        %v1851 = vunpack.c.l.b16 %v729
        %v1852 = vunpack.c.l.b16 %v730
        %v1853 = vunpack.c.l.b16 %v731
        %v1854 = vunpack.c.l.b16 %v732
        %v1855 = vunpack.c.l.b16 %v733
        %v1856 = vpack.c.b16 %v1825, %v1824
        %v1857 = vpack.c.b16 %v1827, %v1826
        %v1858 = vpack.c.b16 %v1829, %v1828
        %v1859 = vpack.c.b16 %v1831, %v1830
        %v1860 = vpack.c.b16 %v1833, %v1832
        %v1861 = vpack.c.b16 %v1835, %v1834
        %v1862 = vpack.c.b16 %v1837, %v1836
        %v1863 = vpack.c.b16 %v1839, %v1838
        %v1864 = vpack.c.b16 %v1841, %v1840
        %v1865 = vpack.c.b16 %v1843, %v1842
        %v1866 = vpack.c.b16 %v1845, %v1844
        %v1867 = vpack.c.b16 %v1847, %v1846
        %v1868 = vpack.c.b16 %v1849, %v1848
        %v1869 = vpack.c.b16 %v1851, %v1850
        %v1870 = vpack.c.b16 %v1853, %v1852
        %v1871 = vpack.c.b16 %v1855, %v1854
        %1888 = vmatprep.subr.bf16.mxu0 0
        %1889 = vmatpush1.bf16.msra.mxu0 %v1856
        %1890 = vmatprep.subr.bf16.mxu0 0
        %1891 = vmatpush1.bf16.msra.mxu0 %v1857
        %1892 = vmatprep.subr.bf16.mxu0 0
        %1893 = vmatpush1.bf16.msra.mxu0 %v1858
        %1894 = vmatprep.subr.bf16.mxu0 0
        %1895 = vmatpush1.bf16.msra.mxu0 %v1859
        %1896 = vmatprep.subr.bf16.mxu0 0
        %1897 = vmatpush1.bf16.msra.mxu0 %v1860
        %1898 = vmatprep.subr.bf16.mxu0 0
        %1899 = vmatpush1.bf16.msra.mxu0 %v1861
        %1900 = vmatprep.subr.bf16.mxu0 0
        %1901 = vmatpush1.bf16.msra.mxu0 %v1862
        %1902 = vmatprep.subr.bf16.mxu0 0
        %1903 = vmatpush1.bf16.msra.mxu0 %v1863
        %1904 = vmatprep.subr.bf16.mxu0 0
        %1905 = vmatpush1.bf16.msra.mxu0 %v1864
        %1906 = vmatprep.subr.bf16.mxu0 0
        %1907 = vmatpush1.bf16.msra.mxu0 %v1865
        %1908 = vmatprep.subr.bf16.mxu0 0
        %1909 = vmatpush1.bf16.msra.mxu0 %v1866
        %1910 = vmatprep.subr.bf16.mxu0 0
        %1911 = vmatpush1.bf16.msra.mxu0 %v1867
        %1912 = vmatprep.subr.bf16.mxu0 0
        %1913 = vmatpush1.bf16.msra.mxu0 %v1868
        %1914 = vmatprep.subr.bf16.mxu0 0
        %1915 = vmatpush1.bf16.msra.mxu0 %v1869
        %1916 = vmatprep.subr.bf16.mxu0 0
        %1917 = vmatpush1.bf16.msra.mxu0 %v1870
        %1918 = vmatprep.subr.bf16.mxu0 0
        %1919 = vmatpush1.bf16.msra.mxu0 %v1871
        %1920 = vmatprep.mubr.bf16.mxu0 %v1761
        %1921 = vmatmul.mubr.bf16.gmra.mrb[0].mxu0 %v1760
        %v1922 = vpop.f32.mrb[0].mxu0
        %v1923 = vadd.f32 0.0, %v1922
        %v1924 = vpop.f32.mrb[0].mxu0
        %v1925 = vpop.f32.mrb[0].mxu0
        %v1926 = vadd.f32 0.0, %v1925
        %v1927 = vpop.f32.mrb[0].mxu0
        %1928 = vmatprep.mubr.bf16.mxu0 %v1763
        %1929 = vmatmul.mubr.bf16.gmra.mrb[0].mxu0 %v1762
        %v1930 = vpop.f32.mrb[0].mxu0
        %v1931 = vadd.f32 0.0, %v1930
        %v1932 = vpop.f32.mrb[0].mxu0
        %v1933 = vpop.f32.mrb[0].mxu0
        %v1934 = vadd.f32 0.0, %v1933
        %v1935 = vpop.f32.mrb[0].mxu0
        %1936 = vmatprep.mubr.bf16.mxu0 %v1765
        %1937 = vmatmul.mubr.bf16.gmra.mrb[0].mxu0 %v1764
        %v1938 = vpop.f32.mrb[0].mxu0
        %v1939 = vadd.f32 0.0, %v1938
        %v1940 = vpop.f32.mrb[0].mxu0
        %v1941 = vpop.f32.mrb[0].mxu0
        %v1942 = vadd.f32 0.0, %v1941
        %v1943 = vpop.f32.mrb[0].mxu0
        %1944 = vmatprep.mubr.bf16.mxu0 %v1767
        %1945 = vmatmul.mubr.bf16.gmra.mrb[0].mxu0 %v1766
        %v1946 = vpop.f32.mrb[0].mxu0
        %v1947 = vadd.f32 0.0, %v1946
        %v1948 = vpop.f32.mrb[0].mxu0
        %v1949 = vpop.f32.mrb[0].mxu0
        %v1950 = vadd.f32 0.0, %v1949
        %v1951 = vpop.f32.mrb[0].mxu0
        %1952 = vmatprep.mubr.bf16.mxu0 %v1769
        %1953 = vmatmul.mubr.bf16.gmra.mrb[0].mxu0 %v1768
        %v1954 = vpop.f32.mrb[0].mxu0
        %v1955 = vadd.f32 0.0, %v1954
        %v1956 = vpop.f32.mrb[0].mxu0
        %v1957 = vpop.f32.mrb[0].mxu0
        %v1958 = vadd.f32 0.0, %v1957
        %v1959 = vpop.f32.mrb[0].mxu0
        %1960 = vmatprep.mubr.bf16.mxu0 %v1771
        %1961 = vmatmul.mubr.bf16.gmra.mrb[0].mxu0 %v1770
        %v1962 = vpop.f32.mrb[0].mxu0
        %v1963 = vadd.f32 0.0, %v1962
        %v1964 = vpop.f32.mrb[0].mxu0
        %v1965 = vpop.f32.mrb[0].mxu0
        %v1966 = vadd.f32 0.0, %v1965
        %v1967 = vpop.f32.mrb[0].mxu0
        %1968 = vmatprep.mubr.bf16.mxu0 %v1773
        %1969 = vmatmul.mubr.bf16.gmra.mrb[0].mxu0 %v1772
        %v1970 = vpop.f32.mrb[0].mxu0
        %v1971 = vadd.f32 0.0, %v1970
        %v1972 = vpop.f32.mrb[0].mxu0
        %v1973 = vpop.f32.mrb[0].mxu0
        %v1974 = vadd.f32 0.0, %v1973
        %v1975 = vpop.f32.mrb[0].mxu0
        %1976 = vmatprep.mubr.bf16.mxu0 %v1775
        %1977 = vmatmul.mubr.bf16.gmra.mrb[0].mxu0 %v1774
        %v1978 = vpop.f32.mrb[0].mxu0
        %v1979 = vadd.f32 0.0, %v1978
        %v1980 = vpop.f32.mrb[0].mxu0
        %v1981 = vpop.f32.mrb[0].mxu0
        %v1982 = vadd.f32 0.0, %v1981
        %v1983 = vpop.f32.mrb[0].mxu0
        %1984 = vdwg.mxu0
        %v2017 = vunpack.c.l.b16 %v734
        %v2018 = vunpack.c.l.b16 %v735
        %v2019 = vunpack.c.l.b16 %v736
        %v2020 = vunpack.c.l.b16 %v737
        %v2021 = vunpack.c.l.b16 %v738
        %v2022 = vunpack.c.l.b16 %v739
        %v2023 = vunpack.c.l.b16 %v740
        %v2024 = vunpack.c.l.b16 %v741
        %v2025 = vunpack.c.l.b16 %v742
        %v2026 = vunpack.c.l.b16 %v743
        %v2027 = vunpack.c.l.b16 %v744
        %v2028 = vunpack.c.l.b16 %v745
        %v2029 = vunpack.c.l.b16 %v746
        %v2030 = vunpack.c.l.b16 %v747
        %v2031 = vunpack.c.l.b16 %v748
        %v2032 = vunpack.c.l.b16 %v749
        %v2033 = vunpack.c.l.b16 %v750
        %v2034 = vunpack.c.l.b16 %v751
        %v2035 = vunpack.c.l.b16 %v752
        %v2036 = vunpack.c.l.b16 %v753
        %v2037 = vunpack.c.l.b16 %v754
        %v2038 = vunpack.c.l.b16 %v755
        %v2039 = vunpack.c.l.b16 %v756
        %v2040 = vunpack.c.l.b16 %v757
        %v2041 = vunpack.c.l.b16 %v758
        %v2042 = vunpack.c.l.b16 %v759
        %v2043 = vunpack.c.l.b16 %v760
        %v2044 = vunpack.c.l.b16 %v761
        %v2045 = vunpack.c.l.b16 %v762
        %v2046 = vunpack.c.l.b16 %v763
        %v2047 = vunpack.c.l.b16 %v764
        %v2048 = vunpack.c.l.b16 %v765
        %v2049 = vpack.c.b16 %v2018, %v2017
        %v2050 = vpack.c.b16 %v2020, %v2019
        %v2051 = vpack.c.b16 %v2022, %v2021
        %v2052 = vpack.c.b16 %v2024, %v2023
        %v2053 = vpack.c.b16 %v2026, %v2025
        %v2054 = vpack.c.b16 %v2028, %v2027
        %v2055 = vpack.c.b16 %v2030, %v2029
        %v2056 = vpack.c.b16 %v2032, %v2031
        %v2057 = vpack.c.b16 %v2034, %v2033
        %v2058 = vpack.c.b16 %v2036, %v2035
        %v2059 = vpack.c.b16 %v2038, %v2037
        %v2060 = vpack.c.b16 %v2040, %v2039
        %v2061 = vpack.c.b16 %v2042, %v2041
        %v2062 = vpack.c.b16 %v2044, %v2043
        %v2063 = vpack.c.b16 %v2046, %v2045
        %v2064 = vpack.c.b16 %v2048, %v2047
        %2081 = vmatprep.subr.bf16.mxu0 0
        %2082 = vmatpush1.bf16.msra.mxu0 %v2049
        %2083 = vmatprep.subr.bf16.mxu0 0
        %2084 = vmatpush1.bf16.msra.mxu0 %v2050
        %2085 = vmatprep.subr.bf16.mxu0 0
        %2086 = vmatpush1.bf16.msra.mxu0 %v2051
        %2087 = vmatprep.subr.bf16.mxu0 0
        %2088 = vmatpush1.bf16.msra.mxu0 %v2052
        %2089 = vmatprep.subr.bf16.mxu0 0
        %2090 = vmatpush1.bf16.msra.mxu0 %v2053
        %2091 = vmatprep.subr.bf16.mxu0 0
        %2092 = vmatpush1.bf16.msra.mxu0 %v2054
        %2093 = vmatprep.subr.bf16.mxu0 0
        %2094 = vmatpush1.bf16.msra.mxu0 %v2055
        %2095 = vmatprep.subr.bf16.mxu0 0
        %2096 = vmatpush1.bf16.msra.mxu0 %v2056
        %2097 = vmatprep.subr.bf16.mxu0 0
        %2098 = vmatpush1.bf16.msra.mxu0 %v2057
        %2099 = vmatprep.subr.bf16.mxu0 0
        %2100 = vmatpush1.bf16.msra.mxu0 %v2058
        %2101 = vmatprep.subr.bf16.mxu0 0
        %2102 = vmatpush1.bf16.msra.mxu0 %v2059
        %2103 = vmatprep.subr.bf16.mxu0 0
        %2104 = vmatpush1.bf16.msra.mxu0 %v2060
        %2105 = vmatprep.subr.bf16.mxu0 0
        %2106 = vmatpush1.bf16.msra.mxu0 %v2061
        %2107 = vmatprep.subr.bf16.mxu0 0
        %2108 = vmatpush1.bf16.msra.mxu0 %v2062
        %2109 = vmatprep.subr.bf16.mxu0 0
        %2110 = vmatpush1.bf16.msra.mxu0 %v2063
        %2111 = vmatprep.subr.bf16.mxu0 0
        %2112 = vmatpush1.bf16.msra.mxu0 %v2064
        %2113 = vmatprep.mubr.bf16.mxu0 %v1777
        %2114 = vmatmul.mubr.bf16.gmra.mrb[0].mxu0 %v1776
        %v2115 = vpop.f32.mrb[0].mxu0
        %v2116 = vadd.f32 0.0, %v2115
        %v2117 = vpop.f32.mrb[0].mxu0
        %v2118 = vpop.f32.mrb[0].mxu0
        %v2119 = vadd.f32 0.0, %v2118
        %v2120 = vpop.f32.mrb[0].mxu0
        %2121 = vmatprep.mubr.bf16.mxu0 %v1779
        %2122 = vmatmul.mubr.bf16.gmra.mrb[0].mxu0 %v1778
        %v2123 = vpop.f32.mrb[0].mxu0
        %v2124 = vadd.f32 0.0, %v2123
        %v2125 = vpop.f32.mrb[0].mxu0
        %v2126 = vpop.f32.mrb[0].mxu0
        %v2127 = vadd.f32 0.0, %v2126
        %v2128 = vpop.f32.mrb[0].mxu0
        %2129 = vmatprep.mubr.bf16.mxu0 %v1781
        %2130 = vmatmul.mubr.bf16.gmra.mrb[0].mxu0 %v1780
        %v2131 = vpop.f32.mrb[0].mxu0
        %v2132 = vadd.f32 0.0, %v2131
        %v2133 = vpop.f32.mrb[0].mxu0
        %v2134 = vpop.f32.mrb[0].mxu0
        %v2135 = vadd.f32 0.0, %v2134
        %v2136 = vpop.f32.mrb[0].mxu0
        %2137 = vmatprep.mubr.bf16.mxu0 %v1783
        %2138 = vmatmul.mubr.bf16.gmra.mrb[0].mxu0 %v1782
        %v2139 = vpop.f32.mrb[0].mxu0
        %v2140 = vadd.f32 0.0, %v2139
        %v2141 = vpop.f32.mrb[0].mxu0
        %v2142 = vpop.f32.mrb[0].mxu0
        %v2143 = vadd.f32 0.0, %v2142
        %v2144 = vpop.f32.mrb[0].mxu0
        %2145 = vmatprep.mubr.bf16.mxu0 %v1785
        %2146 = vmatmul.mubr.bf16.gmra.mrb[0].mxu0 %v1784
        %v2147 = vpop.f32.mrb[0].mxu0
        %v2148 = vadd.f32 0.0, %v2147
        %v2149 = vpop.f32.mrb[0].mxu0
        %v2150 = vpop.f32.mrb[0].mxu0
        %v2151 = vadd.f32 0.0, %v2150
        %v2152 = vpop.f32.mrb[0].mxu0
        %2153 = vmatprep.mubr.bf16.mxu0 %v1787
        %2154 = vmatmul.mubr.bf16.gmra.mrb[0].mxu0 %v1786
        %v2155 = vpop.f32.mrb[0].mxu0
        %v2156 = vadd.f32 0.0, %v2155
        %v2157 = vpop.f32.mrb[0].mxu0
        %v2158 = vpop.f32.mrb[0].mxu0
        %v2159 = vadd.f32 0.0, %v2158
        %v2160 = vpop.f32.mrb[0].mxu0
        %2161 = vmatprep.mubr.bf16.mxu0 %v1789
        %2162 = vmatmul.mubr.bf16.gmra.mrb[0].mxu0 %v1788
        %v2163 = vpop.f32.mrb[0].mxu0
        %v2164 = vadd.f32 0.0, %v2163
        %v2165 = vpop.f32.mrb[0].mxu0
        %v2166 = vpop.f32.mrb[0].mxu0
        %v2167 = vadd.f32 0.0, %v2166
        %v2168 = vpop.f32.mrb[0].mxu0
        %2169 = vmatprep.mubr.bf16.mxu0 %v1791
        %2170 = vmatmul.mubr.bf16.gmra.mrb[0].mxu0 %v1790
        %v2171 = vpop.f32.mrb[0].mxu0
        %v2172 = vadd.f32 0.0, %v2171
        %v2173 = vpop.f32.mrb[0].mxu0
        %v2174 = vpop.f32.mrb[0].mxu0
        %v2175 = vadd.f32 0.0, %v2174
        %v2176 = vpop.f32.mrb[0].mxu0
        %2177 = vdwg.mxu0
        %v2178 = vld [vmem:[%s5] sm:$0x3]
        %v2179 = vpack.c.bf16 %v1926, %v1923
        %v2180 = vpack.c.bf16 %v1934, %v1931
        %v2181 = vpack.c.bf16 %v1942, %v1939
        %v2182 = vpack.c.bf16 %v1950, %v1947
        %v2183 = vpack.c.bf16 %v1958, %v1955
        %v2184 = vpack.c.bf16 %v1966, %v1963
        %v2185 = vpack.c.bf16 %v1974, %v1971
        %v2186 = vpack.c.bf16 %v1982, %v1979
        %v2187 = vld [vmem:[%s4] sm:$0xff]
        %v2188 = vld [vmem:[%s4 + $0x8] sm:$0xff]
        %v2189 = vld [vmem:[%s4 + $0x10] sm:$0xff]
        %v2190 = vld [vmem:[%s4 + $0x18] sm:$0xff]
        %v2191 = vld [vmem:[%s4 + $0x20] sm:$0xff]
        %v2192 = vld [vmem:[%s4 + $0x28] sm:$0xff]
        %v2193 = vld [vmem:[%s4 + $0x30] sm:$0xff]
        %v2194 = vld [vmem:[%s4 + $0x38] sm:$0xff]
        %v2195 = vld [vmem:[%s4 + $0x40] sm:$0xff]
        %v2196 = vld [vmem:[%s4 + $0x48] sm:$0xff]
        %v2197 = vld [vmem:[%s4 + $0x50] sm:$0xff]
        %v2198 = vld [vmem:[%s4 + $0x58] sm:$0xff]
        %v2199 = vld [vmem:[%s4 + $0x60] sm:$0xff]
        %v2200 = vld [vmem:[%s4 + $0x68] sm:$0xff]
        %v2201 = vld [vmem:[%s4 + $0x70] sm:$0xff]
        %v2202 = vld [vmem:[%s4 + $0x78] sm:$0xff]
        %v2219 = vunpack.c.l.b16 %v2187
        %v2220 = vunpack.c.h.b16 %v2187
        %v2221 = vunpack.c.l.b16 %v2188
        %v2222 = vunpack.c.h.b16 %v2188
        %v2223 = vunpack.c.l.b16 %v2189
        %v2224 = vunpack.c.h.b16 %v2189
        %v2225 = vunpack.c.l.b16 %v2190
        %v2226 = vunpack.c.h.b16 %v2190
        %v2227 = vunpack.c.l.b16 %v2191
        %v2228 = vunpack.c.h.b16 %v2191
        %v2229 = vunpack.c.l.b16 %v2192
        %v2230 = vunpack.c.h.b16 %v2192
        %v2231 = vunpack.c.l.b16 %v2193
        %v2232 = vunpack.c.h.b16 %v2193
        %v2233 = vunpack.c.l.b16 %v2194
        %v2234 = vunpack.c.h.b16 %v2194
        %v2235 = vunpack.c.l.b16 %v2195
        %v2236 = vunpack.c.h.b16 %v2195
        %v2237 = vunpack.c.l.b16 %v2196
        %v2238 = vunpack.c.h.b16 %v2196
        %v2239 = vunpack.c.l.b16 %v2197
        %v2240 = vunpack.c.h.b16 %v2197
        %v2241 = vunpack.c.l.b16 %v2198
        %v2242 = vunpack.c.h.b16 %v2198
        %v2243 = vunpack.c.l.b16 %v2199
        %v2244 = vunpack.c.h.b16 %v2199
        %v2245 = vunpack.c.l.b16 %v2200
        %v2246 = vunpack.c.h.b16 %v2200
        %v2247 = vunpack.c.l.b16 %v2201
        %v2248 = vunpack.c.h.b16 %v2201
        %v2249 = vunpack.c.l.b16 %v2202
        %v2250 = vunpack.c.h.b16 %v2202
        %v2251 = vpack.c.b16 %v2221, %v2219
        %v2252 = vpack.c.b16 %v2222, %v2220
        %v2253 = vpack.c.b16 %v2225, %v2223
        %v2254 = vpack.c.b16 %v2226, %v2224
        %v2255 = vpack.c.b16 %v2229, %v2227
        %v2256 = vpack.c.b16 %v2230, %v2228
        %v2257 = vpack.c.b16 %v2233, %v2231
        %v2258 = vpack.c.b16 %v2234, %v2232
        %v2259 = vpack.c.b16 %v2237, %v2235
        %v2260 = vpack.c.b16 %v2238, %v2236
        %v2261 = vpack.c.b16 %v2241, %v2239
        %v2262 = vpack.c.b16 %v2242, %v2240
        %v2263 = vpack.c.b16 %v2245, %v2243
        %v2264 = vpack.c.b16 %v2246, %v2244
        %v2265 = vpack.c.b16 %v2249, %v2247
        %v2266 = vpack.c.b16 %v2250, %v2248
        %2283 = vmatprep.subr.bf16.mxu0 %v2252
        %2284 = vmatpush1.bf16.msra.mxu0 %v2251
        %2285 = vmatprep.subr.bf16.mxu0 %v2254
        %2286 = vmatpush1.bf16.msra.mxu0 %v2253
        %2287 = vmatprep.subr.bf16.mxu0 %v2256
        %2288 = vmatpush1.bf16.msra.mxu0 %v2255
        %2289 = vmatprep.subr.bf16.mxu0 %v2258
        %2290 = vmatpush1.bf16.msra.mxu0 %v2257
        %2291 = vmatprep.subr.bf16.mxu0 %v2260
        %2292 = vmatpush1.bf16.msra.mxu0 %v2259
        %2293 = vmatprep.subr.bf16.mxu0 %v2262
        %2294 = vmatpush1.bf16.msra.mxu0 %v2261
        %2295 = vmatprep.subr.bf16.mxu0 %v2264
        %2296 = vmatpush1.bf16.msra.mxu0 %v2263
        %2297 = vmatprep.subr.bf16.mxu0 %v2266
        %2298 = vmatpush1.bf16.msra.mxu0 %v2265
        %2299 = vmatprep.subr.bf16.mxu0 0
        %2300 = vmatpush1.bf16.msra.mxu0 0
        %2301 = vmatprep.subr.bf16.mxu0 0
        %2302 = vmatpush1.bf16.msra.mxu0 0
        %2303 = vmatprep.subr.bf16.mxu0 0
        %2304 = vmatpush1.bf16.msra.mxu0 0
        %2305 = vmatprep.subr.bf16.mxu0 0
        %2306 = vmatpush1.bf16.msra.mxu0 0
        %2307 = vmatprep.subr.bf16.mxu0 0
        %2308 = vmatpush1.bf16.msra.mxu0 0
        %2309 = vmatprep.subr.bf16.mxu0 0
        %2310 = vmatpush1.bf16.msra.mxu0 0
        %2311 = vmatprep.subr.bf16.mxu0 0
        %2312 = vmatpush1.bf16.msra.mxu0 0
        %2313 = vmatprep.subr.bf16.mxu0 0
        %2314 = vmatpush1.bf16.msra.mxu0 0
        %2315 = vmatprep.mubr.bf16.mxu0 0
        %2316 = vmatmul.mubr.bf16.gmra.mrb[0].mxu0 %v2179
        %v2317 = vpop.f32.mrb[0].mxu0
        %v2318 = vadd.f32 0.0, %v2317
        %v2319 = vpop.f32.mrb[0].mxu0
        %v2320 = vadd.f32 0.0, %v2319
        %v2321 = vpop.f32.mrb[0].mxu0
        %v2322 = vadd.f32 0.0, %v2321
        %v2323 = vpop.f32.mrb[0].mxu0
        %v2324 = vadd.f32 0.0, %v2323
        %2325 = vmatprep.mubr.bf16.mxu0 0
        %2326 = vmatmul.mubr.bf16.gmra.mrb[0].mxu0 %v2180
        %v2327 = vpop.f32.mrb[0].mxu0
        %v2328 = vadd.f32 0.0, %v2327
        %v2329 = vpop.f32.mrb[0].mxu0
        %v2330 = vadd.f32 0.0, %v2329
        %v2331 = vpop.f32.mrb[0].mxu0
        %v2332 = vadd.f32 0.0, %v2331
        %v2333 = vpop.f32.mrb[0].mxu0
        %v2334 = vadd.f32 0.0, %v2333
        %2335 = vmatprep.mubr.bf16.mxu0 0
        %2336 = vmatmul.mubr.bf16.gmra.mrb[0].mxu0 %v2181
        %v2337 = vpop.f32.mrb[0].mxu0
        %v2338 = vadd.f32 0.0, %v2337
        %v2339 = vpop.f32.mrb[0].mxu0
        %v2340 = vadd.f32 0.0, %v2339
        %v2341 = vpop.f32.mrb[0].mxu0
        %v2342 = vadd.f32 0.0, %v2341
        %v2343 = vpop.f32.mrb[0].mxu0
        %v2344 = vadd.f32 0.0, %v2343
        %2345 = vmatprep.mubr.bf16.mxu0 0
        %2346 = vmatmul.mubr.bf16.gmra.mrb[0].mxu0 %v2182
        %v2347 = vpop.f32.mrb[0].mxu0
        %v2348 = vadd.f32 0.0, %v2347
        %v2349 = vpop.f32.mrb[0].mxu0
        %v2350 = vadd.f32 0.0, %v2349
        %v2351 = vpop.f32.mrb[0].mxu0
        %v2352 = vadd.f32 0.0, %v2351
        %v2353 = vpop.f32.mrb[0].mxu0
        %v2354 = vadd.f32 0.0, %v2353
        %2355 = vmatprep.mubr.bf16.mxu0 0
        %2356 = vmatmul.mubr.bf16.gmra.mrb[0].mxu0 %v2183
        %v2357 = vpop.f32.mrb[0].mxu0
        %v2358 = vadd.f32 0.0, %v2357
        %v2359 = vpop.f32.mrb[0].mxu0
        %v2360 = vadd.f32 0.0, %v2359
        %v2361 = vpop.f32.mrb[0].mxu0
        %v2362 = vadd.f32 0.0, %v2361
        %v2363 = vpop.f32.mrb[0].mxu0
        %v2364 = vadd.f32 0.0, %v2363
        %2365 = vmatprep.mubr.bf16.mxu0 0
        %2366 = vmatmul.mubr.bf16.gmra.mrb[0].mxu0 %v2184
        %v2367 = vpop.f32.mrb[0].mxu0
        %v2368 = vadd.f32 0.0, %v2367
        %v2369 = vpop.f32.mrb[0].mxu0
        %v2370 = vadd.f32 0.0, %v2369
        %v2371 = vpop.f32.mrb[0].mxu0
        %v2372 = vadd.f32 0.0, %v2371
        %v2373 = vpop.f32.mrb[0].mxu0
        %v2374 = vadd.f32 0.0, %v2373
        %2375 = vmatprep.mubr.bf16.mxu0 0
        %2376 = vmatmul.mubr.bf16.gmra.mrb[0].mxu0 %v2185
        %v2377 = vpop.f32.mrb[0].mxu0
        %v2378 = vadd.f32 0.0, %v2377
        %v2379 = vpop.f32.mrb[0].mxu0
        %v2380 = vadd.f32 0.0, %v2379
        %v2381 = vpop.f32.mrb[0].mxu0
        %v2382 = vadd.f32 0.0, %v2381
        %v2383 = vpop.f32.mrb[0].mxu0
        %v2384 = vadd.f32 0.0, %v2383
        %2385 = vmatprep.mubr.bf16.mxu0 0
        %2386 = vmatmul.mubr.bf16.gmra.mrb[0].mxu0 %v2186
        %v2387 = vpop.f32.mrb[0].mxu0
        %v2388 = vadd.f32 0.0, %v2387
        %v2389 = vpop.f32.mrb[0].mxu0
        %v2390 = vadd.f32 0.0, %v2389
        %v2391 = vpop.f32.mrb[0].mxu0
        %v2392 = vadd.f32 0.0, %v2391
        %v2393 = vpop.f32.mrb[0].mxu0
        %v2394 = vadd.f32 0.0, %v2393
        %2395 = vdwg.mxu0
        %v2397 = vlaneseq
        %v2398 = vshrl.u32 %v2397, 7
        %v2399 = vsub.s32 0, %v2398
        %v2400 = vrot.slane %v2178, %v2399
        %v2401 = vlaneseq
        %v2402 = vshrl.u32 %v2401, 7
        %v2403 = vsub.s32 1, %v2402
        %v2404 = vrot.slane %v2178, %v2403
        %v2407 = vadd.f32 %v2400, %v2318
        %v2408 = vadd.f32 %v2404, %v2320
        %v2409 = vadd.f32 %v2400, %v2322
        %v2410 = vadd.f32 %v2404, %v2324
        %v2411 = vadd.f32 %v2400, %v2328
        %v2412 = vadd.f32 %v2404, %v2330
        %v2413 = vadd.f32 %v2400, %v2332
        %v2414 = vadd.f32 %v2404, %v2334
        %v2415 = vadd.f32 %v2400, %v2338
        %v2416 = vadd.f32 %v2404, %v2340
        %v2417 = vadd.f32 %v2400, %v2342
        %v2418 = vadd.f32 %v2404, %v2344
        %v2419 = vadd.f32 %v2400, %v2348
        %v2420 = vadd.f32 %v2404, %v2350
        %v2421 = vadd.f32 %v2400, %v2352
        %v2422 = vadd.f32 %v2404, %v2354
        %v2423 = vadd.f32 %v2400, %v2358
        %v2424 = vadd.f32 %v2404, %v2360
        %v2425 = vadd.f32 %v2400, %v2362
        %v2426 = vadd.f32 %v2404, %v2364
        %v2427 = vadd.f32 %v2400, %v2368
        %v2428 = vadd.f32 %v2404, %v2370
        %v2429 = vadd.f32 %v2400, %v2372
        %v2430 = vadd.f32 %v2404, %v2374
        %v2431 = vadd.f32 %v2400, %v2378
        %v2432 = vadd.f32 %v2404, %v2380
        %v2433 = vadd.f32 %v2400, %v2382
        %v2434 = vadd.f32 %v2404, %v2384
        %v2435 = vadd.f32 %v2400, %v2388
        %v2436 = vadd.f32 %v2404, %v2390
        %v2437 = vadd.f32 %v2400, %v2392
        %v2438 = vadd.f32 %v2404, %v2394
        %v2439 = vpack.c.bf16 %v2119, %v2116
        %v2440 = vpack.c.bf16 %v2127, %v2124
        %v2441 = vpack.c.bf16 %v2135, %v2132
        %v2442 = vpack.c.bf16 %v2143, %v2140
        %v2443 = vpack.c.bf16 %v2151, %v2148
        %v2444 = vpack.c.bf16 %v2159, %v2156
        %v2445 = vpack.c.bf16 %v2167, %v2164
        %v2446 = vpack.c.bf16 %v2175, %v2172
        %v2447 = vld [vmem:[%s4 + $0x80] sm:$0xff]
        %v2448 = vld [vmem:[%s4 + $0x88] sm:$0xff]
        %v2449 = vld [vmem:[%s4 + $0x90] sm:$0xff]
        %v2450 = vld [vmem:[%s4 + $0x98] sm:$0xff]
        %v2451 = vld [vmem:[%s4 + $0xa0] sm:$0xff]
        %v2452 = vld [vmem:[%s4 + $0xa8] sm:$0xff]
        %v2453 = vld [vmem:[%s4 + $0xb0] sm:$0xff]
        %v2454 = vld [vmem:[%s4 + $0xb8] sm:$0xff]
        %v2455 = vld [vmem:[%s4 + $0xc0] sm:$0xff]
        %v2456 = vld [vmem:[%s4 + $0xc8] sm:$0xff]
        %v2457 = vld [vmem:[%s4 + $0xd0] sm:$0xff]
        %v2458 = vld [vmem:[%s4 + $0xd8] sm:$0xff]
        %v2459 = vld [vmem:[%s4 + $0xe0] sm:$0xff]
        %v2460 = vld [vmem:[%s4 + $0xe8] sm:$0xff]
        %v2461 = vld [vmem:[%s4 + $0xf0] sm:$0xff]
        %v2462 = vld [vmem:[%s4 + $0xf8] sm:$0xff]
        %v2479 = vunpack.c.l.b16 %v2447
        %v2480 = vunpack.c.h.b16 %v2447
        %v2481 = vunpack.c.l.b16 %v2448
        %v2482 = vunpack.c.h.b16 %v2448
        %v2483 = vunpack.c.l.b16 %v2449
        %v2484 = vunpack.c.h.b16 %v2449
        %v2485 = vunpack.c.l.b16 %v2450
        %v2486 = vunpack.c.h.b16 %v2450
        %v2487 = vunpack.c.l.b16 %v2451
        %v2488 = vunpack.c.h.b16 %v2451
        %v2489 = vunpack.c.l.b16 %v2452
        %v2490 = vunpack.c.h.b16 %v2452
        %v2491 = vunpack.c.l.b16 %v2453
        %v2492 = vunpack.c.h.b16 %v2453
        %v2493 = vunpack.c.l.b16 %v2454
        %v2494 = vunpack.c.h.b16 %v2454
        %v2495 = vunpack.c.l.b16 %v2455
        %v2496 = vunpack.c.h.b16 %v2455
        %v2497 = vunpack.c.l.b16 %v2456
        %v2498 = vunpack.c.h.b16 %v2456
        %v2499 = vunpack.c.l.b16 %v2457
        %v2500 = vunpack.c.h.b16 %v2457
        %v2501 = vunpack.c.l.b16 %v2458
        %v2502 = vunpack.c.h.b16 %v2458
        %v2503 = vunpack.c.l.b16 %v2459
        %v2504 = vunpack.c.h.b16 %v2459
        %v2505 = vunpack.c.l.b16 %v2460
        %v2506 = vunpack.c.h.b16 %v2460
        %v2507 = vunpack.c.l.b16 %v2461
        %v2508 = vunpack.c.h.b16 %v2461
        %v2509 = vunpack.c.l.b16 %v2462
        %v2510 = vunpack.c.h.b16 %v2462
        %v2511 = vpack.c.b16 %v2481, %v2479
        %v2512 = vpack.c.b16 %v2482, %v2480
        %v2513 = vpack.c.b16 %v2485, %v2483
        %v2514 = vpack.c.b16 %v2486, %v2484
        %v2515 = vpack.c.b16 %v2489, %v2487
        %v2516 = vpack.c.b16 %v2490, %v2488
        %v2517 = vpack.c.b16 %v2493, %v2491
        %v2518 = vpack.c.b16 %v2494, %v2492
        %v2519 = vpack.c.b16 %v2497, %v2495
        %v2520 = vpack.c.b16 %v2498, %v2496
        %v2521 = vpack.c.b16 %v2501, %v2499
        %v2522 = vpack.c.b16 %v2502, %v2500
        %v2523 = vpack.c.b16 %v2505, %v2503
        %v2524 = vpack.c.b16 %v2506, %v2504
        %v2525 = vpack.c.b16 %v2509, %v2507
        %v2526 = vpack.c.b16 %v2510, %v2508
        %2543 = vmatprep.subr.bf16.mxu0 %v2512
        %2544 = vmatpush1.bf16.msra.mxu0 %v2511
        %2545 = vmatprep.subr.bf16.mxu0 %v2514
        %2546 = vmatpush1.bf16.msra.mxu0 %v2513
        %2547 = vmatprep.subr.bf16.mxu0 %v2516
        %2548 = vmatpush1.bf16.msra.mxu0 %v2515
        %2549 = vmatprep.subr.bf16.mxu0 %v2518
        %2550 = vmatpush1.bf16.msra.mxu0 %v2517
        %2551 = vmatprep.subr.bf16.mxu0 %v2520
        %2552 = vmatpush1.bf16.msra.mxu0 %v2519
        %2553 = vmatprep.subr.bf16.mxu0 %v2522
        %2554 = vmatpush1.bf16.msra.mxu0 %v2521
        %2555 = vmatprep.subr.bf16.mxu0 %v2524
        %2556 = vmatpush1.bf16.msra.mxu0 %v2523
        %2557 = vmatprep.subr.bf16.mxu0 %v2526
        %2558 = vmatpush1.bf16.msra.mxu0 %v2525
        %2559 = vmatprep.subr.bf16.mxu0 0
        %2560 = vmatpush1.bf16.msra.mxu0 0
        %2561 = vmatprep.subr.bf16.mxu0 0
        %2562 = vmatpush1.bf16.msra.mxu0 0
        %2563 = vmatprep.subr.bf16.mxu0 0
        %2564 = vmatpush1.bf16.msra.mxu0 0
        %2565 = vmatprep.subr.bf16.mxu0 0
        %2566 = vmatpush1.bf16.msra.mxu0 0
        %2567 = vmatprep.subr.bf16.mxu0 0
        %2568 = vmatpush1.bf16.msra.mxu0 0
        %2569 = vmatprep.subr.bf16.mxu0 0
        %2570 = vmatpush1.bf16.msra.mxu0 0
        %2571 = vmatprep.subr.bf16.mxu0 0
        %2572 = vmatpush1.bf16.msra.mxu0 0
        %2573 = vmatprep.subr.bf16.mxu0 0
        %2574 = vmatpush1.bf16.msra.mxu0 0
        %2575 = vmatprep.mubr.bf16.mxu0 0
        %2576 = vmatmul.mubr.bf16.gmra.mrb[0].mxu0 %v2439
        %v2577 = vpop.f32.mrb[0].mxu0
        %v2578 = vadd.f32 0.0, %v2577
        %v2579 = vpop.f32.mrb[0].mxu0
        %v2580 = vadd.f32 0.0, %v2579
        %v2581 = vpop.f32.mrb[0].mxu0
        %v2582 = vadd.f32 0.0, %v2581
        %v2583 = vpop.f32.mrb[0].mxu0
        %v2584 = vadd.f32 0.0, %v2583
        %2585 = vmatprep.mubr.bf16.mxu0 0
        %2586 = vmatmul.mubr.bf16.gmra.mrb[0].mxu0 %v2440
        %v2587 = vpop.f32.mrb[0].mxu0
        %v2588 = vadd.f32 0.0, %v2587
        %v2589 = vpop.f32.mrb[0].mxu0
        %v2590 = vadd.f32 0.0, %v2589
        %v2591 = vpop.f32.mrb[0].mxu0
        %v2592 = vadd.f32 0.0, %v2591
        %v2593 = vpop.f32.mrb[0].mxu0
        %v2594 = vadd.f32 0.0, %v2593
        %2595 = vmatprep.mubr.bf16.mxu0 0
        %2596 = vmatmul.mubr.bf16.gmra.mrb[0].mxu0 %v2441
        %v2597 = vpop.f32.mrb[0].mxu0
        %v2598 = vadd.f32 0.0, %v2597
        %v2599 = vpop.f32.mrb[0].mxu0
        %v2600 = vadd.f32 0.0, %v2599
        %v2601 = vpop.f32.mrb[0].mxu0
        %v2602 = vadd.f32 0.0, %v2601
        %v2603 = vpop.f32.mrb[0].mxu0
        %v2604 = vadd.f32 0.0, %v2603
        %2605 = vmatprep.mubr.bf16.mxu0 0
        %2606 = vmatmul.mubr.bf16.gmra.mrb[0].mxu0 %v2442
        %v2607 = vpop.f32.mrb[0].mxu0
        %v2608 = vadd.f32 0.0, %v2607
        %v2609 = vpop.f32.mrb[0].mxu0
        %v2610 = vadd.f32 0.0, %v2609
        %v2611 = vpop.f32.mrb[0].mxu0
        %v2612 = vadd.f32 0.0, %v2611
        %v2613 = vpop.f32.mrb[0].mxu0
        %v2614 = vadd.f32 0.0, %v2613
        %2615 = vmatprep.mubr.bf16.mxu0 0
        %2616 = vmatmul.mubr.bf16.gmra.mrb[0].mxu0 %v2443
        %v2617 = vpop.f32.mrb[0].mxu0
        %v2618 = vadd.f32 0.0, %v2617
        %v2619 = vpop.f32.mrb[0].mxu0
        %v2620 = vadd.f32 0.0, %v2619
        %v2621 = vpop.f32.mrb[0].mxu0
        %v2622 = vadd.f32 0.0, %v2621
        %v2623 = vpop.f32.mrb[0].mxu0
        %v2624 = vadd.f32 0.0, %v2623
        %2625 = vmatprep.mubr.bf16.mxu0 0
        %2626 = vmatmul.mubr.bf16.gmra.mrb[0].mxu0 %v2444
        %v2627 = vpop.f32.mrb[0].mxu0
        %v2628 = vadd.f32 0.0, %v2627
        %v2629 = vpop.f32.mrb[0].mxu0
        %v2630 = vadd.f32 0.0, %v2629
        %v2631 = vpop.f32.mrb[0].mxu0
        %v2632 = vadd.f32 0.0, %v2631
        %v2633 = vpop.f32.mrb[0].mxu0
        %v2634 = vadd.f32 0.0, %v2633
        %2635 = vmatprep.mubr.bf16.mxu0 0
        %2636 = vmatmul.mubr.bf16.gmra.mrb[0].mxu0 %v2445
        %v2637 = vpop.f32.mrb[0].mxu0
        %v2638 = vadd.f32 0.0, %v2637
        %v2639 = vpop.f32.mrb[0].mxu0
        %v2640 = vadd.f32 0.0, %v2639
        %v2641 = vpop.f32.mrb[0].mxu0
        %v2642 = vadd.f32 0.0, %v2641
        %v2643 = vpop.f32.mrb[0].mxu0
        %v2644 = vadd.f32 0.0, %v2643
        %2645 = vmatprep.mubr.bf16.mxu0 0
        %2646 = vmatmul.mubr.bf16.gmra.mrb[0].mxu0 %v2446
        %v2647 = vpop.f32.mrb[0].mxu0
        %v2648 = vadd.f32 0.0, %v2647
        %v2649 = vpop.f32.mrb[0].mxu0
        %v2650 = vadd.f32 0.0, %v2649
        %v2651 = vpop.f32.mrb[0].mxu0
        %v2652 = vadd.f32 0.0, %v2651
        %v2653 = vpop.f32.mrb[0].mxu0
        %v2654 = vadd.f32 0.0, %v2653
        %2655 = vdwg.mxu0
        %v2656 = vadd.f32 %v2407, %v2578
        %v2657 = vadd.f32 %v2408, %v2580
        %v2658 = vadd.f32 %v2409, %v2582
        %v2659 = vadd.f32 %v2410, %v2584
        %v2660 = vadd.f32 %v2411, %v2588
        %v2661 = vadd.f32 %v2412, %v2590
        %v2662 = vadd.f32 %v2413, %v2592
        %v2663 = vadd.f32 %v2414, %v2594
        %v2664 = vadd.f32 %v2415, %v2598
        %v2665 = vadd.f32 %v2416, %v2600
        %v2666 = vadd.f32 %v2417, %v2602
        %v2667 = vadd.f32 %v2418, %v2604
        %v2668 = vadd.f32 %v2419, %v2608
        %v2669 = vadd.f32 %v2420, %v2610
        %v2670 = vadd.f32 %v2421, %v2612
        %v2671 = vadd.f32 %v2422, %v2614
        %v2672 = vadd.f32 %v2423, %v2618
        %v2673 = vadd.f32 %v2424, %v2620
        %v2674 = vadd.f32 %v2425, %v2622
        %v2675 = vadd.f32 %v2426, %v2624
        %v2676 = vadd.f32 %v2427, %v2628
        %v2677 = vadd.f32 %v2428, %v2630
        %v2678 = vadd.f32 %v2429, %v2632
        %v2679 = vadd.f32 %v2430, %v2634
        %v2680 = vadd.f32 %v2431, %v2638
        %v2681 = vadd.f32 %v2432, %v2640
        %v2682 = vadd.f32 %v2433, %v2642
        %v2683 = vadd.f32 %v2434, %v2644
        %v2684 = vadd.f32 %v2435, %v2648
        %v2685 = vadd.f32 %v2436, %v2650
        %v2686 = vadd.f32 %v2437, %v2652
        %v2687 = vadd.f32 %v2438, %v2654
        %v2688 = vld [vmem:[%s601] sm:$0xff]
        %v2689 = vld [vmem:[%s601 + $0x8] sm:$0xff]
        %v2690 = vld [vmem:[%s601 + $0x10] sm:$0xff]
        %v2691 = vld [vmem:[%s601 + $0x18] sm:$0xff]
        %v2692 = vld [vmem:[%s601 + $0x20] sm:$0xff]
        %v2693 = vld [vmem:[%s601 + $0x28] sm:$0xff]
        %v2694 = vld [vmem:[%s601 + $0x30] sm:$0xff]
        %v2695 = vld [vmem:[%s601 + $0x38] sm:$0xff]
        %v2696 = vld [vmem:[%s601 + $0x40] sm:$0xff]
        %v2697 = vld [vmem:[%s601 + $0x48] sm:$0xff]
        %v2698 = vld [vmem:[%s601 + $0x50] sm:$0xff]
        %v2699 = vld [vmem:[%s601 + $0x58] sm:$0xff]
        %v2700 = vld [vmem:[%s601 + $0x60] sm:$0xff]
        %v2701 = vld [vmem:[%s601 + $0x68] sm:$0xff]
        %v2702 = vld [vmem:[%s601 + $0x70] sm:$0xff]
        %v2703 = vld [vmem:[%s601 + $0x78] sm:$0xff]
        %v2704 = vld [vmem:[%s601 + $0x80] sm:$0xff]
        %v2705 = vld [vmem:[%s601 + $0x88] sm:$0xff]
        %v2706 = vld [vmem:[%s601 + $0x90] sm:$0xff]
        %v2707 = vld [vmem:[%s601 + $0x98] sm:$0xff]
        %v2708 = vld [vmem:[%s601 + $0xa0] sm:$0xff]
        %v2709 = vld [vmem:[%s601 + $0xa8] sm:$0xff]
        %v2710 = vld [vmem:[%s601 + $0xb0] sm:$0xff]
        %v2711 = vld [vmem:[%s601 + $0xb8] sm:$0xff]
        %v2712 = vld [vmem:[%s601 + $0xc0] sm:$0xff]
        %v2713 = vld [vmem:[%s601 + $0xc8] sm:$0xff]
        %v2714 = vld [vmem:[%s601 + $0xd0] sm:$0xff]
        %v2715 = vld [vmem:[%s601 + $0xd8] sm:$0xff]
        %v2716 = vld [vmem:[%s601 + $0xe0] sm:$0xff]
        %v2717 = vld [vmem:[%s601 + $0xe8] sm:$0xff]
        %v2718 = vld [vmem:[%s601 + $0xf0] sm:$0xff]
        %v2719 = vld [vmem:[%s601 + $0xf8] sm:$0xff]
        %v2720 = vadd.f32 %v2688, %v2656
        %v2721 = vadd.f32 %v2689, %v2657
        %v2722 = vadd.f32 %v2690, %v2658
        %v2723 = vadd.f32 %v2691, %v2659
        %v2724 = vadd.f32 %v2692, %v2660
        %v2725 = vadd.f32 %v2693, %v2661
        %v2726 = vadd.f32 %v2694, %v2662
        %v2727 = vadd.f32 %v2695, %v2663
        %v2728 = vadd.f32 %v2696, %v2664
        %v2729 = vadd.f32 %v2697, %v2665
        %v2730 = vadd.f32 %v2698, %v2666
        %v2731 = vadd.f32 %v2699, %v2667
        %v2732 = vadd.f32 %v2700, %v2668
        %v2733 = vadd.f32 %v2701, %v2669
        %v2734 = vadd.f32 %v2702, %v2670
        %v2735 = vadd.f32 %v2703, %v2671
        %v2736 = vadd.f32 %v2704, %v2672
        %v2737 = vadd.f32 %v2705, %v2673
        %v2738 = vadd.f32 %v2706, %v2674
        %v2739 = vadd.f32 %v2707, %v2675
        %v2740 = vadd.f32 %v2708, %v2676
        %v2741 = vadd.f32 %v2709, %v2677
        %v2742 = vadd.f32 %v2710, %v2678
        %v2743 = vadd.f32 %v2711, %v2679
        %v2744 = vadd.f32 %v2712, %v2680
        %v2745 = vadd.f32 %v2713, %v2681
        %v2746 = vadd.f32 %v2714, %v2682
        %v2747 = vadd.f32 %v2715, %v2683
        %v2748 = vadd.f32 %v2716, %v2684
        %v2749 = vadd.f32 %v2717, %v2685
        %v2750 = vadd.f32 %v2718, %v2686
        %v2751 = vadd.f32 %v2719, %v2687
        %v2752 = vadd.f32 %v2720, %v2721
        %2753 = vadd.xlane.f32.xlu0 %v2752
        %v2754 = vpop.xlane.xlu0 %2753
        %v2755 = vadd.f32 %v2722, %v2723
        %2756 = vadd.xlane.f32.xlu0 %v2755
        %v2757 = vpop.xlane.xlu0 %2756
        %v2758 = vadd.f32 %v2724, %v2725
        %2759 = vadd.xlane.f32.xlu0 %v2758
        %v2760 = vpop.xlane.xlu0 %2759
        %v2761 = vadd.f32 %v2726, %v2727
        %2762 = vadd.xlane.f32.xlu0 %v2761
        %v2763 = vpop.xlane.xlu0 %2762
        %v2764 = vadd.f32 %v2728, %v2729
        %2765 = vadd.xlane.f32.xlu0 %v2764
        %v2766 = vpop.xlane.xlu0 %2765
        %v2767 = vadd.f32 %v2730, %v2731
        %2768 = vadd.xlane.f32.xlu0 %v2767
        %v2769 = vpop.xlane.xlu0 %2768
        %v2770 = vadd.f32 %v2732, %v2733
        %2771 = vadd.xlane.f32.xlu0 %v2770
        %v2772 = vpop.xlane.xlu0 %2771
        %v2773 = vadd.f32 %v2734, %v2735
        %2774 = vadd.xlane.f32.xlu0 %v2773
        %v2775 = vpop.xlane.xlu0 %2774
        %v2776 = vadd.f32 %v2736, %v2737
        %2777 = vadd.xlane.f32.xlu0 %v2776
        %v2778 = vpop.xlane.xlu0 %2777
        %v2779 = vadd.f32 %v2738, %v2739
        %2780 = vadd.xlane.f32.xlu0 %v2779
        %v2781 = vpop.xlane.xlu0 %2780
        %v2782 = vadd.f32 %v2740, %v2741
        %2783 = vadd.xlane.f32.xlu0 %v2782
        %v2784 = vpop.xlane.xlu0 %2783
        %v2785 = vadd.f32 %v2742, %v2743
        %2786 = vadd.xlane.f32.xlu0 %v2785
        %v2787 = vpop.xlane.xlu0 %2786
        %v2788 = vadd.f32 %v2744, %v2745
        %2789 = vadd.xlane.f32.xlu0 %v2788
        %v2790 = vpop.xlane.xlu0 %2789
        %v2791 = vadd.f32 %v2746, %v2747
        %2792 = vadd.xlane.f32.xlu0 %v2791
        %v2793 = vpop.xlane.xlu0 %2792
        %v2794 = vadd.f32 %v2748, %v2749
        %2795 = vadd.xlane.f32.xlu0 %v2794
        %v2796 = vpop.xlane.xlu0 %2795
        %v2797 = vadd.f32 %v2750, %v2751
        %2798 = vadd.xlane.f32.xlu0 %v2797
        %v2799 = vpop.xlane.xlu0 %2798
        %v2800 = vrcp.pop 256.0
        %v2801 = vmul.f32 %v2754, %v2800
        %v2802 = vmul.f32 %v2757, %v2800
        %v2803 = vmul.f32 %v2760, %v2800
        %v2804 = vmul.f32 %v2763, %v2800
        %v2805 = vmul.f32 %v2766, %v2800
        %v2806 = vmul.f32 %v2769, %v2800
        %v2807 = vmul.f32 %v2772, %v2800
        %v2808 = vmul.f32 %v2775, %v2800
        %v2809 = vmul.f32 %v2778, %v2800
        %v2810 = vmul.f32 %v2781, %v2800
        %v2811 = vmul.f32 %v2784, %v2800
        %v2812 = vmul.f32 %v2787, %v2800
        %v2813 = vmul.f32 %v2790, %v2800
        %v2814 = vmul.f32 %v2793, %v2800
        %v2815 = vmul.f32 %v2796, %v2800
        %v2816 = vmul.f32 %v2799, %v2800
        %v2817 = vsub.f32 %v2720, %v2801
        %v2818 = vsub.f32 %v2721, %v2801
        %v2819 = vsub.f32 %v2722, %v2802
        %v2820 = vsub.f32 %v2723, %v2802
        %v2821 = vsub.f32 %v2724, %v2803
        %v2822 = vsub.f32 %v2725, %v2803
        %v2823 = vsub.f32 %v2726, %v2804
        %v2824 = vsub.f32 %v2727, %v2804
        %v2825 = vsub.f32 %v2728, %v2805
        %v2826 = vsub.f32 %v2729, %v2805
        %v2827 = vsub.f32 %v2730, %v2806
        %v2828 = vsub.f32 %v2731, %v2806
        %v2829 = vsub.f32 %v2732, %v2807
        %v2830 = vsub.f32 %v2733, %v2807
        %v2831 = vsub.f32 %v2734, %v2808
        %v2832 = vsub.f32 %v2735, %v2808
        %v2833 = vsub.f32 %v2736, %v2809
        %v2834 = vsub.f32 %v2737, %v2809
        %v2835 = vsub.f32 %v2738, %v2810
        %v2836 = vsub.f32 %v2739, %v2810
        %v2837 = vsub.f32 %v2740, %v2811
        %v2838 = vsub.f32 %v2741, %v2811
        %v2839 = vsub.f32 %v2742, %v2812
        %v2840 = vsub.f32 %v2743, %v2812
        %v2841 = vsub.f32 %v2744, %v2813
        %v2842 = vsub.f32 %v2745, %v2813
        %v2843 = vsub.f32 %v2746, %v2814
        %v2844 = vsub.f32 %v2747, %v2814
        %v2845 = vsub.f32 %v2748, %v2815
        %v2846 = vsub.f32 %v2749, %v2815
        %v2847 = vsub.f32 %v2750, %v2816
        %v2848 = vsub.f32 %v2751, %v2816
        %v2849 = vmul.f32 %v2817, %v2817
        %v2850 = vmul.f32 %v2818, %v2818
        %v2851 = vmul.f32 %v2819, %v2819
        %v2852 = vmul.f32 %v2820, %v2820
        %v2853 = vmul.f32 %v2821, %v2821
        %v2854 = vmul.f32 %v2822, %v2822
        %v2855 = vmul.f32 %v2823, %v2823
        %v2856 = vmul.f32 %v2824, %v2824
        %v2857 = vmul.f32 %v2825, %v2825
        %v2858 = vmul.f32 %v2826, %v2826
        %v2859 = vmul.f32 %v2827, %v2827
        %v2860 = vmul.f32 %v2828, %v2828
        %v2861 = vmul.f32 %v2829, %v2829
        %v2862 = vmul.f32 %v2830, %v2830
        %v2863 = vmul.f32 %v2831, %v2831
        %v2864 = vmul.f32 %v2832, %v2832
        %v2865 = vmul.f32 %v2833, %v2833
        %v2866 = vmul.f32 %v2834, %v2834
        %v2867 = vmul.f32 %v2835, %v2835
        %v2868 = vmul.f32 %v2836, %v2836
        %v2869 = vmul.f32 %v2837, %v2837
        %v2870 = vmul.f32 %v2838, %v2838
        %v2871 = vmul.f32 %v2839, %v2839
        %v2872 = vmul.f32 %v2840, %v2840
        %v2873 = vmul.f32 %v2841, %v2841
        %v2874 = vmul.f32 %v2842, %v2842
        %v2875 = vmul.f32 %v2843, %v2843
        %v2876 = vmul.f32 %v2844, %v2844
        %v2877 = vmul.f32 %v2845, %v2845
        %v2878 = vmul.f32 %v2846, %v2846
        %v2879 = vmul.f32 %v2847, %v2847
        %v2880 = vmul.f32 %v2848, %v2848
        %v2881 = vadd.f32 %v2849, %v2850
        %2882 = vadd.xlane.f32.xlu0 %v2881
        %v2883 = vpop.xlane.xlu0 %2882
        %v2884 = vadd.f32 %v2851, %v2852
        %2885 = vadd.xlane.f32.xlu0 %v2884
        %v2886 = vpop.xlane.xlu0 %2885
        %v2887 = vadd.f32 %v2853, %v2854
        %2888 = vadd.xlane.f32.xlu0 %v2887
        %v2889 = vpop.xlane.xlu0 %2888
        %v2890 = vadd.f32 %v2855, %v2856
        %2891 = vadd.xlane.f32.xlu0 %v2890
        %v2892 = vpop.xlane.xlu0 %2891
        %v2893 = vadd.f32 %v2857, %v2858
        %2894 = vadd.xlane.f32.xlu0 %v2893
        %v2895 = vpop.xlane.xlu0 %2894
        %v2896 = vadd.f32 %v2859, %v2860
        %2897 = vadd.xlane.f32.xlu0 %v2896
        %v2898 = vpop.xlane.xlu0 %2897
        %v2899 = vadd.f32 %v2861, %v2862
        %2900 = vadd.xlane.f32.xlu0 %v2899
        %v2901 = vpop.xlane.xlu0 %2900
        %v2902 = vadd.f32 %v2863, %v2864
        %2903 = vadd.xlane.f32.xlu0 %v2902
        %v2904 = vpop.xlane.xlu0 %2903
        %v2905 = vadd.f32 %v2865, %v2866
        %2906 = vadd.xlane.f32.xlu0 %v2905
        %v2907 = vpop.xlane.xlu0 %2906
        %v2908 = vadd.f32 %v2867, %v2868
        %2909 = vadd.xlane.f32.xlu0 %v2908
        %v2910 = vpop.xlane.xlu0 %2909
        %v2911 = vadd.f32 %v2869, %v2870
        %2912 = vadd.xlane.f32.xlu0 %v2911
        %v2913 = vpop.xlane.xlu0 %2912
        %v2914 = vadd.f32 %v2871, %v2872
        %2915 = vadd.xlane.f32.xlu0 %v2914
        %v2916 = vpop.xlane.xlu0 %2915
        %v2917 = vadd.f32 %v2873, %v2874
        %2918 = vadd.xlane.f32.xlu0 %v2917
        %v2919 = vpop.xlane.xlu0 %2918
        %v2920 = vadd.f32 %v2875, %v2876
        %2921 = vadd.xlane.f32.xlu0 %v2920
        %v2922 = vpop.xlane.xlu0 %2921
        %v2923 = vadd.f32 %v2877, %v2878
        %2924 = vadd.xlane.f32.xlu0 %v2923
        %v2925 = vpop.xlane.xlu0 %2924
        %v2926 = vadd.f32 %v2879, %v2880
        %2927 = vadd.xlane.f32.xlu0 %v2926
        %v2928 = vpop.xlane.xlu0 %2927
        %v2929 = vmul.f32 %v2883, %v2800
        %v2930 = vmul.f32 %v2886, %v2800
        %v2931 = vmul.f32 %v2889, %v2800
        %v2932 = vmul.f32 %v2892, %v2800
        %v2933 = vmul.f32 %v2895, %v2800
        %v2934 = vmul.f32 %v2898, %v2800
        %v2935 = vmul.f32 %v2901, %v2800
        %v2936 = vmul.f32 %v2904, %v2800
        %v2937 = vmul.f32 %v2907, %v2800
        %v2938 = vmul.f32 %v2910, %v2800
        %v2939 = vmul.f32 %v2913, %v2800
        %v2940 = vmul.f32 %v2916, %v2800
        %v2941 = vmul.f32 %v2919, %v2800
        %v2942 = vmul.f32 %v2922, %v2800
        %v2943 = vmul.f32 %v2925, %v2800
        %v2944 = vmul.f32 %v2928, %v2800
        %v2945 = vadd.f32 %v2929, 1e-05
        %v2946 = vadd.f32 %v2930, 1e-05
        %v2947 = vadd.f32 %v2931, 1e-05
        %v2948 = vadd.f32 %v2932, 1e-05
        %v2949 = vadd.f32 %v2933, 1e-05
        %v2950 = vadd.f32 %v2934, 1e-05
        %v2951 = vadd.f32 %v2935, 1e-05
        %v2952 = vadd.f32 %v2936, 1e-05
        %v2953 = vadd.f32 %v2937, 1e-05
        %v2954 = vadd.f32 %v2938, 1e-05
        %v2955 = vadd.f32 %v2939, 1e-05
        %v2956 = vadd.f32 %v2940, 1e-05
        %v2957 = vadd.f32 %v2941, 1e-05
        %v2958 = vadd.f32 %v2942, 1e-05
        %v2959 = vadd.f32 %v2943, 1e-05
        %v2960 = vadd.f32 %v2944, 1e-05
        %v2961 = vrsqrt.pop %v2945
        %v2962 = vrsqrt.pop %v2946
        %v2963 = vrsqrt.pop %v2947
        %v2964 = vrsqrt.pop %v2948
        %v2965 = vrsqrt.pop %v2949
        %v2966 = vrsqrt.pop %v2950
        %v2967 = vrsqrt.pop %v2951
        %v2968 = vrsqrt.pop %v2952
        %v2969 = vrsqrt.pop %v2953
        %v2970 = vrsqrt.pop %v2954
        %v2971 = vrsqrt.pop %v2955
        %v2972 = vrsqrt.pop %v2956
        %v2973 = vrsqrt.pop %v2957
        %v2974 = vrsqrt.pop %v2958
        %v2975 = vrsqrt.pop %v2959
        %v2976 = vrsqrt.pop %v2960
        %v2977 = vmul.f32 %v2817, %v2961
        %v2978 = vmul.f32 %v2818, %v2961
        %v2979 = vmul.f32 %v2819, %v2962
        %v2980 = vmul.f32 %v2820, %v2962
        %v2981 = vmul.f32 %v2821, %v2963
        %v2982 = vmul.f32 %v2822, %v2963
        %v2983 = vmul.f32 %v2823, %v2964
        %v2984 = vmul.f32 %v2824, %v2964
        %v2985 = vmul.f32 %v2825, %v2965
        %v2986 = vmul.f32 %v2826, %v2965
        %v2987 = vmul.f32 %v2827, %v2966
        %v2988 = vmul.f32 %v2828, %v2966
        %v2989 = vmul.f32 %v2829, %v2967
        %v2990 = vmul.f32 %v2830, %v2967
        %v2991 = vmul.f32 %v2831, %v2968
        %v2992 = vmul.f32 %v2832, %v2968
        %v2993 = vmul.f32 %v2833, %v2969
        %v2994 = vmul.f32 %v2834, %v2969
        %v2995 = vmul.f32 %v2835, %v2970
        %v2996 = vmul.f32 %v2836, %v2970
        %v2997 = vmul.f32 %v2837, %v2971
        %v2998 = vmul.f32 %v2838, %v2971
        %v2999 = vmul.f32 %v2839, %v2972
        %v3000 = vmul.f32 %v2840, %v2972
        %v3001 = vmul.f32 %v2841, %v2973
        %v3002 = vmul.f32 %v2842, %v2973
        %v3003 = vmul.f32 %v2843, %v2974
        %v3004 = vmul.f32 %v2844, %v2974
        %v3005 = vmul.f32 %v2845, %v2975
        %v3006 = vmul.f32 %v2846, %v2975
        %v3007 = vmul.f32 %v2847, %v2976
        %v3008 = vmul.f32 %v2848, %v2976
        %v3009 = vld [vmem:[%s6] sm:$0x3]
        %v3011 = vlaneseq
        %v3012 = vshrl.u32 %v3011, 7
        %v3013 = vsub.s32 0, %v3012
        %v3014 = vrot.slane %v3009, %v3013
        %v3015 = vlaneseq
        %v3016 = vshrl.u32 %v3015, 7
        %v3017 = vsub.s32 1, %v3016
        %v3018 = vrot.slane %v3009, %v3017
        %v3021 = vmul.f32 %v2977, %v3014
        %v3022 = vmul.f32 %v2978, %v3018
        %v3023 = vmul.f32 %v2979, %v3014
        %v3024 = vmul.f32 %v2980, %v3018
        %v3025 = vmul.f32 %v2981, %v3014
        %v3026 = vmul.f32 %v2982, %v3018
        %v3027 = vmul.f32 %v2983, %v3014
        %v3028 = vmul.f32 %v2984, %v3018
        %v3029 = vmul.f32 %v2985, %v3014
        %v3030 = vmul.f32 %v2986, %v3018
        %v3031 = vmul.f32 %v2987, %v3014
        %v3032 = vmul.f32 %v2988, %v3018
        %v3033 = vmul.f32 %v2989, %v3014
        %v3034 = vmul.f32 %v2990, %v3018
        %v3035 = vmul.f32 %v2991, %v3014
        %v3036 = vmul.f32 %v2992, %v3018
        %v3037 = vmul.f32 %v2993, %v3014
        %v3038 = vmul.f32 %v2994, %v3018
        %v3039 = vmul.f32 %v2995, %v3014
        %v3040 = vmul.f32 %v2996, %v3018
        %v3041 = vmul.f32 %v2997, %v3014
        %v3042 = vmul.f32 %v2998, %v3018
        %v3043 = vmul.f32 %v2999, %v3014
        %v3044 = vmul.f32 %v3000, %v3018
        %v3045 = vmul.f32 %v3001, %v3014
        %v3046 = vmul.f32 %v3002, %v3018
        %v3047 = vmul.f32 %v3003, %v3014
        %v3048 = vmul.f32 %v3004, %v3018
        %v3049 = vmul.f32 %v3005, %v3014
        %v3050 = vmul.f32 %v3006, %v3018
        %v3051 = vmul.f32 %v3007, %v3014
        %v3052 = vmul.f32 %v3008, %v3018
        %v3053 = vld [vmem:[%s7] sm:$0x3]
        %v3055 = vlaneseq
        %v3056 = vshrl.u32 %v3055, 7
        %v3057 = vsub.s32 0, %v3056
        %v3058 = vrot.slane %v3053, %v3057
        %v3059 = vlaneseq
        %v3060 = vshrl.u32 %v3059, 7
        %v3061 = vsub.s32 1, %v3060
        %v3062 = vrot.slane %v3053, %v3061
        %v3065 = vadd.f32 %v3021, %v3058
        %v3066 = vadd.f32 %v3022, %v3062
        %v3067 = vadd.f32 %v3023, %v3058
        %v3068 = vadd.f32 %v3024, %v3062
        %v3069 = vadd.f32 %v3025, %v3058
        %v3070 = vadd.f32 %v3026, %v3062
        %v3071 = vadd.f32 %v3027, %v3058
        %v3072 = vadd.f32 %v3028, %v3062
        %v3073 = vadd.f32 %v3029, %v3058
        %v3074 = vadd.f32 %v3030, %v3062
        %v3075 = vadd.f32 %v3031, %v3058
        %v3076 = vadd.f32 %v3032, %v3062
        %v3077 = vadd.f32 %v3033, %v3058
        %v3078 = vadd.f32 %v3034, %v3062
        %v3079 = vadd.f32 %v3035, %v3058
        %v3080 = vadd.f32 %v3036, %v3062
        %v3081 = vadd.f32 %v3037, %v3058
        %v3082 = vadd.f32 %v3038, %v3062
        %v3083 = vadd.f32 %v3039, %v3058
        %v3084 = vadd.f32 %v3040, %v3062
        %v3085 = vadd.f32 %v3041, %v3058
        %v3086 = vadd.f32 %v3042, %v3062
        %v3087 = vadd.f32 %v3043, %v3058
        %v3088 = vadd.f32 %v3044, %v3062
        %v3089 = vadd.f32 %v3045, %v3058
        %v3090 = vadd.f32 %v3046, %v3062
        %v3091 = vadd.f32 %v3047, %v3058
        %v3092 = vadd.f32 %v3048, %v3062
        %v3093 = vadd.f32 %v3049, %v3058
        %v3094 = vadd.f32 %v3050, %v3062
        %v3095 = vadd.f32 %v3051, %v3058
        %v3096 = vadd.f32 %v3052, %v3062
        %v3097 = vpack.c.bf16 %v3067, %v3065
        %v3098 = vpack.c.bf16 %v3068, %v3066
        %v3099 = vpack.c.bf16 %v3071, %v3069
        %v3100 = vpack.c.bf16 %v3072, %v3070
        %v3101 = vpack.c.bf16 %v3075, %v3073
        %v3102 = vpack.c.bf16 %v3076, %v3074
        %v3103 = vpack.c.bf16 %v3079, %v3077
        %v3104 = vpack.c.bf16 %v3080, %v3078
        %v3105 = vpack.c.bf16 %v3083, %v3081
        %v3106 = vpack.c.bf16 %v3084, %v3082
        %v3107 = vpack.c.bf16 %v3087, %v3085
        %v3108 = vpack.c.bf16 %v3088, %v3086
        %v3109 = vpack.c.bf16 %v3091, %v3089
        %v3110 = vpack.c.bf16 %v3092, %v3090
        %v3111 = vpack.c.bf16 %v3095, %v3093
        %v3112 = vpack.c.bf16 %v3096, %v3094
        %v3113 = vld [vmem:[%s8] sm:$0xff]
        %v3114 = vld [vmem:[%s8 + $0x8] sm:$0xff]
        %v3115 = vld [vmem:[%s8 + $0x10] sm:$0xff]
        %v3116 = vld [vmem:[%s8 + $0x18] sm:$0xff]
        %v3117 = vld [vmem:[%s8 + $0x20] sm:$0xff]
        %v3118 = vld [vmem:[%s8 + $0x28] sm:$0xff]
        %v3119 = vld [vmem:[%s8 + $0x30] sm:$0xff]
        %v3120 = vld [vmem:[%s8 + $0x38] sm:$0xff]
        %v3121 = vld [vmem:[%s8 + $0x40] sm:$0xff]
        %v3122 = vld [vmem:[%s8 + $0x48] sm:$0xff]
        %v3123 = vld [vmem:[%s8 + $0x50] sm:$0xff]
        %v3124 = vld [vmem:[%s8 + $0x58] sm:$0xff]
        %v3125 = vld [vmem:[%s8 + $0x60] sm:$0xff]
        %v3126 = vld [vmem:[%s8 + $0x68] sm:$0xff]
        %v3127 = vld [vmem:[%s8 + $0x70] sm:$0xff]
        %v3128 = vld [vmem:[%s8 + $0x78] sm:$0xff]
        %v3129 = vld [vmem:[%s8 + $0x80] sm:$0xff]
        %v3130 = vld [vmem:[%s8 + $0x88] sm:$0xff]
        %v3131 = vld [vmem:[%s8 + $0x90] sm:$0xff]
        %v3132 = vld [vmem:[%s8 + $0x98] sm:$0xff]
        %v3133 = vld [vmem:[%s8 + $0xa0] sm:$0xff]
        %v3134 = vld [vmem:[%s8 + $0xa8] sm:$0xff]
        %v3135 = vld [vmem:[%s8 + $0xb0] sm:$0xff]
        %v3136 = vld [vmem:[%s8 + $0xb8] sm:$0xff]
        %v3137 = vld [vmem:[%s8 + $0xc0] sm:$0xff]
        %v3138 = vld [vmem:[%s8 + $0xc8] sm:$0xff]
        %v3139 = vld [vmem:[%s8 + $0xd0] sm:$0xff]
        %v3140 = vld [vmem:[%s8 + $0xd8] sm:$0xff]
        %v3141 = vld [vmem:[%s8 + $0xe0] sm:$0xff]
        %v3142 = vld [vmem:[%s8 + $0xe8] sm:$0xff]
        %v3143 = vld [vmem:[%s8 + $0xf0] sm:$0xff]
        %v3144 = vld [vmem:[%s8 + $0xf8] sm:$0xff]
        %v3145 = vld [vmem:[%s9] sm:$0x3]
        %v3147 = vlaneseq
        %v3148 = vshrl.u32 %v3147, 7
        %v3149 = vsub.s32 0, %v3148
        %v3150 = vrot.slane %v3145, %v3149
        %v3151 = vlaneseq
        %v3152 = vshrl.u32 %v3151, 7
        %v3153 = vsub.s32 1, %v3152
        %v3154 = vrot.slane %v3145, %v3153
        %v3189 = vunpack.c.l.b16 %v3113
        %v3190 = vunpack.c.h.b16 %v3113
        %v3191 = vunpack.c.l.b16 %v3114
        %v3192 = vunpack.c.h.b16 %v3114
        %v3193 = vunpack.c.l.b16 %v3115
        %v3194 = vunpack.c.h.b16 %v3115
        %v3195 = vunpack.c.l.b16 %v3116
        %v3196 = vunpack.c.h.b16 %v3116
        %v3197 = vunpack.c.l.b16 %v3117
        %v3198 = vunpack.c.h.b16 %v3117
        %v3199 = vunpack.c.l.b16 %v3118
        %v3200 = vunpack.c.h.b16 %v3118
        %v3201 = vunpack.c.l.b16 %v3119
        %v3202 = vunpack.c.h.b16 %v3119
        %v3203 = vunpack.c.l.b16 %v3120
        %v3204 = vunpack.c.h.b16 %v3120
        %v3205 = vunpack.c.l.b16 %v3121
        %v3206 = vunpack.c.h.b16 %v3121
        %v3207 = vunpack.c.l.b16 %v3122
        %v3208 = vunpack.c.h.b16 %v3122
        %v3209 = vunpack.c.l.b16 %v3123
        %v3210 = vunpack.c.h.b16 %v3123
        %v3211 = vunpack.c.l.b16 %v3124
        %v3212 = vunpack.c.h.b16 %v3124
        %v3213 = vunpack.c.l.b16 %v3125
        %v3214 = vunpack.c.h.b16 %v3125
        %v3215 = vunpack.c.l.b16 %v3126
        %v3216 = vunpack.c.h.b16 %v3126
        %v3217 = vunpack.c.l.b16 %v3127
        %v3218 = vunpack.c.h.b16 %v3127
        %v3219 = vunpack.c.l.b16 %v3128
        %v3220 = vunpack.c.h.b16 %v3128
        %v3221 = vunpack.c.l.b16 %v3129
        %v3222 = vunpack.c.h.b16 %v3129
        %v3223 = vunpack.c.l.b16 %v3130
        %v3224 = vunpack.c.h.b16 %v3130
        %v3225 = vunpack.c.l.b16 %v3131
        %v3226 = vunpack.c.h.b16 %v3131
        %v3227 = vunpack.c.l.b16 %v3132
        %v3228 = vunpack.c.h.b16 %v3132
        %v3229 = vunpack.c.l.b16 %v3133
        %v3230 = vunpack.c.h.b16 %v3133
        %v3231 = vunpack.c.l.b16 %v3134
        %v3232 = vunpack.c.h.b16 %v3134
        %v3233 = vunpack.c.l.b16 %v3135
        %v3234 = vunpack.c.h.b16 %v3135
        %v3235 = vunpack.c.l.b16 %v3136
        %v3236 = vunpack.c.h.b16 %v3136
        %v3237 = vunpack.c.l.b16 %v3137
        %v3238 = vunpack.c.h.b16 %v3137
        %v3239 = vunpack.c.l.b16 %v3138
        %v3240 = vunpack.c.h.b16 %v3138
        %v3241 = vunpack.c.l.b16 %v3139
        %v3242 = vunpack.c.h.b16 %v3139
        %v3243 = vunpack.c.l.b16 %v3140
        %v3244 = vunpack.c.h.b16 %v3140
        %v3245 = vunpack.c.l.b16 %v3141
        %v3246 = vunpack.c.h.b16 %v3141
        %v3247 = vunpack.c.l.b16 %v3142
        %v3248 = vunpack.c.h.b16 %v3142
        %v3249 = vunpack.c.l.b16 %v3143
        %v3250 = vunpack.c.h.b16 %v3143
        %v3251 = vunpack.c.l.b16 %v3144
        %v3252 = vunpack.c.h.b16 %v3144
        %v3253 = vpack.c.b16 %v3191, %v3189
        %v3254 = vpack.c.b16 %v3192, %v3190
        %v3255 = vpack.c.b16 %v3195, %v3193
        %v3256 = vpack.c.b16 %v3196, %v3194
        %v3257 = vpack.c.b16 %v3199, %v3197
        %v3258 = vpack.c.b16 %v3200, %v3198
        %v3259 = vpack.c.b16 %v3203, %v3201
        %v3260 = vpack.c.b16 %v3204, %v3202
        %v3261 = vpack.c.b16 %v3207, %v3205
        %v3262 = vpack.c.b16 %v3208, %v3206
        %v3263 = vpack.c.b16 %v3211, %v3209
        %v3264 = vpack.c.b16 %v3212, %v3210
        %v3265 = vpack.c.b16 %v3215, %v3213
        %v3266 = vpack.c.b16 %v3216, %v3214
        %v3267 = vpack.c.b16 %v3219, %v3217
        %v3268 = vpack.c.b16 %v3220, %v3218
        %v3269 = vpack.c.b16 %v3223, %v3221
        %v3270 = vpack.c.b16 %v3224, %v3222
        %v3271 = vpack.c.b16 %v3227, %v3225
        %v3272 = vpack.c.b16 %v3228, %v3226
        %v3273 = vpack.c.b16 %v3231, %v3229
        %v3274 = vpack.c.b16 %v3232, %v3230
        %v3275 = vpack.c.b16 %v3235, %v3233
        %v3276 = vpack.c.b16 %v3236, %v3234
        %v3277 = vpack.c.b16 %v3239, %v3237
        %v3278 = vpack.c.b16 %v3240, %v3238
        %v3279 = vpack.c.b16 %v3243, %v3241
        %v3280 = vpack.c.b16 %v3244, %v3242
        %v3281 = vpack.c.b16 %v3247, %v3245
        %v3282 = vpack.c.b16 %v3248, %v3246
        %v3283 = vpack.c.b16 %v3251, %v3249
        %v3284 = vpack.c.b16 %v3252, %v3250
        %3317 = vmatprep.subr.bf16.mxu0 %v3254
        %3318 = vmatpush1.bf16.msra.mxu0 %v3253
        %3319 = vmatprep.subr.bf16.mxu0 %v3256
        %3320 = vmatpush1.bf16.msra.mxu0 %v3255
        %3321 = vmatprep.subr.bf16.mxu0 %v3258
        %3322 = vmatpush1.bf16.msra.mxu0 %v3257
        %3323 = vmatprep.subr.bf16.mxu0 %v3260
        %3324 = vmatpush1.bf16.msra.mxu0 %v3259
        %3325 = vmatprep.subr.bf16.mxu0 %v3262
        %3326 = vmatpush1.bf16.msra.mxu0 %v3261
        %3327 = vmatprep.subr.bf16.mxu0 %v3264
        %3328 = vmatpush1.bf16.msra.mxu0 %v3263
        %3329 = vmatprep.subr.bf16.mxu0 %v3266
        %3330 = vmatpush1.bf16.msra.mxu0 %v3265
        %3331 = vmatprep.subr.bf16.mxu0 %v3268
        %3332 = vmatpush1.bf16.msra.mxu0 %v3267
        %3333 = vmatprep.subr.bf16.mxu0 %v3270
        %3334 = vmatpush1.bf16.msra.mxu0 %v3269
        %3335 = vmatprep.subr.bf16.mxu0 %v3272
        %3336 = vmatpush1.bf16.msra.mxu0 %v3271
        %3337 = vmatprep.subr.bf16.mxu0 %v3274
        %3338 = vmatpush1.bf16.msra.mxu0 %v3273
        %3339 = vmatprep.subr.bf16.mxu0 %v3276
        %3340 = vmatpush1.bf16.msra.mxu0 %v3275
        %3341 = vmatprep.subr.bf16.mxu0 %v3278
        %3342 = vmatpush1.bf16.msra.mxu0 %v3277
        %3343 = vmatprep.subr.bf16.mxu0 %v3280
        %3344 = vmatpush1.bf16.msra.mxu0 %v3279
        %3345 = vmatprep.subr.bf16.mxu0 %v3282
        %3346 = vmatpush1.bf16.msra.mxu0 %v3281
        %3347 = vmatprep.subr.bf16.mxu0 %v3284
        %3348 = vmatpush1.bf16.msra.mxu0 %v3283
        %3349 = vmatprep.mubr.bf16.mxu0 %v3098
        %3350 = vmatmul.mubr.bf16.gmra.mrb[0].mxu0 %v3097
        %v3351 = vpop.f32.mrb[0].mxu0
        %v3352 = vadd.f32 %v3150, %v3351
        %v3353 = vpop.f32.mrb[0].mxu0
        %v3354 = vadd.f32 %v3154, %v3353
        %v3355 = vpop.f32.mrb[0].mxu0
        %v3356 = vadd.f32 %v3150, %v3355
        %v3357 = vpop.f32.mrb[0].mxu0
        %v3358 = vadd.f32 %v3154, %v3357
        %3359 = vmatprep.mubr.bf16.mxu0 %v3100
        %3360 = vmatmul.mubr.bf16.gmra.mrb[0].mxu0 %v3099
        %v3361 = vpop.f32.mrb[0].mxu0
        %v3362 = vadd.f32 %v3150, %v3361
        %v3363 = vpop.f32.mrb[0].mxu0
        %v3364 = vadd.f32 %v3154, %v3363
        %v3365 = vpop.f32.mrb[0].mxu0
        %v3366 = vadd.f32 %v3150, %v3365
        %v3367 = vpop.f32.mrb[0].mxu0
        %v3368 = vadd.f32 %v3154, %v3367
        %3369 = vmatprep.mubr.bf16.mxu0 %v3102
        %3370 = vmatmul.mubr.bf16.gmra.mrb[0].mxu0 %v3101
        %v3371 = vpop.f32.mrb[0].mxu0
        %v3372 = vadd.f32 %v3150, %v3371
        %v3373 = vpop.f32.mrb[0].mxu0
        %v3374 = vadd.f32 %v3154, %v3373
        %v3375 = vpop.f32.mrb[0].mxu0
        %v3376 = vadd.f32 %v3150, %v3375
        %v3377 = vpop.f32.mrb[0].mxu0
        %v3378 = vadd.f32 %v3154, %v3377
        %3379 = vmatprep.mubr.bf16.mxu0 %v3104
        %3380 = vmatmul.mubr.bf16.gmra.mrb[0].mxu0 %v3103
        %v3381 = vpop.f32.mrb[0].mxu0
        %v3382 = vadd.f32 %v3150, %v3381
        %v3383 = vpop.f32.mrb[0].mxu0
        %v3384 = vadd.f32 %v3154, %v3383
        %v3385 = vpop.f32.mrb[0].mxu0
        %v3386 = vadd.f32 %v3150, %v3385
        %v3387 = vpop.f32.mrb[0].mxu0
        %v3388 = vadd.f32 %v3154, %v3387
        %3389 = vmatprep.mubr.bf16.mxu0 %v3106
        %3390 = vmatmul.mubr.bf16.gmra.mrb[0].mxu0 %v3105
        %v3391 = vpop.f32.mrb[0].mxu0
        %v3392 = vadd.f32 %v3150, %v3391
        %v3393 = vpop.f32.mrb[0].mxu0
        %v3394 = vadd.f32 %v3154, %v3393
        %v3395 = vpop.f32.mrb[0].mxu0
        %v3396 = vadd.f32 %v3150, %v3395
        %v3397 = vpop.f32.mrb[0].mxu0
        %v3398 = vadd.f32 %v3154, %v3397
        %3399 = vmatprep.mubr.bf16.mxu0 %v3108
        %3400 = vmatmul.mubr.bf16.gmra.mrb[0].mxu0 %v3107
        %v3401 = vpop.f32.mrb[0].mxu0
        %v3402 = vadd.f32 %v3150, %v3401
        %v3403 = vpop.f32.mrb[0].mxu0
        %v3404 = vadd.f32 %v3154, %v3403
        %v3405 = vpop.f32.mrb[0].mxu0
        %v3406 = vadd.f32 %v3150, %v3405
        %v3407 = vpop.f32.mrb[0].mxu0
        %v3408 = vadd.f32 %v3154, %v3407
        %3409 = vmatprep.mubr.bf16.mxu0 %v3110
        %3410 = vmatmul.mubr.bf16.gmra.mrb[0].mxu0 %v3109
        %v3411 = vpop.f32.mrb[0].mxu0
        %v3412 = vadd.f32 %v3150, %v3411
        %v3413 = vpop.f32.mrb[0].mxu0
        %v3414 = vadd.f32 %v3154, %v3413
        %v3415 = vpop.f32.mrb[0].mxu0
        %v3416 = vadd.f32 %v3150, %v3415
        %v3417 = vpop.f32.mrb[0].mxu0
        %v3418 = vadd.f32 %v3154, %v3417
        %3419 = vmatprep.mubr.bf16.mxu0 %v3112
        %3420 = vmatmul.mubr.bf16.gmra.mrb[0].mxu0 %v3111
        %v3421 = vpop.f32.mrb[0].mxu0
        %v3422 = vadd.f32 %v3150, %v3421
        %v3423 = vpop.f32.mrb[0].mxu0
        %v3424 = vadd.f32 %v3154, %v3423
        %v3425 = vpop.f32.mrb[0].mxu0
        %v3426 = vadd.f32 %v3150, %v3425
        %v3427 = vpop.f32.mrb[0].mxu0
        %v3428 = vadd.f32 %v3154, %v3427
        %3429 = vdwg.mxu0
        %v3430 = vmax.f32 %v3352, 0.0
        %v3431 = vmax.f32 %v3354, 0.0
        %v3432 = vmax.f32 %v3356, 0.0
        %v3433 = vmax.f32 %v3358, 0.0
        %v3434 = vmax.f32 %v3362, 0.0
        %v3435 = vmax.f32 %v3364, 0.0
        %v3436 = vmax.f32 %v3366, 0.0
        %v3437 = vmax.f32 %v3368, 0.0
        %v3438 = vmax.f32 %v3372, 0.0
        %v3439 = vmax.f32 %v3374, 0.0
        %v3440 = vmax.f32 %v3376, 0.0
        %v3441 = vmax.f32 %v3378, 0.0
        %v3442 = vmax.f32 %v3382, 0.0
        %v3443 = vmax.f32 %v3384, 0.0
        %v3444 = vmax.f32 %v3386, 0.0
        %v3445 = vmax.f32 %v3388, 0.0
        %v3446 = vmax.f32 %v3392, 0.0
        %v3447 = vmax.f32 %v3394, 0.0
        %v3448 = vmax.f32 %v3396, 0.0
        %v3449 = vmax.f32 %v3398, 0.0
        %v3450 = vmax.f32 %v3402, 0.0
        %v3451 = vmax.f32 %v3404, 0.0
        %v3452 = vmax.f32 %v3406, 0.0
        %v3453 = vmax.f32 %v3408, 0.0
        %v3454 = vmax.f32 %v3412, 0.0
        %v3455 = vmax.f32 %v3414, 0.0
        %v3456 = vmax.f32 %v3416, 0.0
        %v3457 = vmax.f32 %v3418, 0.0
        %v3458 = vmax.f32 %v3422, 0.0
        %v3459 = vmax.f32 %v3424, 0.0
        %v3460 = vmax.f32 %v3426, 0.0
        %v3461 = vmax.f32 %v3428, 0.0
        %v3462 = vpack.c.bf16 %v3432, %v3430
        %v3463 = vpack.c.bf16 %v3433, %v3431
        %v3464 = vpack.c.bf16 %v3436, %v3434
        %v3465 = vpack.c.bf16 %v3437, %v3435
        %v3466 = vpack.c.bf16 %v3440, %v3438
        %v3467 = vpack.c.bf16 %v3441, %v3439
        %v3468 = vpack.c.bf16 %v3444, %v3442
        %v3469 = vpack.c.bf16 %v3445, %v3443
        %v3470 = vpack.c.bf16 %v3448, %v3446
        %v3471 = vpack.c.bf16 %v3449, %v3447
        %v3472 = vpack.c.bf16 %v3452, %v3450
        %v3473 = vpack.c.bf16 %v3453, %v3451
        %v3474 = vpack.c.bf16 %v3456, %v3454
        %v3475 = vpack.c.bf16 %v3457, %v3455
        %v3476 = vpack.c.bf16 %v3460, %v3458
        %v3477 = vpack.c.bf16 %v3461, %v3459
        %v3478 = vld [vmem:[%s10] sm:$0xff]
        %v3479 = vld [vmem:[%s10 + $0x8] sm:$0xff]
        %v3480 = vld [vmem:[%s10 + $0x10] sm:$0xff]
        %v3481 = vld [vmem:[%s10 + $0x18] sm:$0xff]
        %v3482 = vld [vmem:[%s10 + $0x20] sm:$0xff]
        %v3483 = vld [vmem:[%s10 + $0x28] sm:$0xff]
        %v3484 = vld [vmem:[%s10 + $0x30] sm:$0xff]
        %v3485 = vld [vmem:[%s10 + $0x38] sm:$0xff]
        %v3486 = vld [vmem:[%s10 + $0x40] sm:$0xff]
        %v3487 = vld [vmem:[%s10 + $0x48] sm:$0xff]
        %v3488 = vld [vmem:[%s10 + $0x50] sm:$0xff]
        %v3489 = vld [vmem:[%s10 + $0x58] sm:$0xff]
        %v3490 = vld [vmem:[%s10 + $0x60] sm:$0xff]
        %v3491 = vld [vmem:[%s10 + $0x68] sm:$0xff]
        %v3492 = vld [vmem:[%s10 + $0x70] sm:$0xff]
        %v3493 = vld [vmem:[%s10 + $0x78] sm:$0xff]
        %v3494 = vld [vmem:[%s10 + $0x80] sm:$0xff]
        %v3495 = vld [vmem:[%s10 + $0x88] sm:$0xff]
        %v3496 = vld [vmem:[%s10 + $0x90] sm:$0xff]
        %v3497 = vld [vmem:[%s10 + $0x98] sm:$0xff]
        %v3498 = vld [vmem:[%s10 + $0xa0] sm:$0xff]
        %v3499 = vld [vmem:[%s10 + $0xa8] sm:$0xff]
        %v3500 = vld [vmem:[%s10 + $0xb0] sm:$0xff]
        %v3501 = vld [vmem:[%s10 + $0xb8] sm:$0xff]
        %v3502 = vld [vmem:[%s10 + $0xc0] sm:$0xff]
        %v3503 = vld [vmem:[%s10 + $0xc8] sm:$0xff]
        %v3504 = vld [vmem:[%s10 + $0xd0] sm:$0xff]
        %v3505 = vld [vmem:[%s10 + $0xd8] sm:$0xff]
        %v3506 = vld [vmem:[%s10 + $0xe0] sm:$0xff]
        %v3507 = vld [vmem:[%s10 + $0xe8] sm:$0xff]
        %v3508 = vld [vmem:[%s10 + $0xf0] sm:$0xff]
        %v3509 = vld [vmem:[%s10 + $0xf8] sm:$0xff]
        %v3510 = vld [vmem:[%s11] sm:$0x3]
        %v3512 = vlaneseq
        %v3513 = vshrl.u32 %v3512, 7
        %v3514 = vsub.s32 0, %v3513
        %v3515 = vrot.slane %v3510, %v3514
        %v3516 = vlaneseq
        %v3517 = vshrl.u32 %v3516, 7
        %v3518 = vsub.s32 1, %v3517
        %v3519 = vrot.slane %v3510, %v3518
        %v3554 = vunpack.c.l.b16 %v3478
        %v3555 = vunpack.c.h.b16 %v3478
        %v3556 = vunpack.c.l.b16 %v3479
        %v3557 = vunpack.c.h.b16 %v3479
        %v3558 = vunpack.c.l.b16 %v3480
        %v3559 = vunpack.c.h.b16 %v3480
        %v3560 = vunpack.c.l.b16 %v3481
        %v3561 = vunpack.c.h.b16 %v3481
        %v3562 = vunpack.c.l.b16 %v3482
        %v3563 = vunpack.c.h.b16 %v3482
        %v3564 = vunpack.c.l.b16 %v3483
        %v3565 = vunpack.c.h.b16 %v3483
        %v3566 = vunpack.c.l.b16 %v3484
        %v3567 = vunpack.c.h.b16 %v3484
        %v3568 = vunpack.c.l.b16 %v3485
        %v3569 = vunpack.c.h.b16 %v3485
        %v3570 = vunpack.c.l.b16 %v3486
        %v3571 = vunpack.c.h.b16 %v3486
        %v3572 = vunpack.c.l.b16 %v3487
        %v3573 = vunpack.c.h.b16 %v3487
        %v3574 = vunpack.c.l.b16 %v3488
        %v3575 = vunpack.c.h.b16 %v3488
        %v3576 = vunpack.c.l.b16 %v3489
        %v3577 = vunpack.c.h.b16 %v3489
        %v3578 = vunpack.c.l.b16 %v3490
        %v3579 = vunpack.c.h.b16 %v3490
        %v3580 = vunpack.c.l.b16 %v3491
        %v3581 = vunpack.c.h.b16 %v3491
        %v3582 = vunpack.c.l.b16 %v3492
        %v3583 = vunpack.c.h.b16 %v3492
        %v3584 = vunpack.c.l.b16 %v3493
        %v3585 = vunpack.c.h.b16 %v3493
        %v3586 = vunpack.c.l.b16 %v3494
        %v3587 = vunpack.c.h.b16 %v3494
        %v3588 = vunpack.c.l.b16 %v3495
        %v3589 = vunpack.c.h.b16 %v3495
        %v3590 = vunpack.c.l.b16 %v3496
        %v3591 = vunpack.c.h.b16 %v3496
        %v3592 = vunpack.c.l.b16 %v3497
        %v3593 = vunpack.c.h.b16 %v3497
        %v3594 = vunpack.c.l.b16 %v3498
        %v3595 = vunpack.c.h.b16 %v3498
        %v3596 = vunpack.c.l.b16 %v3499
        %v3597 = vunpack.c.h.b16 %v3499
        %v3598 = vunpack.c.l.b16 %v3500
        %v3599 = vunpack.c.h.b16 %v3500
        %v3600 = vunpack.c.l.b16 %v3501
        %v3601 = vunpack.c.h.b16 %v3501
        %v3602 = vunpack.c.l.b16 %v3502
        %v3603 = vunpack.c.h.b16 %v3502
        %v3604 = vunpack.c.l.b16 %v3503
        %v3605 = vunpack.c.h.b16 %v3503
        %v3606 = vunpack.c.l.b16 %v3504
        %v3607 = vunpack.c.h.b16 %v3504
        %v3608 = vunpack.c.l.b16 %v3505
        %v3609 = vunpack.c.h.b16 %v3505
        %v3610 = vunpack.c.l.b16 %v3506
        %v3611 = vunpack.c.h.b16 %v3506
        %v3612 = vunpack.c.l.b16 %v3507
        %v3613 = vunpack.c.h.b16 %v3507
        %v3614 = vunpack.c.l.b16 %v3508
        %v3615 = vunpack.c.h.b16 %v3508
        %v3616 = vunpack.c.l.b16 %v3509
        %v3617 = vunpack.c.h.b16 %v3509
        %v3618 = vpack.c.b16 %v3556, %v3554
        %v3619 = vpack.c.b16 %v3557, %v3555
        %v3620 = vpack.c.b16 %v3560, %v3558
        %v3621 = vpack.c.b16 %v3561, %v3559
        %v3622 = vpack.c.b16 %v3564, %v3562
        %v3623 = vpack.c.b16 %v3565, %v3563
        %v3624 = vpack.c.b16 %v3568, %v3566
        %v3625 = vpack.c.b16 %v3569, %v3567
        %v3626 = vpack.c.b16 %v3572, %v3570
        %v3627 = vpack.c.b16 %v3573, %v3571
        %v3628 = vpack.c.b16 %v3576, %v3574
        %v3629 = vpack.c.b16 %v3577, %v3575
        %v3630 = vpack.c.b16 %v3580, %v3578
        %v3631 = vpack.c.b16 %v3581, %v3579
        %v3632 = vpack.c.b16 %v3584, %v3582
        %v3633 = vpack.c.b16 %v3585, %v3583
        %v3634 = vpack.c.b16 %v3588, %v3586
        %v3635 = vpack.c.b16 %v3589, %v3587
        %v3636 = vpack.c.b16 %v3592, %v3590
        %v3637 = vpack.c.b16 %v3593, %v3591
        %v3638 = vpack.c.b16 %v3596, %v3594
        %v3639 = vpack.c.b16 %v3597, %v3595
        %v3640 = vpack.c.b16 %v3600, %v3598
        %v3641 = vpack.c.b16 %v3601, %v3599
        %v3642 = vpack.c.b16 %v3604, %v3602
        %v3643 = vpack.c.b16 %v3605, %v3603
        %v3644 = vpack.c.b16 %v3608, %v3606
        %v3645 = vpack.c.b16 %v3609, %v3607
        %v3646 = vpack.c.b16 %v3612, %v3610
        %v3647 = vpack.c.b16 %v3613, %v3611
        %v3648 = vpack.c.b16 %v3616, %v3614
        %v3649 = vpack.c.b16 %v3617, %v3615
        %3682 = vmatprep.subr.bf16.mxu0 %v3619
        %3683 = vmatpush1.bf16.msra.mxu0 %v3618
        %3684 = vmatprep.subr.bf16.mxu0 %v3621
        %3685 = vmatpush1.bf16.msra.mxu0 %v3620
        %3686 = vmatprep.subr.bf16.mxu0 %v3623
        %3687 = vmatpush1.bf16.msra.mxu0 %v3622
        %3688 = vmatprep.subr.bf16.mxu0 %v3625
        %3689 = vmatpush1.bf16.msra.mxu0 %v3624
        %3690 = vmatprep.subr.bf16.mxu0 %v3627
        %3691 = vmatpush1.bf16.msra.mxu0 %v3626
        %3692 = vmatprep.subr.bf16.mxu0 %v3629
        %3693 = vmatpush1.bf16.msra.mxu0 %v3628
        %3694 = vmatprep.subr.bf16.mxu0 %v3631
        %3695 = vmatpush1.bf16.msra.mxu0 %v3630
        %3696 = vmatprep.subr.bf16.mxu0 %v3633
        %3697 = vmatpush1.bf16.msra.mxu0 %v3632
        %3698 = vmatprep.subr.bf16.mxu0 %v3635
        %3699 = vmatpush1.bf16.msra.mxu0 %v3634
        %3700 = vmatprep.subr.bf16.mxu0 %v3637
        %3701 = vmatpush1.bf16.msra.mxu0 %v3636
        %3702 = vmatprep.subr.bf16.mxu0 %v3639
        %3703 = vmatpush1.bf16.msra.mxu0 %v3638
        %3704 = vmatprep.subr.bf16.mxu0 %v3641
        %3705 = vmatpush1.bf16.msra.mxu0 %v3640
        %3706 = vmatprep.subr.bf16.mxu0 %v3643
        %3707 = vmatpush1.bf16.msra.mxu0 %v3642
        %3708 = vmatprep.subr.bf16.mxu0 %v3645
        %3709 = vmatpush1.bf16.msra.mxu0 %v3644
        %3710 = vmatprep.subr.bf16.mxu0 %v3647
        %3711 = vmatpush1.bf16.msra.mxu0 %v3646
        %3712 = vmatprep.subr.bf16.mxu0 %v3649
        %3713 = vmatpush1.bf16.msra.mxu0 %v3648
        %3714 = vmatprep.mubr.bf16.mxu0 %v3463
        %3715 = vmatmul.mubr.bf16.gmra.mrb[0].mxu0 %v3462
        %v3716 = vpop.f32.mrb[0].mxu0
        %v3717 = vadd.f32 %v3515, %v3716
        %v3718 = vpop.f32.mrb[0].mxu0
        %v3719 = vadd.f32 %v3519, %v3718
        %v3720 = vpop.f32.mrb[0].mxu0
        %v3721 = vadd.f32 %v3515, %v3720
        %v3722 = vpop.f32.mrb[0].mxu0
        %v3723 = vadd.f32 %v3519, %v3722
        %3724 = vmatprep.mubr.bf16.mxu0 %v3465
        %3725 = vmatmul.mubr.bf16.gmra.mrb[0].mxu0 %v3464
        %v3726 = vpop.f32.mrb[0].mxu0
        %v3727 = vadd.f32 %v3515, %v3726
        %v3728 = vpop.f32.mrb[0].mxu0
        %v3729 = vadd.f32 %v3519, %v3728
        %v3730 = vpop.f32.mrb[0].mxu0
        %v3731 = vadd.f32 %v3515, %v3730
        %v3732 = vpop.f32.mrb[0].mxu0
        %v3733 = vadd.f32 %v3519, %v3732
        %3734 = vmatprep.mubr.bf16.mxu0 %v3467
        %3735 = vmatmul.mubr.bf16.gmra.mrb[0].mxu0 %v3466
        %v3736 = vpop.f32.mrb[0].mxu0
        %v3737 = vadd.f32 %v3515, %v3736
        %v3738 = vpop.f32.mrb[0].mxu0
        %v3739 = vadd.f32 %v3519, %v3738
        %v3740 = vpop.f32.mrb[0].mxu0
        %v3741 = vadd.f32 %v3515, %v3740
        %v3742 = vpop.f32.mrb[0].mxu0
        %v3743 = vadd.f32 %v3519, %v3742
        %3744 = vmatprep.mubr.bf16.mxu0 %v3469
        %3745 = vmatmul.mubr.bf16.gmra.mrb[0].mxu0 %v3468
        %v3746 = vpop.f32.mrb[0].mxu0
        %v3747 = vadd.f32 %v3515, %v3746
        %v3748 = vpop.f32.mrb[0].mxu0
        %v3749 = vadd.f32 %v3519, %v3748
        %v3750 = vpop.f32.mrb[0].mxu0
        %v3751 = vadd.f32 %v3515, %v3750
        %v3752 = vpop.f32.mrb[0].mxu0
        %v3753 = vadd.f32 %v3519, %v3752
        %3754 = vmatprep.mubr.bf16.mxu0 %v3471
        %3755 = vmatmul.mubr.bf16.gmra.mrb[0].mxu0 %v3470
        %v3756 = vpop.f32.mrb[0].mxu0
        %v3757 = vadd.f32 %v3515, %v3756
        %v3758 = vpop.f32.mrb[0].mxu0
        %v3759 = vadd.f32 %v3519, %v3758
        %v3760 = vpop.f32.mrb[0].mxu0
        %v3761 = vadd.f32 %v3515, %v3760
        %v3762 = vpop.f32.mrb[0].mxu0
        %v3763 = vadd.f32 %v3519, %v3762
        %3764 = vmatprep.mubr.bf16.mxu0 %v3473
        %3765 = vmatmul.mubr.bf16.gmra.mrb[0].mxu0 %v3472
        %v3766 = vpop.f32.mrb[0].mxu0
        %v3767 = vadd.f32 %v3515, %v3766
        %v3768 = vpop.f32.mrb[0].mxu0
        %v3769 = vadd.f32 %v3519, %v3768
        %v3770 = vpop.f32.mrb[0].mxu0
        %v3771 = vadd.f32 %v3515, %v3770
        %v3772 = vpop.f32.mrb[0].mxu0
        %v3773 = vadd.f32 %v3519, %v3772
        %3774 = vmatprep.mubr.bf16.mxu0 %v3475
        %3775 = vmatmul.mubr.bf16.gmra.mrb[0].mxu0 %v3474
        %v3776 = vpop.f32.mrb[0].mxu0
        %v3777 = vadd.f32 %v3515, %v3776
        %v3778 = vpop.f32.mrb[0].mxu0
        %v3779 = vadd.f32 %v3519, %v3778
        %v3780 = vpop.f32.mrb[0].mxu0
        %v3781 = vadd.f32 %v3515, %v3780
        %v3782 = vpop.f32.mrb[0].mxu0
        %v3783 = vadd.f32 %v3519, %v3782
        %3784 = vmatprep.mubr.bf16.mxu0 %v3477
        %3785 = vmatmul.mubr.bf16.gmra.mrb[0].mxu0 %v3476
        %v3786 = vpop.f32.mrb[0].mxu0
        %v3787 = vadd.f32 %v3515, %v3786
        %v3788 = vpop.f32.mrb[0].mxu0
        %v3789 = vadd.f32 %v3519, %v3788
        %v3790 = vpop.f32.mrb[0].mxu0
        %v3791 = vadd.f32 %v3515, %v3790
        %v3792 = vpop.f32.mrb[0].mxu0
        %v3793 = vadd.f32 %v3519, %v3792
        %3794 = vdwg.mxu0
        %v3795 = vadd.f32 %v2720, %v3717
        %v3796 = vadd.f32 %v2721, %v3719
        %v3797 = vadd.f32 %v2722, %v3721
        %v3798 = vadd.f32 %v2723, %v3723
        %v3799 = vadd.f32 %v2724, %v3727
        %v3800 = vadd.f32 %v2725, %v3729
        %v3801 = vadd.f32 %v2726, %v3731
        %v3802 = vadd.f32 %v2727, %v3733
        %v3803 = vadd.f32 %v2728, %v3737
        %v3804 = vadd.f32 %v2729, %v3739
        %v3805 = vadd.f32 %v2730, %v3741
        %v3806 = vadd.f32 %v2731, %v3743
        %v3807 = vadd.f32 %v2732, %v3747
        %v3808 = vadd.f32 %v2733, %v3749
        %v3809 = vadd.f32 %v2734, %v3751
        %v3810 = vadd.f32 %v2735, %v3753
        %v3811 = vadd.f32 %v2736, %v3757
        %v3812 = vadd.f32 %v2737, %v3759
        %v3813 = vadd.f32 %v2738, %v3761
        %v3814 = vadd.f32 %v2739, %v3763
        %v3815 = vadd.f32 %v2740, %v3767
        %v3816 = vadd.f32 %v2741, %v3769
        %v3817 = vadd.f32 %v2742, %v3771
        %v3818 = vadd.f32 %v2743, %v3773
        %v3819 = vadd.f32 %v2744, %v3777
        %v3820 = vadd.f32 %v2745, %v3779
        %v3821 = vadd.f32 %v2746, %v3781
        %v3822 = vadd.f32 %v2747, %v3783
        %v3823 = vadd.f32 %v2748, %v3787
        %v3824 = vadd.f32 %v2749, %v3789
        %v3825 = vadd.f32 %v2750, %v3791
        %v3826 = vadd.f32 %v2751, %v3793
        %3827 = vst [vmem:[%s595] sm:$0xff] %v3795
        %3828 = vst [vmem:[%s595 + $0x8] sm:$0xff] %v3796
        %3829 = vst [vmem:[%s595 + $0x10] sm:$0xff] %v3797
        %3830 = vst [vmem:[%s595 + $0x18] sm:$0xff] %v3798
        %3831 = vst [vmem:[%s595 + $0x20] sm:$0xff] %v3799
        %3832 = vst [vmem:[%s595 + $0x28] sm:$0xff] %v3800
        %3833 = vst [vmem:[%s595 + $0x30] sm:$0xff] %v3801
        %3834 = vst [vmem:[%s595 + $0x38] sm:$0xff] %v3802
        %3835 = vst [vmem:[%s595 + $0x40] sm:$0xff] %v3803
        %3836 = vst [vmem:[%s595 + $0x48] sm:$0xff] %v3804
        %3837 = vst [vmem:[%s595 + $0x50] sm:$0xff] %v3805
        %3838 = vst [vmem:[%s595 + $0x58] sm:$0xff] %v3806
        %3839 = vst [vmem:[%s595 + $0x60] sm:$0xff] %v3807
        %3840 = vst [vmem:[%s595 + $0x68] sm:$0xff] %v3808
        %3841 = vst [vmem:[%s595 + $0x70] sm:$0xff] %v3809
        %3842 = vst [vmem:[%s595 + $0x78] sm:$0xff] %v3810
        %3843 = vst [vmem:[%s595 + $0x80] sm:$0xff] %v3811
        %3844 = vst [vmem:[%s595 + $0x88] sm:$0xff] %v3812
        %3845 = vst [vmem:[%s595 + $0x90] sm:$0xff] %v3813
        %3846 = vst [vmem:[%s595 + $0x98] sm:$0xff] %v3814
        %3847 = vst [vmem:[%s595 + $0xa0] sm:$0xff] %v3815
        %3848 = vst [vmem:[%s595 + $0xa8] sm:$0xff] %v3816
        %3849 = vst [vmem:[%s595 + $0xb0] sm:$0xff] %v3817
        %3850 = vst [vmem:[%s595 + $0xb8] sm:$0xff] %v3818
        %3851 = vst [vmem:[%s595 + $0xc0] sm:$0xff] %v3819
        %3852 = vst [vmem:[%s595 + $0xc8] sm:$0xff] %v3820
        %3853 = vst [vmem:[%s595 + $0xd0] sm:$0xff] %v3821
        %3854 = vst [vmem:[%s595 + $0xd8] sm:$0xff] %v3822
        %3855 = vst [vmem:[%s595 + $0xe0] sm:$0xff] %v3823
        %3856 = vst [vmem:[%s595 + $0xe8] sm:$0xff] %v3824
        %3857 = vst [vmem:[%s595 + $0xf0] sm:$0xff] %v3825
        %3858 = vst [vmem:[%s595 + $0xf8] sm:$0xff] %v3826
        %s3859 = sand.u32 %s296, 1
        %s3860 = scalar_lea.sflag [#allocation4], %s3859
        %s3861 = sand.u32 %s296, 1
        %s3862 = smul.addr %s3861, 256
        %s3863 = scalar_lea.vmem [#allocation3], %s3862
        // Predicated region
        $region110: #{transformer_block.3} parent=104 // pred_check
          %p3864 = pneg %p306
        $region111: #{transformer_block.3} parent=104 // pred_check_branch
          %3866 = sbr.rel (%p3864) target = $region113
        $region112: #{transformer_block.3} parent=104 // pred_region
          %s3867 = smul.u32 16, %s26
          %s3869 = ssub.s32 4096, 4096
          %3870 = vsyncadd %s3860, %s3869
          %s3871 = smul.addr %s3867, 2
          %s3872 = smul.addr %s3871, 128
          %s3873 = scalar_lea.hbm %s12, %s3872
          %s3874 = sshll.u32 %s3863, 4
          %s3875 = int_to_ptr.vmem [resolvable:$true] %s3874
          %3880 = dma.vmem_to_hbm [thread:$0]  %s3875, 4096, %s3873, %s3860, 256, 256, 16
        $region113: #{transformer_block.3} parent=104 // pred_fallthru
          _
      $region105: #{transformer_block.3} parent=5 // pred_fallthru
        _
      %p3881 = scmp.le.s32.totalorder 2, %s21
      // Predicated region
      $region114: #{transformer_block.3} parent=5 // pred_check
        %p3882 = pneg %p3881
      $region115: #{transformer_block.3} parent=5 // pred_check_branch
        %3884 = sbr.rel (%p3882) target = $region117
      $region116: #{transformer_block.3} parent=5 // pred_region
        %s3885 = ssub.s32 %s21, 2
        // Predicated region
        $region118: #{transformer_block.3} parent=116 // pred_check
          %p3886 = pneg %p312
        $region119: #{transformer_block.3} parent=116 // pred_check_branch
          %3888 = sbr.rel (%p3886) target = $region121
        $region120: #{transformer_block.3} parent=116 // pred_region
          %s3889 = sand.u32 %s297, 1
          %s3890 = scalar_lea.sflag [#allocation4], %s3889
          %s3891 = sand.u32 %s297, 1
          %s3892 = smul.addr %s3891, 256
          %s3893 = scalar_lea.vmem [#allocation3], %s3892
          %3894 = dma.done %s3890, 4096
        $region121: #{transformer_block.3} parent=116 // pred_fallthru
          _
      $region117: #{transformer_block.3} parent=5 // pred_fallthru
        _
    $region6: #{transformer_block.3} parent=1 // loop_footer
      %s25 = sadd.s32 1, %s21
    $region7: #{transformer_block.3} parent=1 // loop_footer_branch
      %20 = sbr.rel target = $region3
    $region8: #{transformer_block.3} parent=1 // loop_exit
      _
    %3895 = vsyncpa [#allocation4], 1
    %s3896 = scalar_lea.sflag [#allocation4], 1
    %3897 = vsyncpa %s3896, 1

</llo_original>
